<compile_context>
chip_gen: v6e
topology: v6e:2x2x1
jax: 0.10.0
libtpu: 0.0.40
codegen_flags: <defaults>
</compile_context>

<pallas_src>
import functools

import numpy as np
import jax
import jax.numpy as jnp
from jax.experimental import pallas as pl
from jax.experimental.pallas import tpu as pltpu


def _cbam_kernel(wc_ref, w1t_ref, b1_ref, w2t_ref, b2_ref, cmask_ref,
                 x_ref, o_ref, *, K, PAD, W, HW, HWp, Nb):
    """Fused CBAM forward for a whole (Nb, C, HWp) block, batched over Nb."""
    f32 = jnp.float32
    PW = PAD * W + PAD                       # flat (row-major) halo of the conv window

    # ---- load the whole tile once, upcast once --------------------------------
    xf = x_ref[...].astype(f32)              # (Nb, C, HWp), lane-dense

    # ---------------- CAB: channel attention (batched over Nb) -----------------
    p_avg = jnp.sum(xf, axis=-1) * (1.0 / HW)                       # (Nb, C)
    if HWp == HW:
        p_max = jnp.max(xf, axis=-1)                                # (Nb, C)
    else:
        lane = jax.lax.broadcasted_iota(jnp.int32, (1, 1, HWp), 2)
        p_max = jnp.max(jnp.where(lane < HW, xf, -jnp.inf), axis=-1)

    pooled = jnp.concatenate([p_avg, p_max], axis=0)                # (2*Nb, C)

    w1t = w1t_ref[...].astype(f32)           # (C, Ch)   fc1 weight, transposed
    b1 = b1_ref[...].astype(f32)             # (1, Ch)
    w2t = w2t_ref[...].astype(f32)           # (Ch, C)   fc2 weight, transposed
    b2 = b2_ref[...].astype(f32)             # (1, C)

    h = jnp.maximum(
        jnp.dot(pooled, w1t, precision=jax.lax.Precision.HIGHEST,
                preferred_element_type=f32) + b1, 0.0)              # (2*Nb, Ch)
    z = jnp.dot(h, w2t, precision=jax.lax.Precision.HIGHEST,
                preferred_element_type=f32) + b2                    # (2*Nb, C)
    att_c = jax.nn.sigmoid(z[:Nb] + z[Nb:])                         # (Nb, C)

    xc = xf * att_c[:, :, None]              # (Nb, C, HWp) f32; xf dead after this

    # ---------------- SAB: spatial attention (batched over Nb) -----------------
    s_avg = jnp.mean(xc, axis=1)             # (Nb, HWp) channel mean (pad lanes = 0)
    s_max = jnp.max(xc, axis=1)              # (Nb, HWp) channel max  (pad lanes = 0)

    # KxK conv (2 ch -> 1 ch, zero padded) evaluated directly in the flattened
    # row-major layout: the (dy, dx) neighbour of flat index p is p + dy*W + dx.
    # A flat zero halo of PW lanes (plus the zero pad lanes) supplies the
    # vertical zero padding; per-kx column masks zero the contributions that
    # would otherwise leak across a row boundary.
    pa = jnp.pad(s_avg, ((0, 0), (PW, PW)))  # (Nb, HWp + 2*PW)
    pm = jnp.pad(s_max, ((0, 0), (PW, PW)))

    col_masks = [cmask_ref[kx:kx + 1, :] for kx in range(K)]        # K x (1, HWp)

    acc_rows = []                            # one accumulator per ky (short chains)
    for ky in range(K):
        acc = jnp.zeros((Nb, HWp), f32)
        row_off = PW + (ky - PAD) * W
        for kx in range(K):
            start = row_off + (kx - PAD)
            ra = pa[:, start:start + HWp]    # static lane-shifted windows
            rm = pm[:, start:start + HWp]
            wa = wc_ref[0 * K * K + ky * K + kx]   # scalar conv weights (SMEM)
            wm = wc_ref[1 * K * K + ky * K + kx]
            term = wa * ra + wm * rm
            if kx != PAD:                    # centre column: mask is all-ones
                term = term * col_masks[kx]
            acc = acc + term
        acc_rows.append(acc)
    while len(acc_rows) > 1:                 # pairwise tree-sum
        nxt = [acc_rows[i] + acc_rows[i + 1]
               for i in range(0, len(acc_rows) - 1, 2)]
        if len(acc_rows) % 2:
            nxt.append(acc_rows[-1])
        acc_rows = nxt
    att_s = jax.nn.sigmoid(acc_rows[0])      # (Nb, HWp)

    o_ref[...] = (xc * att_s[:, None, :]).astype(o_ref.dtype)       # lane-dense store


def _vmem_capacity_bytes():
    try:
        return int(pltpu.get_tpu_info().vmem_capacity_bytes)
    except Exception:
        return 64 * 1024 * 1024              # conservative (v7x) fallback


def cbam_pallas(x, conv_w, fc1_w, fc1_b, fc2_w, fc2_b, *,
                block_batch=None, donate_input=False):
    """CBAM forward.
    x: (N, C, H, W); conv_w: (1, 2, K, K);
    fc1_w: (C//r, C); fc1_b: (C//r,); fc2_w: (C, C//r); fc2_b: (C,)."""
    N, C, H, W = x.shape
    K = conv_w.shape[-1]
    assert K in (3, 7), "kernel size must be 3 or 7"
    PAD = K // 2
    HW = H * W
    HWp = ((HW + 127) // 128) * 128           # lane axis padded to a multiple of 128
    Ch = fc1_w.shape[0]

    # Lane-dense view; zero-pad the lane axis so loads/stores are unmasked and
    # the pad lanes double as the conv's vertical zero padding.
    xr = x.reshape(N, C, HW)
    if HWp != HW:
        xr = jnp.pad(xr, ((0, 0), (0, 0), (0, HWp - HW)))

    # Conv weights flattened for scalar SMEM access inside the kernel.
    wc = conv_w.astype(jnp.float32).reshape(2 * K * K)

    # Channel-MLP weights, laid out for batched (2*Nb, C) matmuls in the kernel.
    w1t = fc1_w.astype(jnp.float32).T                 # (C, Ch)
    b1 = fc1_b.astype(jnp.float32).reshape(1, Ch)
    w2t = fc2_w.astype(jnp.float32).T                 # (Ch, C)
    b2 = fc2_b.astype(jnp.float32).reshape(1, C)

    # Per-kx column-validity masks for the flattened conv (emulate zero padding
    # across row boundaries); built host-side. Pad lanes get mask 0.
    cols = np.arange(HWp, dtype=np.int64) % W
    cmask = np.stack(
        [((cols + (kx - PAD) >= 0) & (cols + (kx - PAD) <= W - 1)).astype(np.float32)
         for kx in range(K)], axis=0)                 # (K, HWp)
    cmask[:, HW:] = 0.0
    cmask = jnp.asarray(cmask)

    # ---- per-generation VMEM budget & block sizing ---------------------------
    vmem_cap = _vmem_capacity_bytes()
    # ~48 MiB on v7x (64 MiB/TC), ~96 MiB on v5e/v6e (128 MiB/TC).
    vmem_limit = min(vmem_cap * 3 // 4, 100 * 1024 * 1024)

    if block_batch is None:
        in_bytes = C * HWp * x.dtype.itemsize
        # 2x input + 2x output (double-buffered) + ~3 full-size f32 temporaries.
        per_img = 4 * in_bytes + 3 * C * HWp * 4
        budget = vmem_limit // 2
        # HBM-roofline sweet spot: multi-MiB DMA per grid step.
        target_in = (8 if vmem_cap > 96 * 1024 * 1024 else 4) * 1024 * 1024
        nb_cap = max(1, min(budget // per_img, target_in // in_bytes))
        if N >= 2:
            nb_cap = min(nb_cap, N // 2)      # keep grid >= 2 (v7x has 2 TCs)
        nb_cap = int(max(1, min(nb_cap, N)))
        divisors = [d for d in range(1, nb_cap + 1) if N % d == 0]
        even_grid = [d for d in divisors if (N // d) % 2 == 0]
        block_batch = max(even_grid) if even_grid else max(divisors)
    Nb = int(block_batch)
    assert N % Nb == 0, "block_batch must divide N"

    # TODO(synk): for very large C*H*W slabs (v7x: 64 MiB VMEM) tile the grid
    # over H with a +/-PAD-row halo (or a two-pass attention-map + multiply
    # design) instead of one whole (C, H*W) slab per step.
    # TODO(synk): sweep pipeline_mode=pl.Buffered(3) on the x BlockSpec once
    # blocks are large; expect a few percent on a purely mem-bound kernel.
    kernel = functools.partial(_cbam_kernel, K=K, PAD=PAD, W=W, HW=HW,
                               HWp=HWp, Nb=Nb)

    io_aliases = {6: 0} if donate_input else {}

    out = pl.pallas_call(
        kernel,
        out_shape=jax.ShapeDtypeStruct((N, C, HWp), x.dtype),
        grid=(N // Nb,),
        in_specs=[
            pl.BlockSpec(memory_space=pltpu.MemorySpace.SMEM),    # conv weights (scalars)
            pl.BlockSpec((C, Ch), lambda n: (0, 0)),              # fc1 weight^T
            pl.BlockSpec((1, Ch), lambda n: (0, 0)),              # fc1 bias
            pl.BlockSpec((Ch, C), lambda n: (0, 0)),              # fc2 weight^T
            pl.BlockSpec((1, C), lambda n: (0, 0)),               # fc2 bias
            pl.BlockSpec((K, HWp), lambda n: (0, 0)),             # conv column masks
            pl.BlockSpec((Nb, C, HWp), lambda n: (n, 0, 0)),      # x (lane-dense)
        ],
        out_specs=pl.BlockSpec((Nb, C, HWp), lambda n: (n, 0, 0)),
        input_output_aliases=io_aliases,
        compiler_params=pltpu.CompilerParams(
            dimension_semantics=("parallel",),
            vmem_limit_bytes=int(vmem_limit)),
    )(wc, w1t, b1, w2t, b2, cmask, xr)

    if HWp != HW:
        out = out[..., :HW]
    return out.reshape(N, C, H, W)


def cbam_reference(x, conv_w, fc1_w, fc1_b, fc2_w, fc2_b):
    """Pure-JAX reference matching the PyTorch CBAM forward."""
    K = conv_w.shape[-1]
    PAD = K // 2
    # CAB
    p_avg = jnp.mean(x, axis=(2, 3))
    p_max = jnp.max(x, axis=(2, 3))

    def fc(v):
        h = jnp.maximum(v @ fc1_w.T + fc1_b, 0.0)
        return h @ fc2_w.T + fc2_b

    att_c = jax.nn.sigmoid(fc(p_avg) + fc(p_max))[:, :, None, None]
    xc = x * att_c
    # SAB
    s = jnp.concatenate([jnp.mean(xc, axis=1, keepdims=True),
                         jnp.max(xc, axis=1, keepdims=True)], axis=1)
    conv = jax.lax.conv_general_dilated(
        s, conv_w, window_strides=(1, 1),
        padding=[(PAD, PAD), (PAD, PAD)],
        dimension_numbers=("NCHW", "OIHW", "NCHW"))
    return xc * jax.nn.sigmoid(conv)


if __name__ == "__main__":
    # Use full-precision matmuls/convs everywhere so the in-kernel HIGHEST
    # precision dots and the pure-JAX reference agree to ~1e-6.
    jax.config.update("jax_default_matmul_precision", "highest")

    key = jax.random.PRNGKey(0)
    kx, kc, k1w, k1b, k2w, k2b = jax.random.split(key, 6)

    # Small shapes consistent with the module (reduction_ratio=16 needs
    # C >= 16; use C=32 so the MLP hidden dim is 2).
    N, C, H, W = 2, 32, 16, 16
    reduction_ratio, K = 16, 7
    Ch = C // reduction_ratio

    x = jax.random.normal(kx, (N, C, H, W), dtype=jnp.float32)

    # Deterministic kaiming-uniform-like init matching the torch layer shapes.
    cb = 1.0 / np.sqrt(2 * K * K)
    conv_w = jax.random.uniform(kc, (1, 2, K, K), jnp.float32, -cb, cb)
    b1b = 1.0 / np.sqrt(C)
    fc1_w = jax.random.uniform(k1w, (Ch, C), jnp.float32, -b1b, b1b)
    fc1_b = jax.random.uniform(k1b, (Ch,), jnp.float32, -b1b, b1b)
    b2b = 1.0 / np.sqrt(Ch)
    fc2_w = jax.random.uniform(k2w, (C, Ch), jnp.float32, -b2b, b2b)
    fc2_b = jax.random.uniform(k2b, (C,), jnp.float32, -b2b, b2b)

    y = cbam_pallas(x, conv_w, fc1_w, fc1_b, fc2_w, fc2_b)
    jax.block_until_ready(y)

    y_ref = cbam_reference(x, conv_w, fc1_w, fc1_b, fc2_w, fc2_b)
    assert y.shape == x.shape
    assert jnp.allclose(y, y_ref, atol=1e-4, rtol=1e-4), "mismatch vs JAX reference"

    print("KERNEL_OK")
</pallas_src>

<mosaic_0001>
module attributes {stable_mosaic.version = 11 : i64} {
  func.func @_cbam_kernel(%arg0: i32, %arg1: memref<98xf32, #tpu.memory_space<smem>>, %arg2: memref<32x2xf32, #tpu.memory_space<vmem>>, %arg3: memref<1x2xf32, #tpu.memory_space<vmem>>, %arg4: memref<2x32xf32, #tpu.memory_space<vmem>>, %arg5: memref<1x32xf32, #tpu.memory_space<vmem>>, %arg6: memref<7x256xf32, #tpu.memory_space<vmem>>, %arg7: memref<1x32x256xf32, #tpu.memory_space<vmem>>, %arg8: memref<1x32x256xf32, #tpu.memory_space<vmem>>) attributes {dimension_semantics = [#tpu.dimension_semantics<parallel>], iteration_bounds = array<i64: 2>, scalar_prefetch = 0 : i64, scratch_operands = 0 : i64, tpu.core_type = #tpu.core_type<tc>, window_params = [{transform_indices = @transform_0, window_bounds = array<i64: 98>}, {pipeline_mode = #tpu.pipeline_mode<synchronous>, transform_indices = @transform_1, window_bounds = array<i64: 32, 2>}, {pipeline_mode = #tpu.pipeline_mode<synchronous>, transform_indices = @transform_2, window_bounds = array<i64: 1, 2>}, {pipeline_mode = #tpu.pipeline_mode<synchronous>, transform_indices = @transform_3, window_bounds = array<i64: 2, 32>}, {pipeline_mode = #tpu.pipeline_mode<synchronous>, transform_indices = @transform_4, window_bounds = array<i64: 1, 32>}, {pipeline_mode = #tpu.pipeline_mode<synchronous>, transform_indices = @transform_5, window_bounds = array<i64: 7, 256>}, {transform_indices = @transform_6, window_bounds = array<i64: 1, 32, 256>}, {transform_indices = @transform_7, window_bounds = array<i64: 1, 32, 256>}]} {
    %c0 = arith.constant 0 : index
    %c0_0 = arith.constant 0 : index
    %c0_1 = arith.constant 0 : index
    %0 = vector.load %arg7[%c0, %c0_0, %c0_1] : memref<1x32x256xf32, #tpu.memory_space<vmem>>, vector<1x32x256xf32>
    %cst = arith.constant dense<0.000000e+00> : vector<1x32xf32>
    %1 = vector.multi_reduction <add>, %0, %cst [2] : vector<1x32x256xf32> to vector<1x32xf32>
    %cst_2 = arith.constant 3.906250e-03 : f32
    %2 = vector.broadcast %cst_2 : f32 to vector<1x32xf32>
    %3 = arith.mulf %1, %2 : vector<1x32xf32>
    %cst_3 = arith.constant dense<0xFF800000> : vector<1x32xf32>
    %4 = vector.multi_reduction <maximumf>, %0, %cst_3 [2] : vector<1x32x256xf32> to vector<1x32xf32>
    %5 = tpu.concatenate %3, %4 in 0 : vector<1x32xf32>, vector<1x32xf32> -> vector<2x32xf32>
    %c0_4 = arith.constant 0 : index
    %c0_5 = arith.constant 0 : index
    %6 = vector.load %arg2[%c0_4, %c0_5] : memref<32x2xf32, #tpu.memory_space<vmem>>, vector<32x2xf32>
    %c0_6 = arith.constant 0 : index
    %c0_7 = arith.constant 0 : index
    %7 = vector.load %arg3[%c0_6, %c0_7] : memref<1x2xf32, #tpu.memory_space<vmem>>, vector<1x2xf32>
    %c0_8 = arith.constant 0 : index
    %c0_9 = arith.constant 0 : index
    %8 = vector.load %arg4[%c0_8, %c0_9] : memref<2x32xf32, #tpu.memory_space<vmem>>, vector<2x32xf32>
    %c0_10 = arith.constant 0 : index
    %c0_11 = arith.constant 0 : index
    %9 = vector.load %arg5[%c0_10, %c0_11] : memref<1x32xf32, #tpu.memory_space<vmem>>, vector<1x32xf32>
    %cst_12 = arith.constant dense<0.000000e+00> : vector<2x2xf32>
    %10 = tpu.matmul %5, %6, %cst_12 {dimension_numbers = #tpu.dot_dimension_numbers<[1], [0], [0], [1], [0, 0, 1, 1], [], []>, precision = #tpu.contract_precision<fp32>} : vector<2x32xf32>, vector<32x2xf32>, vector<2x2xf32> -> vector<2x2xf32>
    %11 = vector.broadcast %7 : vector<1x2xf32> to vector<2x2xf32>
    %12 = arith.addf %10, %11 : vector<2x2xf32>
    %cst_13 = arith.constant 0.000000e+00 : f32
    %13 = vector.broadcast %cst_13 : f32 to vector<2x2xf32>
    %14 = arith.maximumf %12, %13 : vector<2x2xf32>
    %cst_14 = arith.constant dense<0.000000e+00> : vector<2x32xf32>
    %15 = tpu.matmul %14, %8, %cst_14 {dimension_numbers = #tpu.dot_dimension_numbers<[1], [0], [0], [1], [0, 0, 1, 1], [], []>, precision = #tpu.contract_precision<fp32>} : vector<2x2xf32>, vector<2x32xf32>, vector<2x32xf32> -> vector<2x32xf32>
    %16 = vector.broadcast %9 : vector<1x32xf32> to vector<2x32xf32>
    %17 = arith.addf %15, %16 : vector<2x32xf32>
    %18 = vector.extract_strided_slice %17 {offsets = [0, 0], sizes = [1, 32], strides = [1, 1]} : vector<2x32xf32> to vector<1x32xf32>
    %19 = vector.extract_strided_slice %17 {offsets = [1, 0], sizes = [1, 32], strides = [1, 1]} : vector<2x32xf32> to vector<1x32xf32>
    %20 = arith.addf %18, %19 : vector<1x32xf32>
    %21 = arith.negf %20 : vector<1x32xf32>
    %22 = math.exp %21 : vector<1x32xf32>
    %cst_15 = arith.constant 1.000000e+00 : f32
    %23 = vector.broadcast %cst_15 : f32 to vector<1x32xf32>
    %24 = arith.addf %23, %22 : vector<1x32xf32>
    %25 = arith.divf %23, %24 : vector<1x32xf32>
    %26 = vector.shape_cast %25 : vector<1x32xf32> to vector<1x32x1xf32>
    %27 = vector.broadcast %26 : vector<1x32x1xf32> to vector<1x32x256xf32>
    %28 = arith.mulf %0, %27 : vector<1x32x256xf32>
    %cst_16 = arith.constant dense<0.000000e+00> : vector<1x256xf32>
    %29 = vector.multi_reduction <add>, %28, %cst_16 [1] : vector<1x32x256xf32> to vector<1x256xf32>
    %cst_17 = arith.constant 3.200000e+01 : f32
    %30 = vector.broadcast %cst_17 : f32 to vector<1x256xf32>
    %31 = arith.divf %29, %30 : vector<1x256xf32>
    %cst_18 = arith.constant dense<0xFF800000> : vector<1x256xf32>
    %32 = vector.multi_reduction <maximumf>, %28, %cst_18 [1] : vector<1x32x256xf32> to vector<1x256xf32>
    %c0_i32 = arith.constant 0 : i32
    %33 = arith.sitofp %c0_i32 : i32 to f32
    %34 = vector.broadcast %33 : f32 to vector<1x51xf32>
    %35 = tpu.concatenate %34, %31 in 1 : vector<1x51xf32>, vector<1x256xf32> -> vector<1x307xf32>
    %36 = vector.broadcast %33 : f32 to vector<1x51xf32>
    %37 = tpu.concatenate %35, %36 in 1 : vector<1x307xf32>, vector<1x51xf32> -> vector<1x358xf32>
    %c0_i32_19 = arith.constant 0 : i32
    %38 = arith.sitofp %c0_i32_19 : i32 to f32
    %39 = vector.broadcast %38 : f32 to vector<1x51xf32>
    %40 = tpu.concatenate %39, %32 in 1 : vector<1x51xf32>, vector<1x256xf32> -> vector<1x307xf32>
    %41 = vector.broadcast %38 : f32 to vector<1x51xf32>
    %42 = tpu.concatenate %40, %41 in 1 : vector<1x307xf32>, vector<1x51xf32> -> vector<1x358xf32>
    %c0_20 = arith.constant 0 : index
    %c0_21 = arith.constant 0 : index
    %43 = vector.load %arg6[%c0_20, %c0_21] : memref<7x256xf32, #tpu.memory_space<vmem>>, vector<1x256xf32>
    %c1 = arith.constant 1 : index
    %c0_22 = arith.constant 0 : index
    %44 = vector.load %arg6[%c1, %c0_22] : memref<7x256xf32, #tpu.memory_space<vmem>>, vector<1x256xf32>
    %c2 = arith.constant 2 : index
    %c0_23 = arith.constant 0 : index
    %45 = vector.load %arg6[%c2, %c0_23] : memref<7x256xf32, #tpu.memory_space<vmem>>, vector<1x256xf32>
    %c4 = arith.constant 4 : index
    %c0_24 = arith.constant 0 : index
    %46 = vector.load %arg6[%c4, %c0_24] : memref<7x256xf32, #tpu.memory_space<vmem>>, vector<1x256xf32>
    %c5 = arith.constant 5 : index
    %c0_25 = arith.constant 0 : index
    %47 = vector.load %arg6[%c5, %c0_25] : memref<7x256xf32, #tpu.memory_space<vmem>>, vector<1x256xf32>
    %c6 = arith.constant 6 : index
    %c0_26 = arith.constant 0 : index
    %48 = vector.load %arg6[%c6, %c0_26] : memref<7x256xf32, #tpu.memory_space<vmem>>, vector<1x256xf32>
    %cst_27 = arith.constant 0.000000e+00 : f32
    %49 = vector.broadcast %cst_27 : f32 to vector<1x256xf32>
    %50 = vector.extract_strided_slice %37 {offsets = [0, 0], sizes = [1, 256], strides = [1, 1]} : vector<1x358xf32> to vector<1x256xf32>
    %51 = vector.extract_strided_slice %42 {offsets = [0, 0], sizes = [1, 256], strides = [1, 1]} : vector<1x358xf32> to vector<1x256xf32>
    %c0_28 = arith.constant 0 : index
    %52 = memref.load %arg1[%c0_28] : memref<98xf32, #tpu.memory_space<smem>>
    %c49 = arith.constant 49 : index
    %53 = memref.load %arg1[%c49] : memref<98xf32, #tpu.memory_space<smem>>
    %54 = vector.broadcast %52 : f32 to vector<1x256xf32>
    %55 = arith.mulf %54, %50 : vector<1x256xf32>
    %56 = vector.broadcast %53 : f32 to vector<1x256xf32>
    %57 = arith.mulf %56, %51 : vector<1x256xf32>
    %58 = arith.addf %55, %57 : vector<1x256xf32>
    %59 = arith.mulf %58, %43 : vector<1x256xf32>
    %60 = arith.addf %49, %59 : vector<1x256xf32>
    %61 = vector.extract_strided_slice %37 {offsets = [0, 1], sizes = [1, 256], strides = [1, 1]} : vector<1x358xf32> to vector<1x256xf32>
    %62 = vector.extract_strided_slice %42 {offsets = [0, 1], sizes = [1, 256], strides = [1, 1]} : vector<1x358xf32> to vector<1x256xf32>
    %c1_29 = arith.constant 1 : index
    %63 = memref.load %arg1[%c1_29] : memref<98xf32, #tpu.memory_space<smem>>
    %c50 = arith.constant 50 : index
    %64 = memref.load %arg1[%c50] : memref<98xf32, #tpu.memory_space<smem>>
    %65 = vector.broadcast %63 : f32 to vector<1x256xf32>
    %66 = arith.mulf %65, %61 : vector<1x256xf32>
    %67 = vector.broadcast %64 : f32 to vector<1x256xf32>
    %68 = arith.mulf %67, %62 : vector<1x256xf32>
    %69 = arith.addf %66, %68 : vector<1x256xf32>
    %70 = arith.mulf %69, %44 : vector<1x256xf32>
    %71 = arith.addf %60, %70 : vector<1x256xf32>
    %72 = vector.extract_strided_slice %37 {offsets = [0, 2], sizes = [1, 256], strides = [1, 1]} : vector<1x358xf32> to vector<1x256xf32>
    %73 = vector.extract_strided_slice %42 {offsets = [0, 2], sizes = [1, 256], strides = [1, 1]} : vector<1x358xf32> to vector<1x256xf32>
    %c2_30 = arith.constant 2 : index
    %74 = memref.load %arg1[%c2_30] : memref<98xf32, #tpu.memory_space<smem>>
    %c51 = arith.constant 51 : index
    %75 = memref.load %arg1[%c51] : memref<98xf32, #tpu.memory_space<smem>>
    %76 = vector.broadcast %74 : f32 to vector<1x256xf32>
    %77 = arith.mulf %76, %72 : vector<1x256xf32>
    %78 = vector.broadcast %75 : f32 to vector<1x256xf32>
    %79 = arith.mulf %78, %73 : vector<1x256xf32>
    %80 = arith.addf %77, %79 : vector<1x256xf32>
    %81 = arith.mulf %80, %45 : vector<1x256xf32>
    %82 = arith.addf %71, %81 : vector<1x256xf32>
    %83 = vector.extract_strided_slice %37 {offsets = [0, 3], sizes = [1, 256], strides = [1, 1]} : vector<1x358xf32> to vector<1x256xf32>
    %84 = vector.extract_strided_slice %42 {offsets = [0, 3], sizes = [1, 256], strides = [1, 1]} : vector<1x358xf32> to vector<1x256xf32>
    %c3 = arith.constant 3 : index
    %85 = memref.load %arg1[%c3] : memref<98xf32, #tpu.memory_space<smem>>
    %c52 = arith.constant 52 : index
    %86 = memref.load %arg1[%c52] : memref<98xf32, #tpu.memory_space<smem>>
    %87 = vector.broadcast %85 : f32 to vector<1x256xf32>
    %88 = arith.mulf %87, %83 : vector<1x256xf32>
    %89 = vector.broadcast %86 : f32 to vector<1x256xf32>
    %90 = arith.mulf %89, %84 : vector<1x256xf32>
    %91 = arith.addf %88, %90 : vector<1x256xf32>
    %92 = arith.addf %82, %91 : vector<1x256xf32>
    %93 = vector.extract_strided_slice %37 {offsets = [0, 4], sizes = [1, 256], strides = [1, 1]} : vector<1x358xf32> to vector<1x256xf32>
    %94 = vector.extract_strided_slice %42 {offsets = [0, 4], sizes = [1, 256], strides = [1, 1]} : vector<1x358xf32> to vector<1x256xf32>
    %c4_31 = arith.constant 4 : index
    %95 = memref.load %arg1[%c4_31] : memref<98xf32, #tpu.memory_space<smem>>
    %c53 = arith.constant 53 : index
    %96 = memref.load %arg1[%c53] : memref<98xf32, #tpu.memory_space<smem>>
    %97 = vector.broadcast %95 : f32 to vector<1x256xf32>
    %98 = arith.mulf %97, %93 : vector<1x256xf32>
    %99 = vector.broadcast %96 : f32 to vector<1x256xf32>
    %100 = arith.mulf %99, %94 : vector<1x256xf32>
    %101 = arith.addf %98, %100 : vector<1x256xf32>
    %102 = arith.mulf %101, %46 : vector<1x256xf32>
    %103 = arith.addf %92, %102 : vector<1x256xf32>
    %104 = vector.extract_strided_slice %37 {offsets = [0, 5], sizes = [1, 256], strides = [1, 1]} : vector<1x358xf32> to vector<1x256xf32>
    %105 = vector.extract_strided_slice %42 {offsets = [0, 5], sizes = [1, 256], strides = [1, 1]} : vector<1x358xf32> to vector<1x256xf32>
    %c5_32 = arith.constant 5 : index
    %106 = memref.load %arg1[%c5_32] : memref<98xf32, #tpu.memory_space<smem>>
    %c54 = arith.constant 54 : index
    %107 = memref.load %arg1[%c54] : memref<98xf32, #tpu.memory_space<smem>>
    %108 = vector.broadcast %106 : f32 to vector<1x256xf32>
    %109 = arith.mulf %108, %104 : vector<1x256xf32>
    %110 = vector.broadcast %107 : f32 to vector<1x256xf32>
    %111 = arith.mulf %110, %105 : vector<1x256xf32>
    %112 = arith.addf %109, %111 : vector<1x256xf32>
    %113 = arith.mulf %112, %47 : vector<1x256xf32>
    %114 = arith.addf %103, %113 : vector<1x256xf32>
    %115 = vector.extract_strided_slice %37 {offsets = [0, 6], sizes = [1, 256], strides = [1, 1]} : vector<1x358xf32> to vector<1x256xf32>
    %116 = vector.extract_strided_slice %42 {offsets = [0, 6], sizes = [1, 256], strides = [1, 1]} : vector<1x358xf32> to vector<1x256xf32>
    %c6_33 = arith.constant 6 : index
    %117 = memref.load %arg1[%c6_33] : memref<98xf32, #tpu.memory_space<smem>>
    %c55 = arith.constant 55 : index
    %118 = memref.load %arg1[%c55] : memref<98xf32, #tpu.memory_space<smem>>
    %119 = vector.broadcast %117 : f32 to vector<1x256xf32>
    %120 = arith.mulf %119, %115 : vector<1x256xf32>
    %121 = vector.broadcast %118 : f32 to vector<1x256xf32>
    %122 = arith.mulf %121, %116 : vector<1x256xf32>
    %123 = arith.addf %120, %122 : vector<1x256xf32>
    %124 = arith.mulf %123, %48 : vector<1x256xf32>
    %125 = arith.addf %114, %124 : vector<1x256xf32>
    %cst_34 = arith.constant 0.000000e+00 : f32
    %126 = vector.broadcast %cst_34 : f32 to vector<1x256xf32>
    %127 = vector.extract_strided_slice %37 {offsets = [0, 16], sizes = [1, 256], strides = [1, 1]} : vector<1x358xf32> to vector<1x256xf32>
    %128 = vector.extract_strided_slice %42 {offsets = [0, 16], sizes = [1, 256], strides = [1, 1]} : vector<1x358xf32> to vector<1x256xf32>
    %c7 = arith.constant 7 : index
    %129 = memref.load %arg1[%c7] : memref<98xf32, #tpu.memory_space<smem>>
    %c56 = arith.constant 56 : index
    %130 = memref.load %arg1[%c56] : memref<98xf32, #tpu.memory_space<smem>>
    %131 = vector.broadcast %129 : f32 to vector<1x256xf32>
    %132 = arith.mulf %131, %127 : vector<1x256xf32>
    %133 = vector.broadcast %130 : f32 to vector<1x256xf32>
    %134 = arith.mulf %133, %128 : vector<1x256xf32>
    %135 = arith.addf %132, %134 : vector<1x256xf32>
    %136 = arith.mulf %135, %43 : vector<1x256xf32>
    %137 = arith.addf %126, %136 : vector<1x256xf32>
    %138 = vector.extract_strided_slice %37 {offsets = [0, 17], sizes = [1, 256], strides = [1, 1]} : vector<1x358xf32> to vector<1x256xf32>
    %139 = vector.extract_strided_slice %42 {offsets = [0, 17], sizes = [1, 256], strides = [1, 1]} : vector<1x358xf32> to vector<1x256xf32>
    %c8 = arith.constant 8 : index
    %140 = memref.load %arg1[%c8] : memref<98xf32, #tpu.memory_space<smem>>
    %c57 = arith.constant 57 : index
    %141 = memref.load %arg1[%c57] : memref<98xf32, #tpu.memory_space<smem>>
    %142 = vector.broadcast %140 : f32 to vector<1x256xf32>
    %143 = arith.mulf %142, %138 : vector<1x256xf32>
    %144 = vector.broadcast %141 : f32 to vector<1x256xf32>
    %145 = arith.mulf %144, %139 : vector<1x256xf32>
    %146 = arith.addf %143, %145 : vector<1x256xf32>
    %147 = arith.mulf %146, %44 : vector<1x256xf32>
    %148 = arith.addf %137, %147 : vector<1x256xf32>
    %149 = vector.extract_strided_slice %37 {offsets = [0, 18], sizes = [1, 256], strides = [1, 1]} : vector<1x358xf32> to vector<1x256xf32>
    %150 = vector.extract_strided_slice %42 {offsets = [0, 18], sizes = [1, 256], strides = [1, 1]} : vector<1x358xf32> to vector<1x256xf32>
    %c9 = arith.constant 9 : index
    %151 = memref.load %arg1[%c9] : memref<98xf32, #tpu.memory_space<smem>>
    %c58 = arith.constant 58 : index
    %152 = memref.load %arg1[%c58] : memref<98xf32, #tpu.memory_space<smem>>
    %153 = vector.broadcast %151 : f32 to vector<1x256xf32>
    %154 = arith.mulf %153, %149 : vector<1x256xf32>
    %155 = vector.broadcast %152 : f32 to vector<1x256xf32>
    %156 = arith.mulf %155, %150 : vector<1x256xf32>
    %157 = arith.addf %154, %156 : vector<1x256xf32>
    %158 = arith.mulf %157, %45 : vector<1x256xf32>
    %159 = arith.addf %148, %158 : vector<1x256xf32>
    %160 = vector.extract_strided_slice %37 {offsets = [0, 19], sizes = [1, 256], strides = [1, 1]} : vector<1x358xf32> to vector<1x256xf32>
    %161 = vector.extract_strided_slice %42 {offsets = [0, 19], sizes = [1, 256], strides = [1, 1]} : vector<1x358xf32> to vector<1x256xf32>
    %c10 = arith.constant 10 : index
    %162 = memref.load %arg1[%c10] : memref<98xf32, #tpu.memory_space<smem>>
    %c59 = arith.constant 59 : index
    %163 = memref.load %arg1[%c59] : memref<98xf32, #tpu.memory_space<smem>>
    %164 = vector.broadcast %162 : f32 to vector<1x256xf32>
    %165 = arith.mulf %164, %160 : vector<1x256xf32>
    %166 = vector.broadcast %163 : f32 to vector<1x256xf32>
    %167 = arith.mulf %166, %161 : vector<1x256xf32>
    %168 = arith.addf %165, %167 : vector<1x256xf32>
    %169 = arith.addf %159, %168 : vector<1x256xf32>
    %170 = vector.extract_strided_slice %37 {offsets = [0, 20], sizes = [1, 256], strides = [1, 1]} : vector<1x358xf32> to vector<1x256xf32>
    %171 = vector.extract_strided_slice %42 {offsets = [0, 20], sizes = [1, 256], strides = [1, 1]} : vector<1x358xf32> to vector<1x256xf32>
    %c11 = arith.constant 11 : index
    %172 = memref.load %arg1[%c11] : memref<98xf32, #tpu.memory_space<smem>>
    %c60 = arith.constant 60 : index
    %173 = memref.load %arg1[%c60] : memref<98xf32, #tpu.memory_space<smem>>
    %174 = vector.broadcast %172 : f32 to vector<1x256xf32>
    %175 = arith.mulf %174, %170 : vector<1x256xf32>
    %176 = vector.broadcast %173 : f32 to vector<1x256xf32>
    %177 = arith.mulf %176, %171 : vector<1x256xf32>
    %178 = arith.addf %175, %177 : vector<1x256xf32>
    %179 = arith.mulf %178, %46 : vector<1x256xf32>
    %180 = arith.addf %169, %179 : vector<1x256xf32>
    %181 = vector.extract_strided_slice %37 {offsets = [0, 21], sizes = [1, 256], strides = [1, 1]} : vector<1x358xf32> to vector<1x256xf32>
    %182 = vector.extract_strided_slice %42 {offsets = [0, 21], sizes = [1, 256], strides = [1, 1]} : vector<1x358xf32> to vector<1x256xf32>
    %c12 = arith.constant 12 : index
    %183 = memref.load %arg1[%c12] : memref<98xf32, #tpu.memory_space<smem>>
    %c61 = arith.constant 61 : index
    %184 = memref.load %arg1[%c61] : memref<98xf32, #tpu.memory_space<smem>>
    %185 = vector.broadcast %183 : f32 to vector<1x256xf32>
    %186 = arith.mulf %185, %181 : vector<1x256xf32>
    %187 = vector.broadcast %184 : f32 to vector<1x256xf32>
    %188 = arith.mulf %187, %182 : vector<1x256xf32>
    %189 = arith.addf %186, %188 : vector<1x256xf32>
    %190 = arith.mulf %189, %47 : vector<1x256xf32>
    %191 = arith.addf %180, %190 : vector<1x256xf32>
    %192 = vector.extract_strided_slice %37 {offsets = [0, 22], sizes = [1, 256], strides = [1, 1]} : vector<1x358xf32> to vector<1x256xf32>
    %193 = vector.extract_strided_slice %42 {offsets = [0, 22], sizes = [1, 256], strides = [1, 1]} : vector<1x358xf32> to vector<1x256xf32>
    %c13 = arith.constant 13 : index
    %194 = memref.load %arg1[%c13] : memref<98xf32, #tpu.memory_space<smem>>
    %c62 = arith.constant 62 : index
    %195 = memref.load %arg1[%c62] : memref<98xf32, #tpu.memory_space<smem>>
    %196 = vector.broadcast %194 : f32 to vector<1x256xf32>
    %197 = arith.mulf %196, %192 : vector<1x256xf32>
    %198 = vector.broadcast %195 : f32 to vector<1x256xf32>
    %199 = arith.mulf %198, %193 : vector<1x256xf32>
    %200 = arith.addf %197, %199 : vector<1x256xf32>
    %201 = arith.mulf %200, %48 : vector<1x256xf32>
    %202 = arith.addf %191, %201 : vector<1x256xf32>
    %cst_35 = arith.constant 0.000000e+00 : f32
    %203 = vector.broadcast %cst_35 : f32 to vector<1x256xf32>
    %204 = vector.extract_strided_slice %37 {offsets = [0, 32], sizes = [1, 256], strides = [1, 1]} : vector<1x358xf32> to vector<1x256xf32>
    %205 = vector.extract_strided_slice %42 {offsets = [0, 32], sizes = [1, 256], strides = [1, 1]} : vector<1x358xf32> to vector<1x256xf32>
    %c14 = arith.constant 14 : index
    %206 = memref.load %arg1[%c14] : memref<98xf32, #tpu.memory_space<smem>>
    %c63 = arith.constant 63 : index
    %207 = memref.load %arg1[%c63] : memref<98xf32, #tpu.memory_space<smem>>
    %208 = vector.broadcast %206 : f32 to vector<1x256xf32>
    %209 = arith.mulf %208, %204 : vector<1x256xf32>
    %210 = vector.broadcast %207 : f32 to vector<1x256xf32>
    %211 = arith.mulf %210, %205 : vector<1x256xf32>
    %212 = arith.addf %209, %211 : vector<1x256xf32>
    %213 = arith.mulf %212, %43 : vector<1x256xf32>
    %214 = arith.addf %203, %213 : vector<1x256xf32>
    %215 = vector.extract_strided_slice %37 {offsets = [0, 33], sizes = [1, 256], strides = [1, 1]} : vector<1x358xf32> to vector<1x256xf32>
    %216 = vector.extract_strided_slice %42 {offsets = [0, 33], sizes = [1, 256], strides = [1, 1]} : vector<1x358xf32> to vector<1x256xf32>
    %c15 = arith.constant 15 : index
    %217 = memref.load %arg1[%c15] : memref<98xf32, #tpu.memory_space<smem>>
    %c64 = arith.constant 64 : index
    %218 = memref.load %arg1[%c64] : memref<98xf32, #tpu.memory_space<smem>>
    %219 = vector.broadcast %217 : f32 to vector<1x256xf32>
    %220 = arith.mulf %219, %215 : vector<1x256xf32>
    %221 = vector.broadcast %218 : f32 to vector<1x256xf32>
    %222 = arith.mulf %221, %216 : vector<1x256xf32>
    %223 = arith.addf %220, %222 : vector<1x256xf32>
    %224 = arith.mulf %223, %44 : vector<1x256xf32>
    %225 = arith.addf %214, %224 : vector<1x256xf32>
    %226 = vector.extract_strided_slice %37 {offsets = [0, 34], sizes = [1, 256], strides = [1, 1]} : vector<1x358xf32> to vector<1x256xf32>
    %227 = vector.extract_strided_slice %42 {offsets = [0, 34], sizes = [1, 256], strides = [1, 1]} : vector<1x358xf32> to vector<1x256xf32>
    %c16 = arith.constant 16 : index
    %228 = memref.load %arg1[%c16] : memref<98xf32, #tpu.memory_space<smem>>
    %c65 = arith.constant 65 : index
    %229 = memref.load %arg1[%c65] : memref<98xf32, #tpu.memory_space<smem>>
    %230 = vector.broadcast %228 : f32 to vector<1x256xf32>
    %231 = arith.mulf %230, %226 : vector<1x256xf32>
    %232 = vector.broadcast %229 : f32 to vector<1x256xf32>
    %233 = arith.mulf %232, %227 : vector<1x256xf32>
    %234 = arith.addf %231, %233 : vector<1x256xf32>
    %235 = arith.mulf %234, %45 : vector<1x256xf32>
    %236 = arith.addf %225, %235 : vector<1x256xf32>
    %237 = vector.extract_strided_slice %37 {offsets = [0, 35], sizes = [1, 256], strides = [1, 1]} : vector<1x358xf32> to vector<1x256xf32>
    %238 = vector.extract_strided_slice %42 {offsets = [0, 35], sizes = [1, 256], strides = [1, 1]} : vector<1x358xf32> to vector<1x256xf32>
    %c17 = arith.constant 17 : index
    %239 = memref.load %arg1[%c17] : memref<98xf32, #tpu.memory_space<smem>>
    %c66 = arith.constant 66 : index
    %240 = memref.load %arg1[%c66] : memref<98xf32, #tpu.memory_space<smem>>
    %241 = vector.broadcast %239 : f32 to vector<1x256xf32>
    %242 = arith.mulf %241, %237 : vector<1x256xf32>
    %243 = vector.broadcast %240 : f32 to vector<1x256xf32>
    %244 = arith.mulf %243, %238 : vector<1x256xf32>
    %245 = arith.addf %242, %244 : vector<1x256xf32>
    %246 = arith.addf %236, %245 : vector<1x256xf32>
    %247 = vector.extract_strided_slice %37 {offsets = [0, 36], sizes = [1, 256], strides = [1, 1]} : vector<1x358xf32> to vector<1x256xf32>
    %248 = vector.extract_strided_slice %42 {offsets = [0, 36], sizes = [1, 256], strides = [1, 1]} : vector<1x358xf32> to vector<1x256xf32>
    %c18 = arith.constant 18 : index
    %249 = memref.load %arg1[%c18] : memref<98xf32, #tpu.memory_space<smem>>
    %c67 = arith.constant 67 : index
    %250 = memref.load %arg1[%c67] : memref<98xf32, #tpu.memory_space<smem>>
    %251 = vector.broadcast %249 : f32 to vector<1x256xf32>
    %252 = arith.mulf %251, %247 : vector<1x256xf32>
    %253 = vector.broadcast %250 : f32 to vector<1x256xf32>
    %254 = arith.mulf %253, %248 : vector<1x256xf32>
    %255 = arith.addf %252, %254 : vector<1x256xf32>
    %256 = arith.mulf %255, %46 : vector<1x256xf32>
    %257 = arith.addf %246, %256 : vector<1x256xf32>
    %258 = vector.extract_strided_slice %37 {offsets = [0, 37], sizes = [1, 256], strides = [1, 1]} : vector<1x358xf32> to vector<1x256xf32>
    %259 = vector.extract_strided_slice %42 {offsets = [0, 37], sizes = [1, 256], strides = [1, 1]} : vector<1x358xf32> to vector<1x256xf32>
    %c19 = arith.constant 19 : index
    %260 = memref.load %arg1[%c19] : memref<98xf32, #tpu.memory_space<smem>>
    %c68 = arith.constant 68 : index
    %261 = memref.load %arg1[%c68] : memref<98xf32, #tpu.memory_space<smem>>
    %262 = vector.broadcast %260 : f32 to vector<1x256xf32>
    %263 = arith.mulf %262, %258 : vector<1x256xf32>
    %264 = vector.broadcast %261 : f32 to vector<1x256xf32>
    %265 = arith.mulf %264, %259 : vector<1x256xf32>
    %266 = arith.addf %263, %265 : vector<1x256xf32>
    %267 = arith.mulf %266, %47 : vector<1x256xf32>
    %268 = arith.addf %257, %267 : vector<1x256xf32>
    %269 = vector.extract_strided_slice %37 {offsets = [0, 38], sizes = [1, 256], strides = [1, 1]} : vector<1x358xf32> to vector<1x256xf32>
    %270 = vector.extract_strided_slice %42 {offsets = [0, 38], sizes = [1, 256], strides = [1, 1]} : vector<1x358xf32> to vector<1x256xf32>
    %c20 = arith.constant 20 : index
    %271 = memref.load %arg1[%c20] : memref<98xf32, #tpu.memory_space<smem>>
    %c69 = arith.constant 69 : index
    %272 = memref.load %arg1[%c69] : memref<98xf32, #tpu.memory_space<smem>>
    %273 = vector.broadcast %271 : f32 to vector<1x256xf32>
    %274 = arith.mulf %273, %269 : vector<1x256xf32>
    %275 = vector.broadcast %272 : f32 to vector<1x256xf32>
    %276 = arith.mulf %275, %270 : vector<1x256xf32>
    %277 = arith.addf %274, %276 : vector<1x256xf32>
    %278 = arith.mulf %277, %48 : vector<1x256xf32>
    %279 = arith.addf %268, %278 : vector<1x256xf32>
    %cst_36 = arith.constant 0.000000e+00 : f32
    %280 = vector.broadcast %cst_36 : f32 to vector<1x256xf32>
    %281 = vector.extract_strided_slice %37 {offsets = [0, 48], sizes = [1, 256], strides = [1, 1]} : vector<1x358xf32> to vector<1x256xf32>
    %282 = vector.extract_strided_slice %42 {offsets = [0, 48], sizes = [1, 256], strides = [1, 1]} : vector<1x358xf32> to vector<1x256xf32>
    %c21 = arith.constant 21 : index
    %283 = memref.load %arg1[%c21] : memref<98xf32, #tpu.memory_space<smem>>
    %c70 = arith.constant 70 : index
    %284 = memref.load %arg1[%c70] : memref<98xf32, #tpu.memory_space<smem>>
    %285 = vector.broadcast %283 : f32 to vector<1x256xf32>
    %286 = arith.mulf %285, %281 : vector<1x256xf32>
    %287 = vector.broadcast %284 : f32 to vector<1x256xf32>
    %288 = arith.mulf %287, %282 : vector<1x256xf32>
    %289 = arith.addf %286, %288 : vector<1x256xf32>
    %290 = arith.mulf %289, %43 : vector<1x256xf32>
    %291 = arith.addf %280, %290 : vector<1x256xf32>
    %292 = vector.extract_strided_slice %37 {offsets = [0, 49], sizes = [1, 256], strides = [1, 1]} : vector<1x358xf32> to vector<1x256xf32>
    %293 = vector.extract_strided_slice %42 {offsets = [0, 49], sizes = [1, 256], strides = [1, 1]} : vector<1x358xf32> to vector<1x256xf32>
    %c22 = arith.constant 22 : index
    %294 = memref.load %arg1[%c22] : memref<98xf32, #tpu.memory_space<smem>>
    %c71 = arith.constant 71 : index
    %295 = memref.load %arg1[%c71] : memref<98xf32, #tpu.memory_space<smem>>
    %296 = vector.broadcast %294 : f32 to vector<1x256xf32>
    %297 = arith.mulf %296, %292 : vector<1x256xf32>
    %298 = vector.broadcast %295 : f32 to vector<1x256xf32>
    %299 = arith.mulf %298, %293 : vector<1x256xf32>
    %300 = arith.addf %297, %299 : vector<1x256xf32>
    %301 = arith.mulf %300, %44 : vector<1x256xf32>
    %302 = arith.addf %291, %301 : vector<1x256xf32>
    %303 = vector.extract_strided_slice %37 {offsets = [0, 50], sizes = [1, 256], strides = [1, 1]} : vector<1x358xf32> to vector<1x256xf32>
    %304 = vector.extract_strided_slice %42 {offsets = [0, 50], sizes = [1, 256], strides = [1, 1]} : vector<1x358xf32> to vector<1x256xf32>
    %c23 = arith.constant 23 : index
    %305 = memref.load %arg1[%c23] : memref<98xf32, #tpu.memory_space<smem>>
    %c72 = arith.constant 72 : index
    %306 = memref.load %arg1[%c72] : memref<98xf32, #tpu.memory_space<smem>>
    %307 = vector.broadcast %305 : f32 to vector<1x256xf32>
    %308 = arith.mulf %307, %303 : vector<1x256xf32>
    %309 = vector.broadcast %306 : f32 to vector<1x256xf32>
    %310 = arith.mulf %309, %304 : vector<1x256xf32>
    %311 = arith.addf %308, %310 : vector<1x256xf32>
    %312 = arith.mulf %311, %45 : vector<1x256xf32>
    %313 = arith.addf %302, %312 : vector<1x256xf32>
    %314 = vector.extract_strided_slice %37 {offsets = [0, 51], sizes = [1, 256], strides = [1, 1]} : vector<1x358xf32> to vector<1x256xf32>
    %315 = vector.extract_strided_slice %42 {offsets = [0, 51], sizes = [1, 256], strides = [1, 1]} : vector<1x358xf32> to vector<1x256xf32>
    %c24 = arith.constant 24 : index
    %316 = memref.load %arg1[%c24] : memref<98xf32, #tpu.memory_space<smem>>
    %c73 = arith.constant 73 : index
    %317 = memref.load %arg1[%c73] : memref<98xf32, #tpu.memory_space<smem>>
    %318 = vector.broadcast %316 : f32 to vector<1x256xf32>
    %319 = arith.mulf %318, %314 : vector<1x256xf32>
    %320 = vector.broadcast %317 : f32 to vector<1x256xf32>
    %321 = arith.mulf %320, %315 : vector<1x256xf32>
    %322 = arith.addf %319, %321 : vector<1x256xf32>
    %323 = arith.addf %313, %322 : vector<1x256xf32>
    %324 = vector.extract_strided_slice %37 {offsets = [0, 52], sizes = [1, 256], strides = [1, 1]} : vector<1x358xf32> to vector<1x256xf32>
    %325 = vector.extract_strided_slice %42 {offsets = [0, 52], sizes = [1, 256], strides = [1, 1]} : vector<1x358xf32> to vector<1x256xf32>
    %c25 = arith.constant 25 : index
    %326 = memref.load %arg1[%c25] : memref<98xf32, #tpu.memory_space<smem>>
    %c74 = arith.constant 74 : index
    %327 = memref.load %arg1[%c74] : memref<98xf32, #tpu.memory_space<smem>>
    %328 = vector.broadcast %326 : f32 to vector<1x256xf32>
    %329 = arith.mulf %328, %324 : vector<1x256xf32>
    %330 = vector.broadcast %327 : f32 to vector<1x256xf32>
    %331 = arith.mulf %330, %325 : vector<1x256xf32>
    %332 = arith.addf %329, %331 : vector<1x256xf32>
    %333 = arith.mulf %332, %46 : vector<1x256xf32>
    %334 = arith.addf %323, %333 : vector<1x256xf32>
    %335 = vector.extract_strided_slice %37 {offsets = [0, 53], sizes = [1, 256], strides = [1, 1]} : vector<1x358xf32> to vector<1x256xf32>
    %336 = vector.extract_strided_slice %42 {offsets = [0, 53], sizes = [1, 256], strides = [1, 1]} : vector<1x358xf32> to vector<1x256xf32>
    %c26 = arith.constant 26 : index
    %337 = memref.load %arg1[%c26] : memref<98xf32, #tpu.memory_space<smem>>
    %c75 = arith.constant 75 : index
    %338 = memref.load %arg1[%c75] : memref<98xf32, #tpu.memory_space<smem>>
    %339 = vector.broadcast %337 : f32 to vector<1x256xf32>
    %340 = arith.mulf %339, %335 : vector<1x256xf32>
    %341 = vector.broadcast %338 : f32 to vector<1x256xf32>
    %342 = arith.mulf %341, %336 : vector<1x256xf32>
    %343 = arith.addf %340, %342 : vector<1x256xf32>
    %344 = arith.mulf %343, %47 : vector<1x256xf32>
    %345 = arith.addf %334, %344 : vector<1x256xf32>
    %346 = vector.extract_strided_slice %37 {offsets = [0, 54], sizes = [1, 256], strides = [1, 1]} : vector<1x358xf32> to vector<1x256xf32>
    %347 = vector.extract_strided_slice %42 {offsets = [0, 54], sizes = [1, 256], strides = [1, 1]} : vector<1x358xf32> to vector<1x256xf32>
    %c27 = arith.constant 27 : index
    %348 = memref.load %arg1[%c27] : memref<98xf32, #tpu.memory_space<smem>>
    %c76 = arith.constant 76 : index
    %349 = memref.load %arg1[%c76] : memref<98xf32, #tpu.memory_space<smem>>
    %350 = vector.broadcast %348 : f32 to vector<1x256xf32>
    %351 = arith.mulf %350, %346 : vector<1x256xf32>
    %352 = vector.broadcast %349 : f32 to vector<1x256xf32>
    %353 = arith.mulf %352, %347 : vector<1x256xf32>
    %354 = arith.addf %351, %353 : vector<1x256xf32>
    %355 = arith.mulf %354, %48 : vector<1x256xf32>
    %356 = arith.addf %345, %355 : vector<1x256xf32>
    %cst_37 = arith.constant 0.000000e+00 : f32
    %357 = vector.broadcast %cst_37 : f32 to vector<1x256xf32>
    %358 = vector.extract_strided_slice %37 {offsets = [0, 64], sizes = [1, 256], strides = [1, 1]} : vector<1x358xf32> to vector<1x256xf32>
    %359 = vector.extract_strided_slice %42 {offsets = [0, 64], sizes = [1, 256], strides = [1, 1]} : vector<1x358xf32> to vector<1x256xf32>
    %c28 = arith.constant 28 : index
    %360 = memref.load %arg1[%c28] : memref<98xf32, #tpu.memory_space<smem>>
    %c77 = arith.constant 77 : index
    %361 = memref.load %arg1[%c77] : memref<98xf32, #tpu.memory_space<smem>>
    %362 = vector.broadcast %360 : f32 to vector<1x256xf32>
    %363 = arith.mulf %362, %358 : vector<1x256xf32>
    %364 = vector.broadcast %361 : f32 to vector<1x256xf32>
    %365 = arith.mulf %364, %359 : vector<1x256xf32>
    %366 = arith.addf %363, %365 : vector<1x256xf32>
    %367 = arith.mulf %366, %43 : vector<1x256xf32>
    %368 = arith.addf %357, %367 : vector<1x256xf32>
    %369 = vector.extract_strided_slice %37 {offsets = [0, 65], sizes = [1, 256], strides = [1, 1]} : vector<1x358xf32> to vector<1x256xf32>
    %370 = vector.extract_strided_slice %42 {offsets = [0, 65], sizes = [1, 256], strides = [1, 1]} : vector<1x358xf32> to vector<1x256xf32>
    %c29 = arith.constant 29 : index
    %371 = memref.load %arg1[%c29] : memref<98xf32, #tpu.memory_space<smem>>
    %c78 = arith.constant 78 : index
    %372 = memref.load %arg1[%c78] : memref<98xf32, #tpu.memory_space<smem>>
    %373 = vector.broadcast %371 : f32 to vector<1x256xf32>
    %374 = arith.mulf %373, %369 : vector<1x256xf32>
    %375 = vector.broadcast %372 : f32 to vector<1x256xf32>
    %376 = arith.mulf %375, %370 : vector<1x256xf32>
    %377 = arith.addf %374, %376 : vector<1x256xf32>
    %378 = arith.mulf %377, %44 : vector<1x256xf32>
    %379 = arith.addf %368, %378 : vector<1x256xf32>
    %380 = vector.extract_strided_slice %37 {offsets = [0, 66], sizes = [1, 256], strides = [1, 1]} : vector<1x358xf32> to vector<1x256xf32>
    %381 = vector.extract_strided_slice %42 {offsets = [0, 66], sizes = [1, 256], strides = [1, 1]} : vector<1x358xf32> to vector<1x256xf32>
    %c30 = arith.constant 30 : index
    %382 = memref.load %arg1[%c30] : memref<98xf32, #tpu.memory_space<smem>>
    %c79 = arith.constant 79 : index
    %383 = memref.load %arg1[%c79] : memref<98xf32, #tpu.memory_space<smem>>
    %384 = vector.broadcast %382 : f32 to vector<1x256xf32>
    %385 = arith.mulf %384, %380 : vector<1x256xf32>
    %386 = vector.broadcast %383 : f32 to vector<1x256xf32>
    %387 = arith.mulf %386, %381 : vector<1x256xf32>
    %388 = arith.addf %385, %387 : vector<1x256xf32>
    %389 = arith.mulf %388, %45 : vector<1x256xf32>
    %390 = arith.addf %379, %389 : vector<1x256xf32>
    %391 = vector.extract_strided_slice %37 {offsets = [0, 67], sizes = [1, 256], strides = [1, 1]} : vector<1x358xf32> to vector<1x256xf32>
    %392 = vector.extract_strided_slice %42 {offsets = [0, 67], sizes = [1, 256], strides = [1, 1]} : vector<1x358xf32> to vector<1x256xf32>
    %c31 = arith.constant 31 : index
    %393 = memref.load %arg1[%c31] : memref<98xf32, #tpu.memory_space<smem>>
    %c80 = arith.constant 80 : index
    %394 = memref.load %arg1[%c80] : memref<98xf32, #tpu.memory_space<smem>>
    %395 = vector.broadcast %393 : f32 to vector<1x256xf32>
    %396 = arith.mulf %395, %391 : vector<1x256xf32>
    %397 = vector.broadcast %394 : f32 to vector<1x256xf32>
    %398 = arith.mulf %397, %392 : vector<1x256xf32>
    %399 = arith.addf %396, %398 : vector<1x256xf32>
    %400 = arith.addf %390, %399 : vector<1x256xf32>
    %401 = vector.extract_strided_slice %37 {offsets = [0, 68], sizes = [1, 256], strides = [1, 1]} : vector<1x358xf32> to vector<1x256xf32>
    %402 = vector.extract_strided_slice %42 {offsets = [0, 68], sizes = [1, 256], strides = [1, 1]} : vector<1x358xf32> to vector<1x256xf32>
    %c32 = arith.constant 32 : index
    %403 = memref.load %arg1[%c32] : memref<98xf32, #tpu.memory_space<smem>>
    %c81 = arith.constant 81 : index
    %404 = memref.load %arg1[%c81] : memref<98xf32, #tpu.memory_space<smem>>
    %405 = vector.broadcast %403 : f32 to vector<1x256xf32>
    %406 = arith.mulf %405, %401 : vector<1x256xf32>
    %407 = vector.broadcast %404 : f32 to vector<1x256xf32>
    %408 = arith.mulf %407, %402 : vector<1x256xf32>
    %409 = arith.addf %406, %408 : vector<1x256xf32>
    %410 = arith.mulf %409, %46 : vector<1x256xf32>
    %411 = arith.addf %400, %410 : vector<1x256xf32>
    %412 = vector.extract_strided_slice %37 {offsets = [0, 69], sizes = [1, 256], strides = [1, 1]} : vector<1x358xf32> to vector<1x256xf32>
    %413 = vector.extract_strided_slice %42 {offsets = [0, 69], sizes = [1, 256], strides = [1, 1]} : vector<1x358xf32> to vector<1x256xf32>
    %c33 = arith.constant 33 : index
    %414 = memref.load %arg1[%c33] : memref<98xf32, #tpu.memory_space<smem>>
    %c82 = arith.constant 82 : index
    %415 = memref.load %arg1[%c82] : memref<98xf32, #tpu.memory_space<smem>>
    %416 = vector.broadcast %414 : f32 to vector<1x256xf32>
    %417 = arith.mulf %416, %412 : vector<1x256xf32>
    %418 = vector.broadcast %415 : f32 to vector<1x256xf32>
    %419 = arith.mulf %418, %413 : vector<1x256xf32>
    %420 = arith.addf %417, %419 : vector<1x256xf32>
    %421 = arith.mulf %420, %47 : vector<1x256xf32>
    %422 = arith.addf %411, %421 : vector<1x256xf32>
    %423 = vector.extract_strided_slice %37 {offsets = [0, 70], sizes = [1, 256], strides = [1, 1]} : vector<1x358xf32> to vector<1x256xf32>
    %424 = vector.extract_strided_slice %42 {offsets = [0, 70], sizes = [1, 256], strides = [1, 1]} : vector<1x358xf32> to vector<1x256xf32>
    %c34 = arith.constant 34 : index
    %425 = memref.load %arg1[%c34] : memref<98xf32, #tpu.memory_space<smem>>
    %c83 = arith.constant 83 : index
    %426 = memref.load %arg1[%c83] : memref<98xf32, #tpu.memory_space<smem>>
    %427 = vector.broadcast %425 : f32 to vector<1x256xf32>
    %428 = arith.mulf %427, %423 : vector<1x256xf32>
    %429 = vector.broadcast %426 : f32 to vector<1x256xf32>
    %430 = arith.mulf %429, %424 : vector<1x256xf32>
    %431 = arith.addf %428, %430 : vector<1x256xf32>
    %432 = arith.mulf %431, %48 : vector<1x256xf32>
    %433 = arith.addf %422, %432 : vector<1x256xf32>
    %cst_38 = arith.constant 0.000000e+00 : f32
    %434 = vector.broadcast %cst_38 : f32 to vector<1x256xf32>
    %435 = vector.extract_strided_slice %37 {offsets = [0, 80], sizes = [1, 256], strides = [1, 1]} : vector<1x358xf32> to vector<1x256xf32>
    %436 = vector.extract_strided_slice %42 {offsets = [0, 80], sizes = [1, 256], strides = [1, 1]} : vector<1x358xf32> to vector<1x256xf32>
    %c35 = arith.constant 35 : index
    %437 = memref.load %arg1[%c35] : memref<98xf32, #tpu.memory_space<smem>>
    %c84 = arith.constant 84 : index
    %438 = memref.load %arg1[%c84] : memref<98xf32, #tpu.memory_space<smem>>
    %439 = vector.broadcast %437 : f32 to vector<1x256xf32>
    %440 = arith.mulf %439, %435 : vector<1x256xf32>
    %441 = vector.broadcast %438 : f32 to vector<1x256xf32>
    %442 = arith.mulf %441, %436 : vector<1x256xf32>
    %443 = arith.addf %440, %442 : vector<1x256xf32>
    %444 = arith.mulf %443, %43 : vector<1x256xf32>
    %445 = arith.addf %434, %444 : vector<1x256xf32>
    %446 = vector.extract_strided_slice %37 {offsets = [0, 81], sizes = [1, 256], strides = [1, 1]} : vector<1x358xf32> to vector<1x256xf32>
    %447 = vector.extract_strided_slice %42 {offsets = [0, 81], sizes = [1, 256], strides = [1, 1]} : vector<1x358xf32> to vector<1x256xf32>
    %c36 = arith.constant 36 : index
    %448 = memref.load %arg1[%c36] : memref<98xf32, #tpu.memory_space<smem>>
    %c85 = arith.constant 85 : index
    %449 = memref.load %arg1[%c85] : memref<98xf32, #tpu.memory_space<smem>>
    %450 = vector.broadcast %448 : f32 to vector<1x256xf32>
    %451 = arith.mulf %450, %446 : vector<1x256xf32>
    %452 = vector.broadcast %449 : f32 to vector<1x256xf32>
    %453 = arith.mulf %452, %447 : vector<1x256xf32>
    %454 = arith.addf %451, %453 : vector<1x256xf32>
    %455 = arith.mulf %454, %44 : vector<1x256xf32>
    %456 = arith.addf %445, %455 : vector<1x256xf32>
    %457 = vector.extract_strided_slice %37 {offsets = [0, 82], sizes = [1, 256], strides = [1, 1]} : vector<1x358xf32> to vector<1x256xf32>
    %458 = vector.extract_strided_slice %42 {offsets = [0, 82], sizes = [1, 256], strides = [1, 1]} : vector<1x358xf32> to vector<1x256xf32>
    %c37 = arith.constant 37 : index
    %459 = memref.load %arg1[%c37] : memref<98xf32, #tpu.memory_space<smem>>
    %c86 = arith.constant 86 : index
    %460 = memref.load %arg1[%c86] : memref<98xf32, #tpu.memory_space<smem>>
    %461 = vector.broadcast %459 : f32 to vector<1x256xf32>
    %462 = arith.mulf %461, %457 : vector<1x256xf32>
    %463 = vector.broadcast %460 : f32 to vector<1x256xf32>
    %464 = arith.mulf %463, %458 : vector<1x256xf32>
    %465 = arith.addf %462, %464 : vector<1x256xf32>
    %466 = arith.mulf %465, %45 : vector<1x256xf32>
    %467 = arith.addf %456, %466 : vector<1x256xf32>
    %468 = vector.extract_strided_slice %37 {offsets = [0, 83], sizes = [1, 256], strides = [1, 1]} : vector<1x358xf32> to vector<1x256xf32>
    %469 = vector.extract_strided_slice %42 {offsets = [0, 83], sizes = [1, 256], strides = [1, 1]} : vector<1x358xf32> to vector<1x256xf32>
    %c38 = arith.constant 38 : index
    %470 = memref.load %arg1[%c38] : memref<98xf32, #tpu.memory_space<smem>>
    %c87 = arith.constant 87 : index
    %471 = memref.load %arg1[%c87] : memref<98xf32, #tpu.memory_space<smem>>
    %472 = vector.broadcast %470 : f32 to vector<1x256xf32>
    %473 = arith.mulf %472, %468 : vector<1x256xf32>
    %474 = vector.broadcast %471 : f32 to vector<1x256xf32>
    %475 = arith.mulf %474, %469 : vector<1x256xf32>
    %476 = arith.addf %473, %475 : vector<1x256xf32>
    %477 = arith.addf %467, %476 : vector<1x256xf32>
    %478 = vector.extract_strided_slice %37 {offsets = [0, 84], sizes = [1, 256], strides = [1, 1]} : vector<1x358xf32> to vector<1x256xf32>
    %479 = vector.extract_strided_slice %42 {offsets = [0, 84], sizes = [1, 256], strides = [1, 1]} : vector<1x358xf32> to vector<1x256xf32>
    %c39 = arith.constant 39 : index
    %480 = memref.load %arg1[%c39] : memref<98xf32, #tpu.memory_space<smem>>
    %c88 = arith.constant 88 : index
    %481 = memref.load %arg1[%c88] : memref<98xf32, #tpu.memory_space<smem>>
    %482 = vector.broadcast %480 : f32 to vector<1x256xf32>
    %483 = arith.mulf %482, %478 : vector<1x256xf32>
    %484 = vector.broadcast %481 : f32 to vector<1x256xf32>
    %485 = arith.mulf %484, %479 : vector<1x256xf32>
    %486 = arith.addf %483, %485 : vector<1x256xf32>
    %487 = arith.mulf %486, %46 : vector<1x256xf32>
    %488 = arith.addf %477, %487 : vector<1x256xf32>
    %489 = vector.extract_strided_slice %37 {offsets = [0, 85], sizes = [1, 256], strides = [1, 1]} : vector<1x358xf32> to vector<1x256xf32>
    %490 = vector.extract_strided_slice %42 {offsets = [0, 85], sizes = [1, 256], strides = [1, 1]} : vector<1x358xf32> to vector<1x256xf32>
    %c40 = arith.constant 40 : index
    %491 = memref.load %arg1[%c40] : memref<98xf32, #tpu.memory_space<smem>>
    %c89 = arith.constant 89 : index
    %492 = memref.load %arg1[%c89] : memref<98xf32, #tpu.memory_space<smem>>
    %493 = vector.broadcast %491 : f32 to vector<1x256xf32>
    %494 = arith.mulf %493, %489 : vector<1x256xf32>
    %495 = vector.broadcast %492 : f32 to vector<1x256xf32>
    %496 = arith.mulf %495, %490 : vector<1x256xf32>
    %497 = arith.addf %494, %496 : vector<1x256xf32>
    %498 = arith.mulf %497, %47 : vector<1x256xf32>
    %499 = arith.addf %488, %498 : vector<1x256xf32>
    %500 = vector.extract_strided_slice %37 {offsets = [0, 86], sizes = [1, 256], strides = [1, 1]} : vector<1x358xf32> to vector<1x256xf32>
    %501 = vector.extract_strided_slice %42 {offsets = [0, 86], sizes = [1, 256], strides = [1, 1]} : vector<1x358xf32> to vector<1x256xf32>
    %c41 = arith.constant 41 : index
    %502 = memref.load %arg1[%c41] : memref<98xf32, #tpu.memory_space<smem>>
    %c90 = arith.constant 90 : index
    %503 = memref.load %arg1[%c90] : memref<98xf32, #tpu.memory_space<smem>>
    %504 = vector.broadcast %502 : f32 to vector<1x256xf32>
    %505 = arith.mulf %504, %500 : vector<1x256xf32>
    %506 = vector.broadcast %503 : f32 to vector<1x256xf32>
    %507 = arith.mulf %506, %501 : vector<1x256xf32>
    %508 = arith.addf %505, %507 : vector<1x256xf32>
    %509 = arith.mulf %508, %48 : vector<1x256xf32>
    %510 = arith.addf %499, %509 : vector<1x256xf32>
    %cst_39 = arith.constant 0.000000e+00 : f32
    %511 = vector.broadcast %cst_39 : f32 to vector<1x256xf32>
    %512 = vector.extract_strided_slice %37 {offsets = [0, 96], sizes = [1, 256], strides = [1, 1]} : vector<1x358xf32> to vector<1x256xf32>
    %513 = vector.extract_strided_slice %42 {offsets = [0, 96], sizes = [1, 256], strides = [1, 1]} : vector<1x358xf32> to vector<1x256xf32>
    %c42 = arith.constant 42 : index
    %514 = memref.load %arg1[%c42] : memref<98xf32, #tpu.memory_space<smem>>
    %c91 = arith.constant 91 : index
    %515 = memref.load %arg1[%c91] : memref<98xf32, #tpu.memory_space<smem>>
    %516 = vector.broadcast %514 : f32 to vector<1x256xf32>
    %517 = arith.mulf %516, %512 : vector<1x256xf32>
    %518 = vector.broadcast %515 : f32 to vector<1x256xf32>
    %519 = arith.mulf %518, %513 : vector<1x256xf32>
    %520 = arith.addf %517, %519 : vector<1x256xf32>
    %521 = arith.mulf %520, %43 : vector<1x256xf32>
    %522 = arith.addf %511, %521 : vector<1x256xf32>
    %523 = vector.extract_strided_slice %37 {offsets = [0, 97], sizes = [1, 256], strides = [1, 1]} : vector<1x358xf32> to vector<1x256xf32>
    %524 = vector.extract_strided_slice %42 {offsets = [0, 97], sizes = [1, 256], strides = [1, 1]} : vector<1x358xf32> to vector<1x256xf32>
    %c43 = arith.constant 43 : index
    %525 = memref.load %arg1[%c43] : memref<98xf32, #tpu.memory_space<smem>>
    %c92 = arith.constant 92 : index
    %526 = memref.load %arg1[%c92] : memref<98xf32, #tpu.memory_space<smem>>
    %527 = vector.broadcast %525 : f32 to vector<1x256xf32>
    %528 = arith.mulf %527, %523 : vector<1x256xf32>
    %529 = vector.broadcast %526 : f32 to vector<1x256xf32>
    %530 = arith.mulf %529, %524 : vector<1x256xf32>
    %531 = arith.addf %528, %530 : vector<1x256xf32>
    %532 = arith.mulf %531, %44 : vector<1x256xf32>
    %533 = arith.addf %522, %532 : vector<1x256xf32>
    %534 = vector.extract_strided_slice %37 {offsets = [0, 98], sizes = [1, 256], strides = [1, 1]} : vector<1x358xf32> to vector<1x256xf32>
    %535 = vector.extract_strided_slice %42 {offsets = [0, 98], sizes = [1, 256], strides = [1, 1]} : vector<1x358xf32> to vector<1x256xf32>
    %c44 = arith.constant 44 : index
    %536 = memref.load %arg1[%c44] : memref<98xf32, #tpu.memory_space<smem>>
    %c93 = arith.constant 93 : index
    %537 = memref.load %arg1[%c93] : memref<98xf32, #tpu.memory_space<smem>>
    %538 = vector.broadcast %536 : f32 to vector<1x256xf32>
    %539 = arith.mulf %538, %534 : vector<1x256xf32>
    %540 = vector.broadcast %537 : f32 to vector<1x256xf32>
    %541 = arith.mulf %540, %535 : vector<1x256xf32>
    %542 = arith.addf %539, %541 : vector<1x256xf32>
    %543 = arith.mulf %542, %45 : vector<1x256xf32>
    %544 = arith.addf %533, %543 : vector<1x256xf32>
    %545 = vector.extract_strided_slice %37 {offsets = [0, 99], sizes = [1, 256], strides = [1, 1]} : vector<1x358xf32> to vector<1x256xf32>
    %546 = vector.extract_strided_slice %42 {offsets = [0, 99], sizes = [1, 256], strides = [1, 1]} : vector<1x358xf32> to vector<1x256xf32>
    %c45 = arith.constant 45 : index
    %547 = memref.load %arg1[%c45] : memref<98xf32, #tpu.memory_space<smem>>
    %c94 = arith.constant 94 : index
    %548 = memref.load %arg1[%c94] : memref<98xf32, #tpu.memory_space<smem>>
    %549 = vector.broadcast %547 : f32 to vector<1x256xf32>
    %550 = arith.mulf %549, %545 : vector<1x256xf32>
    %551 = vector.broadcast %548 : f32 to vector<1x256xf32>
    %552 = arith.mulf %551, %546 : vector<1x256xf32>
    %553 = arith.addf %550, %552 : vector<1x256xf32>
    %554 = arith.addf %544, %553 : vector<1x256xf32>
    %555 = vector.extract_strided_slice %37 {offsets = [0, 100], sizes = [1, 256], strides = [1, 1]} : vector<1x358xf32> to vector<1x256xf32>
    %556 = vector.extract_strided_slice %42 {offsets = [0, 100], sizes = [1, 256], strides = [1, 1]} : vector<1x358xf32> to vector<1x256xf32>
    %c46 = arith.constant 46 : index
    %557 = memref.load %arg1[%c46] : memref<98xf32, #tpu.memory_space<smem>>
    %c95 = arith.constant 95 : index
    %558 = memref.load %arg1[%c95] : memref<98xf32, #tpu.memory_space<smem>>
    %559 = vector.broadcast %557 : f32 to vector<1x256xf32>
    %560 = arith.mulf %559, %555 : vector<1x256xf32>
    %561 = vector.broadcast %558 : f32 to vector<1x256xf32>
    %562 = arith.mulf %561, %556 : vector<1x256xf32>
    %563 = arith.addf %560, %562 : vector<1x256xf32>
    %564 = arith.mulf %563, %46 : vector<1x256xf32>
    %565 = arith.addf %554, %564 : vector<1x256xf32>
    %566 = vector.extract_strided_slice %37 {offsets = [0, 101], sizes = [1, 256], strides = [1, 1]} : vector<1x358xf32> to vector<1x256xf32>
    %567 = vector.extract_strided_slice %42 {offsets = [0, 101], sizes = [1, 256], strides = [1, 1]} : vector<1x358xf32> to vector<1x256xf32>
    %c47 = arith.constant 47 : index
    %568 = memref.load %arg1[%c47] : memref<98xf32, #tpu.memory_space<smem>>
    %c96 = arith.constant 96 : index
    %569 = memref.load %arg1[%c96] : memref<98xf32, #tpu.memory_space<smem>>
    %570 = vector.broadcast %568 : f32 to vector<1x256xf32>
    %571 = arith.mulf %570, %566 : vector<1x256xf32>
    %572 = vector.broadcast %569 : f32 to vector<1x256xf32>
    %573 = arith.mulf %572, %567 : vector<1x256xf32>
    %574 = arith.addf %571, %573 : vector<1x256xf32>
    %575 = arith.mulf %574, %47 : vector<1x256xf32>
    %576 = arith.addf %565, %575 : vector<1x256xf32>
    %577 = vector.extract_strided_slice %37 {offsets = [0, 102], sizes = [1, 256], strides = [1, 1]} : vector<1x358xf32> to vector<1x256xf32>
    %578 = vector.extract_strided_slice %42 {offsets = [0, 102], sizes = [1, 256], strides = [1, 1]} : vector<1x358xf32> to vector<1x256xf32>
    %c48 = arith.constant 48 : index
    %579 = memref.load %arg1[%c48] : memref<98xf32, #tpu.memory_space<smem>>
    %c97 = arith.constant 97 : index
    %580 = memref.load %arg1[%c97] : memref<98xf32, #tpu.memory_space<smem>>
    %581 = vector.broadcast %579 : f32 to vector<1x256xf32>
    %582 = arith.mulf %581, %577 : vector<1x256xf32>
    %583 = vector.broadcast %580 : f32 to vector<1x256xf32>
    %584 = arith.mulf %583, %578 : vector<1x256xf32>
    %585 = arith.addf %582, %584 : vector<1x256xf32>
    %586 = arith.mulf %585, %48 : vector<1x256xf32>
    %587 = arith.addf %576, %586 : vector<1x256xf32>
    %588 = arith.addf %125, %202 : vector<1x256xf32>
    %589 = arith.addf %279, %356 : vector<1x256xf32>
    %590 = arith.addf %433, %510 : vector<1x256xf32>
    %591 = arith.addf %588, %589 : vector<1x256xf32>
    %592 = arith.addf %590, %587 : vector<1x256xf32>
    %593 = arith.addf %591, %592 : vector<1x256xf32>
    %594 = arith.negf %593 : vector<1x256xf32>
    %595 = math.exp %594 : vector<1x256xf32>
    %cst_40 = arith.constant 1.000000e+00 : f32
    %596 = vector.broadcast %cst_40 : f32 to vector<1x256xf32>
    %597 = arith.addf %596, %595 : vector<1x256xf32>
    %598 = arith.divf %596, %597 : vector<1x256xf32>
    %599 = vector.shape_cast %598 : vector<1x256xf32> to vector<1x1x256xf32>
    %600 = vector.broadcast %599 : vector<1x1x256xf32> to vector<1x32x256xf32>
    %601 = arith.mulf %28, %600 : vector<1x32x256xf32>
    %c0_41 = arith.constant 0 : index
    %c0_42 = arith.constant 0 : index
    %c0_43 = arith.constant 0 : index
    %602 = vector.load %arg8[%c0_41, %c0_42, %c0_43] : memref<1x32x256xf32, #tpu.memory_space<vmem>>, vector<1x32x256xf32>
    tpu.vector_store %arg8[%c0_41, %c0_42, %c0_43], %601 {strides = array<i32>} : memref<1x32x256xf32, #tpu.memory_space<vmem>>, vector<1x32x256xf32>,
    return
  }
  func.func @transform_0(%arg0: i32) -> i32 {
    %c0_i32 = arith.constant 0 : i32
    %c0_i32_0 = arith.constant 0 : i32
    return %c0_i32 : i32
  }
  func.func @transform_1(%arg0: i32) -> (i32, i32) {
    %c0_i32 = arith.constant 0 : i32
    %c0_i32_0 = arith.constant 0 : i32
    %c0_i32_1 = arith.constant 0 : i32
    return %c0_i32, %c0_i32_0 : i32, i32
  }
  func.func @transform_2(%arg0: i32) -> (i32, i32) {
    %c0_i32 = arith.constant 0 : i32
    %c0_i32_0 = arith.constant 0 : i32
    %c0_i32_1 = arith.constant 0 : i32
    return %c0_i32, %c0_i32_0 : i32, i32
  }
  func.func @transform_3(%arg0: i32) -> (i32, i32) {
    %c0_i32 = arith.constant 0 : i32
    %c0_i32_0 = arith.constant 0 : i32
    %c0_i32_1 = arith.constant 0 : i32
    return %c0_i32, %c0_i32_0 : i32, i32
  }
  func.func @transform_4(%arg0: i32) -> (i32, i32) {
    %c0_i32 = arith.constant 0 : i32
    %c0_i32_0 = arith.constant 0 : i32
    %c0_i32_1 = arith.constant 0 : i32
    return %c0_i32, %c0_i32_0 : i32, i32
  }
  func.func @transform_5(%arg0: i32) -> (i32, i32) {
    %c0_i32 = arith.constant 0 : i32
    %c0_i32_0 = arith.constant 0 : i32
    %c0_i32_1 = arith.constant 0 : i32
    return %c0_i32, %c0_i32_0 : i32, i32
  }
  func.func @transform_6(%arg0: i32) -> (i32, i32, i32) {
    %c0_i32 = arith.constant 0 : i32
    %c0_i32_0 = arith.constant 0 : i32
    %c0_i32_1 = arith.constant 0 : i32
    return %arg0, %c0_i32, %c0_i32_0 : i32, i32, i32
  }
  func.func @transform_7(%arg0: i32) -> (i32, i32, i32) {
    %c0_i32 = arith.constant 0 : i32
    %c0_i32_0 = arith.constant 0 : i32
    %c0_i32_1 = arith.constant 0 : i32
    return %arg0, %c0_i32, %c0_i32_0 : i32, i32, i32
  }
}

</mosaic_0001>

<llo_original>
// kernel: tpu_custom_call.1
$region0: #{tpu_custom_call.1}
  #allocation0 [shape = 'u32[]', space=smem, size = 0x4, offset = 0x4, fixed_abs, tag = 'smem constant byte address 0x4 - core index']
  #allocation1 [shape = 'u32[144,128]{1,0:T(1,128)}', space=vmem, size = 0x12000, scoped, tag = 'internal scratch']
  %s0 = inlined_call_operand.vmem [shape: f32[98], index: 0, kind: input, shape index: {}]
  %s1 = inlined_call_operand.vmem [shape: f32[32,2], index: 1, kind: input, shape index: {}]
  %s2 = inlined_call_operand.vmem [shape: f32[1,2], index: 2, kind: input, shape index: {}]
  %s3 = inlined_call_operand.vmem [shape: f32[2,32], index: 3, kind: input, shape index: {}]
  %s4 = inlined_call_operand.vmem [shape: f32[1,32], index: 4, kind: input, shape index: {}]
  %s5 = inlined_call_operand.vmem [shape: f32[7,256], index: 5, kind: input, shape index: {}]
  %s6 = inlined_call_operand.hbm [shape: f32[2,32,256], index: 6, kind: input, shape index: {}]
  %s7 = inlined_call_operand.hbm [shape: f32[2,32,256], index: 7, kind: output, shape index: {}]
  %s8 = sld [smem:[#allocation0]]
  $region69: #{tpu_custom_call.1} parent=0
    _
  %s10 = ssub.s32 1, %s8
  %s11 = scalar_select 0, %s10, %s8
  $region1: #{tpu_custom_call.1} parent=0
    #allocation2 [shape = 'u8[512]{0}', space=smem, size = 0x200, scoped, tag = 'input window, operand 0, single buffered']
    #allocation3 [shape = 's32[2]{0}', space=sflag, size = 0x8, scoped, tag = 'scoped memory for tpu_custom_call.1']
    #allocation4 [shape = 's32[2]{0}', space=sflag, size = 0x8, scoped, tag = 'scoped memory for tpu_custom_call.1']
    #allocation5 [shape = 's32[2]{0}', space=sflag, size = 0x8, scoped, tag = 'scoped memory for tpu_custom_call.1']
    #allocation6 [shape = 'u8[65536]{0}', space=vmem, size = 0x10000, scoped, tag = 'input window, operand 6']
    #allocation7 [shape = 'u8[65536]{0}', space=vmem, size = 0x10000, scoped, tag = 'output window, operand 0']
    %12 = vsyncpa [#allocation5], 0
    %13 = vsyncpa [#allocation3], 0
    %s14 = scalar_lea.sflag [#allocation3], 1
    %15 = vsyncpa %s14, 0
    %16 = vsyncpa [#allocation4], 0
    %s17 = scalar_lea.sflag [#allocation4], 1
    %18 = vsyncpa %s17, 0
    loop: start=0, step=1, limit=4
    $region2: #{tpu_custom_call.1} parent=1 // loop_pre_header
      _
    $region3: #{tpu_custom_call.1} parent=1 // loop_header
      %s20 = sphi 0, %s24
      %p21 = scmp.ge.s32.totalorder %s20, 4
      %s28 = sphi 0, %s28
      %s30 = sphi 0, %s28
      %s31 = sphi 0, %s30
      %s45 = sphi 0, %s31
      %s49 = sphi 0, %s49
      %s51 = sphi 0, %s49
      %s52 = sphi 0, %s51
      %s66 = sphi 0, %s52
      %s70 = sphi 0, %s70
      %s72 = sphi 0, %s70
      %s73 = sphi 0, %s72
      %s87 = sphi 0, %s73
      %s91 = sphi 0, %s91
      %s93 = sphi 0, %s91
      %s94 = sphi 0, %s93
      %s108 = sphi 0, %s94
      %s112 = sphi 0, %s112
      %s114 = sphi 0, %s112
      %s115 = sphi 0, %s114
      %s129 = sphi 0, %s115
      %s133 = sphi 0, %s133
      %s135 = sphi 0, %s133
      %s136 = sphi 0, %s135
      %s150 = sphi 0, %s136
      %s156 = sphi 0, %s158
      %s159 = sphi 0, %s156
      %s160 = sphi 0, %s159
      %s176 = sphi 0, %s160
      %s182 = sphi 0, %s184
      %s185 = sphi 0, %s182
      %s186 = sphi 0, %s185
      %s202 = sphi 0, %s186
    $region4: #{tpu_custom_call.1} parent=1 // loop_header_branch
      %23 = sbr.rel (%p21) target = $region8
    $region5: #{tpu_custom_call.1} parent=1 // loop_body
      %s25 = ssub.s32 %s20, 1
      %s26 = ssub.s32 %s20, 2
      %s27 = sadd.s32 %s20, 1
      %s29 = sadd.s32 %s28, 1
      %p32 = scmp.eq.s32.totalorder %s20, 1
      %p33 = scmp.ne.s32.totalorder %s28, %s30
      %p34 = scmp.eq.s32.totalorder %s20, 0
      %p35 = por %p33, %p34
      %p36 = scmp.ne.s32.totalorder %s28, %s30
      %p37 = scmp.eq.s32.totalorder %s25, 1
      %p38 = por %p36, %p37
      %p39 = scmp.ne.s32.totalorder %s30, %s31
      %p40 = scmp.eq.s32.totalorder %s25, 0
      %p41 = por %p39, %p40
      %p42 = scmp.ne.s32.totalorder %s30, %s31
      %p43 = scmp.eq.s32.totalorder %s26, 1
      %p44 = por %p42, %p43
      %p46 = scmp.ne.s32.totalorder %s31, %s45
      %p47 = scmp.eq.s32.totalorder %s26, 0
      %p48 = por %p46, %p47
      %s50 = sadd.s32 %s49, 1
      %p53 = scmp.eq.s32.totalorder %s20, 1
      %p54 = scmp.ne.s32.totalorder %s49, %s51
      %p55 = scmp.eq.s32.totalorder %s20, 0
      %p56 = por %p54, %p55
      %p57 = scmp.ne.s32.totalorder %s49, %s51
      %p58 = scmp.eq.s32.totalorder %s25, 1
      %p59 = por %p57, %p58
      %p60 = scmp.ne.s32.totalorder %s51, %s52
      %p61 = scmp.eq.s32.totalorder %s25, 0
      %p62 = por %p60, %p61
      %p63 = scmp.ne.s32.totalorder %s51, %s52
      %p64 = scmp.eq.s32.totalorder %s26, 1
      %p65 = por %p63, %p64
      %p67 = scmp.ne.s32.totalorder %s52, %s66
      %p68 = scmp.eq.s32.totalorder %s26, 0
      %p69 = por %p67, %p68
      %s71 = sadd.s32 %s70, 1
      %p74 = scmp.eq.s32.totalorder %s20, 1
      %p75 = scmp.ne.s32.totalorder %s70, %s72
      %p76 = scmp.eq.s32.totalorder %s20, 0
      %p77 = por %p75, %p76
      %p78 = scmp.ne.s32.totalorder %s70, %s72
      %p79 = scmp.eq.s32.totalorder %s25, 1
      %p80 = por %p78, %p79
      %p81 = scmp.ne.s32.totalorder %s72, %s73
      %p82 = scmp.eq.s32.totalorder %s25, 0
      %p83 = por %p81, %p82
      %p84 = scmp.ne.s32.totalorder %s72, %s73
      %p85 = scmp.eq.s32.totalorder %s26, 1
      %p86 = por %p84, %p85
      %p88 = scmp.ne.s32.totalorder %s73, %s87
      %p89 = scmp.eq.s32.totalorder %s26, 0
      %p90 = por %p88, %p89
      %s92 = sadd.s32 %s91, 1
      %p95 = scmp.eq.s32.totalorder %s20, 1
      %p96 = scmp.ne.s32.totalorder %s91, %s93
      %p97 = scmp.eq.s32.totalorder %s20, 0
      %p98 = por %p96, %p97
      %p99 = scmp.ne.s32.totalorder %s91, %s93
      %p100 = scmp.eq.s32.totalorder %s25, 1
      %p101 = por %p99, %p100
      %p102 = scmp.ne.s32.totalorder %s93, %s94
      %p103 = scmp.eq.s32.totalorder %s25, 0
      %p104 = por %p102, %p103
      %p105 = scmp.ne.s32.totalorder %s93, %s94
      %p106 = scmp.eq.s32.totalorder %s26, 1
      %p107 = por %p105, %p106
      %p109 = scmp.ne.s32.totalorder %s94, %s108
      %p110 = scmp.eq.s32.totalorder %s26, 0
      %p111 = por %p109, %p110
      %s113 = sadd.s32 %s112, 1
      %p116 = scmp.eq.s32.totalorder %s20, 1
      %p117 = scmp.ne.s32.totalorder %s112, %s114
      %p118 = scmp.eq.s32.totalorder %s20, 0
      %p119 = por %p117, %p118
      %p120 = scmp.ne.s32.totalorder %s112, %s114
      %p121 = scmp.eq.s32.totalorder %s25, 1
      %p122 = por %p120, %p121
      %p123 = scmp.ne.s32.totalorder %s114, %s115
      %p124 = scmp.eq.s32.totalorder %s25, 0
      %p125 = por %p123, %p124
      %p126 = scmp.ne.s32.totalorder %s114, %s115
      %p127 = scmp.eq.s32.totalorder %s26, 1
      %p128 = por %p126, %p127
      %p130 = scmp.ne.s32.totalorder %s115, %s129
      %p131 = scmp.eq.s32.totalorder %s26, 0
      %p132 = por %p130, %p131
      %s134 = sadd.s32 %s133, 1
      %p137 = scmp.eq.s32.totalorder %s20, 1
      %p138 = scmp.ne.s32.totalorder %s133, %s135
      %p139 = scmp.eq.s32.totalorder %s20, 0
      %p140 = por %p138, %p139
      %p141 = scmp.ne.s32.totalorder %s133, %s135
      %p142 = scmp.eq.s32.totalorder %s25, 1
      %p143 = por %p141, %p142
      %p144 = scmp.ne.s32.totalorder %s135, %s136
      %p145 = scmp.eq.s32.totalorder %s25, 0
      %p146 = por %p144, %p145
      %p147 = scmp.ne.s32.totalorder %s135, %s136
      %p148 = scmp.eq.s32.totalorder %s26, 1
      %p149 = por %p147, %p148
      %p151 = scmp.ne.s32.totalorder %s136, %s150
      %p152 = scmp.eq.s32.totalorder %s26, 0
      %p153 = por %p151, %p152
      %s154 = ssub.s32 %s20, %s27
      %p155 = scmp.eq.s32.totalorder %s154, 0
      %s157 = sadd.s32 %s156, 1
      %s158 = scalar_select %p155, %s156, %s157
      %p161 = pneg %p155
      %p162 = scmp.eq.s32.totalorder %s20, 1
      %p163 = por %p161, %p162
      %p164 = scmp.ne.s32.totalorder %s156, %s159
      %p165 = scmp.eq.s32.totalorder %s20, 0
      %p166 = por %p164, %p165
      %p167 = scmp.ne.s32.totalorder %s156, %s159
      %p168 = scmp.eq.s32.totalorder %s25, 1
      %p169 = por %p167, %p168
      %p170 = scmp.ne.s32.totalorder %s159, %s160
      %p171 = scmp.eq.s32.totalorder %s25, 0
      %p172 = por %p170, %p171
      %p173 = scmp.ne.s32.totalorder %s159, %s160
      %p174 = scmp.eq.s32.totalorder %s26, 1
      %p175 = por %p173, %p174
      %p177 = scmp.ne.s32.totalorder %s160, %s176
      %p178 = scmp.eq.s32.totalorder %s26, 0
      %p179 = por %p177, %p178
      %s180 = ssub.s32 %s20, %s27
      %p181 = scmp.eq.s32.totalorder %s180, 0
      %s183 = sadd.s32 %s182, 1
      %s184 = scalar_select %p181, %s182, %s183
      %p187 = pneg %p181
      %p188 = scmp.eq.s32.totalorder %s20, 1
      %p189 = por %p187, %p188
      %p190 = scmp.ne.s32.totalorder %s182, %s185
      %p191 = scmp.eq.s32.totalorder %s20, 0
      %p192 = por %p190, %p191
      %p193 = scmp.ne.s32.totalorder %s182, %s185
      %p194 = scmp.eq.s32.totalorder %s25, 1
      %p195 = por %p193, %p194
      %p196 = scmp.ne.s32.totalorder %s185, %s186
      %p197 = scmp.eq.s32.totalorder %s25, 0
      %p198 = por %p196, %p197
      %p199 = scmp.ne.s32.totalorder %s185, %s186
      %p200 = scmp.eq.s32.totalorder %s26, 1
      %p201 = por %p199, %p200
      %p203 = scmp.ne.s32.totalorder %s186, %s202
      %p204 = scmp.eq.s32.totalorder %s26, 0
      %p205 = por %p203, %p204
      %p206 = scmp.le.s32.totalorder 1, %s20
      %p207 = scmp.lt.s32.totalorder %s20, 3
      %p208 = pnand %p206, %p207
      %p209 = pneg %p208
      // Predicated region
      $region9: #{tpu_custom_call.1} parent=5 // pred_check
        _
      $region10: #{tpu_custom_call.1} parent=5 // pred_check_branch
        %211 = sbr.rel (%p208) target = $region12
      $region11: #{tpu_custom_call.1} parent=5 // pred_region
        %s212 = ssub.s32 %s20, 1
        // Predicated region
        $region13: #{tpu_custom_call.1} parent=11 // pred_check
          %p213 = pneg %p41
        $region14: #{tpu_custom_call.1} parent=11 // pred_check_branch
          %215 = sbr.rel (%p213) target = $region16
        $region15: #{tpu_custom_call.1} parent=11 // pred_region
          %s217 = ssub.s32 16, 16
          %218 = vsyncadd [#allocation5], %s217
          %s220 = sshll.u32 %s0, 4
          %s221 = int_to_ptr.vmem [resolvable:$true] %s220
          %223 = dma.vmem_to_smem %s221, 16, [#allocation2], [#allocation5]
        $region16: #{tpu_custom_call.1} parent=11 // pred_fallthru
          _
        // Predicated region
        $region17: #{tpu_custom_call.1} parent=11 // pred_check
          %p224 = pneg %p62
        $region18: #{tpu_custom_call.1} parent=11 // pred_check_branch
          %226 = sbr.rel (%p224) target = $region20
        $region19: #{tpu_custom_call.1} parent=11 // pred_region
          _
        $region20: #{tpu_custom_call.1} parent=11 // pred_fallthru
          _
        // Predicated region
        $region21: #{tpu_custom_call.1} parent=11 // pred_check
          %p227 = pneg %p83
        $region22: #{tpu_custom_call.1} parent=11 // pred_check_branch
          %229 = sbr.rel (%p227) target = $region24
        $region23: #{tpu_custom_call.1} parent=11 // pred_region
          _
        $region24: #{tpu_custom_call.1} parent=11 // pred_fallthru
          _
        // Predicated region
        $region25: #{tpu_custom_call.1} parent=11 // pred_check
          %p230 = pneg %p104
        $region26: #{tpu_custom_call.1} parent=11 // pred_check_branch
          %232 = sbr.rel (%p230) target = $region28
        $region27: #{tpu_custom_call.1} parent=11 // pred_region
          _
        $region28: #{tpu_custom_call.1} parent=11 // pred_fallthru
          _
        // Predicated region
        $region29: #{tpu_custom_call.1} parent=11 // pred_check
          %p233 = pneg %p125
        $region30: #{tpu_custom_call.1} parent=11 // pred_check_branch
          %235 = sbr.rel (%p233) target = $region32
        $region31: #{tpu_custom_call.1} parent=11 // pred_region
          _
        $region32: #{tpu_custom_call.1} parent=11 // pred_fallthru
          _
        // Predicated region
        $region33: #{tpu_custom_call.1} parent=11 // pred_check
          %p236 = pneg %p146
        $region34: #{tpu_custom_call.1} parent=11 // pred_check_branch
          %238 = sbr.rel (%p236) target = $region36
        $region35: #{tpu_custom_call.1} parent=11 // pred_region
          _
        $region36: #{tpu_custom_call.1} parent=11 // pred_fallthru
          _
      $region12: #{tpu_custom_call.1} parent=5 // pred_fallthru
        _
      %p239 = scmp.lt.s32.totalorder %s20, 2
      // Predicated region
      $region37: #{tpu_custom_call.1} parent=5 // pred_check
        %p240 = pneg %p239
      $region38: #{tpu_custom_call.1} parent=5 // pred_check_branch
        %242 = sbr.rel (%p240) target = $region40
      $region39: #{tpu_custom_call.1} parent=5 // pred_region
        // Predicated region
        $region41: #{tpu_custom_call.1} parent=39 // pred_check
          %p243 = pneg %p166
        $region42: #{tpu_custom_call.1} parent=39 // pred_check_branch
          %245 = sbr.rel (%p243) target = $region44
        $region43: #{tpu_custom_call.1} parent=39 // pred_region
          %s246 = sand.u32 %s156, 1
          %s247 = scalar_lea.sflag [#allocation3], %s246
          %s248 = sand.u32 %s156, 1
          %s249 = smul.addr %s248, 64
          %s250 = scalar_lea.vmem [#allocation6], %s249
          %s252 = ssub.s32 1024, 1024
          %253 = vsyncadd %s247, %s252
          %s254 = smul.addr %s20, 8
          %s255 = smul.addr %s254, 128
          %s256 = scalar_lea.hbm %s6, %s255
          %s257 = sshll.u32 %s250, 4
          %s258 = int_to_ptr.vmem [resolvable:$true] %s257
          %263 = dma.hbm_to_vmem [thread:$0]  %s256, 1024, %s258, %s247, 256, 256, 16
        $region44: #{tpu_custom_call.1} parent=39 // pred_fallthru
          _
      $region40: #{tpu_custom_call.1} parent=5 // pred_fallthru
        _
      %p264 = scmp.le.s32.totalorder 1, %s20
      %p265 = scmp.lt.s32.totalorder %s20, 3
      %p266 = pnand %p264, %p265
      %p267 = pneg %p266
      // Predicated region
      $region45: #{tpu_custom_call.1} parent=5 // pred_check
        _
      $region46: #{tpu_custom_call.1} parent=5 // pred_check_branch
        %269 = sbr.rel (%p266) target = $region48
      $region47: #{tpu_custom_call.1} parent=5 // pred_region
        %s270 = ssub.s32 %s20, 1
        // Predicated region
        $region49: #{tpu_custom_call.1} parent=47 // pred_check
          %p271 = pneg %p41
        $region50: #{tpu_custom_call.1} parent=47 // pred_check_branch
          %273 = sbr.rel (%p271) target = $region52
        $region51: #{tpu_custom_call.1} parent=47 // pred_region
          %274 = dma.done [#allocation5], 16
        $region52: #{tpu_custom_call.1} parent=47 // pred_fallthru
          _
        %s275 = sand.u32 %s159, 1
        %s276 = scalar_lea.sflag [#allocation3], %s275
        %s277 = sand.u32 %s159, 1
        %s278 = smul.addr %s277, 64
        %s279 = scalar_lea.vmem [#allocation6], %s278
        // Predicated region
        $region53: #{tpu_custom_call.1} parent=47 // pred_check
          %p280 = pneg %p172
        $region54: #{tpu_custom_call.1} parent=47 // pred_check_branch
          %282 = sbr.rel (%p280) target = $region56
        $region55: #{tpu_custom_call.1} parent=47 // pred_region
          %283 = dma.done %s276, 1024
        $region56: #{tpu_custom_call.1} parent=47 // pred_fallthru
          _
        %284 = sfence
        %p285 = pneg %p41
        %p286 = pneg %p38
        %p287 = pneg %p62
        %p288 = pneg %p59
        %p289 = pneg %p83
        %p290 = pneg %p80
        %p291 = pneg %p104
        %p292 = pneg %p101
        %p293 = pneg %p125
        %p294 = pneg %p122
        %p295 = pneg %p146
        %p296 = pneg %p143
        %s297 = sand.u32 %s159, 1
        %s298 = scalar_lea.sflag [#allocation3], %s297
        %s299 = sand.u32 %s159, 1
        %s300 = smul.addr %s299, 64
        %s301 = scalar_lea.vmem [#allocation6], %s300
        %p302 = pneg %p172
        %p303 = pneg %p169
        %p304 = pneg %p198
        %p305 = pneg %p195
        %s306 = sand.u32 %s185, 1
        %s307 = scalar_lea.sflag [#allocation4], %s306
        %s308 = sand.u32 %s185, 1
        %s309 = smul.addr %s308, 64
        %s310 = scalar_lea.vmem [#allocation7], %s309
        %v311 = vld [vmem:[%s279] sm:$0xff]
        %v312 = vld [vmem:[%s279 + $0x8] sm:$0xff]
        %v313 = vld [vmem:[%s279 + $0x10] sm:$0xff]
        %v314 = vld [vmem:[%s279 + $0x18] sm:$0xff]
        %v315 = vld [vmem:[%s279 + $0x20] sm:$0xff]
        %v316 = vld [vmem:[%s279 + $0x28] sm:$0xff]
        %v317 = vld [vmem:[%s279 + $0x30] sm:$0xff]
        %v318 = vld [vmem:[%s279 + $0x38] sm:$0xff]
        %v319 = vadd.f32 %v311, %v312
        %320 = vadd.xlane.f32.xlu0 %v319
        %v321 = vpop.xlane.xlu0 %320
        %v322 = vadd.f32 %v313, %v314
        %323 = vadd.xlane.f32.xlu0 %v322
        %v324 = vpop.xlane.xlu0 %323
        %v325 = vadd.f32 %v315, %v316
        %326 = vadd.xlane.f32.xlu0 %v325
        %v327 = vpop.xlane.xlu0 %326
        %v328 = vadd.f32 %v317, %v318
        %329 = vadd.xlane.f32.xlu0 %v328
        %v330 = vpop.xlane.xlu0 %329
        %v331 = vmul.f32 %v321, 0.00390625
        %v332 = vmul.f32 %v324, 0.00390625
        %v333 = vmul.f32 %v327, 0.00390625
        %v334 = vmul.f32 %v330, 0.00390625
        %v335 = vmax.f32 %v311, %v312
        %336 = vmax.xlane.f32.xlu0 %v335
        %v337 = vpop.xlane.xlu0 %336
        %v338 = vmax.f32 %v313, %v314
        %339 = vmax.xlane.f32.xlu0 %v338
        %v340 = vpop.xlane.xlu0 %339
        %v341 = vmax.f32 %v315, %v316
        %342 = vmax.xlane.f32.xlu0 %v341
        %v343 = vpop.xlane.xlu0 %342
        %v344 = vmax.f32 %v317, %v318
        %345 = vmax.xlane.f32.xlu0 %v344
        %v346 = vpop.xlane.xlu0 %345
        %v351 = vlaneseq
        %v352 = vand.u32 %v351, 127
        %v353 = vlaneseq
        %v354 = vshrl.u32 %v353, 7
        %v355 = vsub.s32 %v352, %v354
        %v356 = vrot.slane %v331, %v355
        %v357 = vadd.s32 %v352, 4294967288
        %v358 = vlaneseq
        %v359 = vshrl.u32 %v358, 7
        %v360 = vsub.s32 %v357, %v359
        %v361 = vrot.slane %v332, %v360
        %vm362 = vcmask 130112
        %v363 = vsel %vm362, %v361, %v356
        %v364 = vadd.s32 %v352, 4294967280
        %v365 = vlaneseq
        %v366 = vshrl.u32 %v365, 7
        %v367 = vsub.s32 %v364, %v366
        %v368 = vrot.slane %v333, %v367
        %vm369 = vcmask 195712
        %v370 = vsel %vm369, %v368, %v363
        %v371 = vadd.s32 %v352, 4294967272
        %v372 = vlaneseq
        %v373 = vshrl.u32 %v372, 7
        %v374 = vsub.s32 %v371, %v373
        %v375 = vrot.slane %v334, %v374
        %vm376 = vcmask 261312
        %v377 = vsel %vm376, %v375, %v370
        %v383 = vlaneseq
        %v384 = vshrl.u32 %v383, 7
        %v385 = vsub.s32 %v352, %v384
        %v386 = vrot.slane %v337, %v385
        %v387 = vlaneseq
        %v388 = vshrl.u32 %v387, 7
        %v389 = vsub.s32 %v357, %v388
        %v390 = vrot.slane %v340, %v389
        %v391 = vsel %vm362, %v390, %v386
        %v392 = vlaneseq
        %v393 = vshrl.u32 %v392, 7
        %v394 = vsub.s32 %v364, %v393
        %v395 = vrot.slane %v343, %v394
        %v396 = vsel %vm369, %v395, %v391
        %v397 = vlaneseq
        %v398 = vshrl.u32 %v397, 7
        %v399 = vsub.s32 %v371, %v398
        %v400 = vrot.slane %v346, %v399
        %v401 = vsel %vm376, %v400, %v396
        %vm403 = vcmask 1040384
        %v404 = vsel %vm403, %v377, %v401
        %v405 = vld [vmem:[%s1] sm:$0xff]
        %v406 = vld [vmem:[%s1 + $0x8] sm:$0xff]
        %v407 = vld [vmem:[%s1 + $0x10] sm:$0xff]
        %v408 = vld [vmem:[%s1 + $0x18] sm:$0xff]
        %v409 = vld [vmem:[%s2] sm:$0x1]
        %v410 = vld [vmem:[%s3] sm:$0x3]
        %v411 = vld [vmem:[%s4] sm:$0x1]
        %v413 = vlaneseq
        %v414 = vshrl.u32 %v413, 7
        %v415 = vsub.s32 0, %v414
        %v416 = vrot.slane %v409, %v415
        %vm418 = vcmask 261120
        %v420 = vsel %vm418, %v404, 0
        %422 = vmatprep.subr.mxu0 0.0
        %423 = vmatpush1.msra.mxu0 0.0
        %424 = vmatprep.subr.mxu0 0.0
        %425 = vmatpush1.msra.mxu0 0.0
        %426 = vmatprep.subr.mxu0 0.0
        %427 = vmatpush1.msra.mxu0 0.0
        %428 = vmatprep.subr.mxu0 0.0
        %429 = vmatpush1.msra.mxu0 0.0
        %430 = vmatprep.subr.mxu0 0.0
        %431 = vmatpush1.msra.mxu0 0.0
        %432 = vmatprep.subr.mxu0 0.0
        %433 = vmatpush1.msra.mxu0 0.0
        %434 = vmatprep.subr.mxu0 0.0
        %435 = vmatpush1.msra.mxu0 0.0
        %436 = vmatprep.subr.mxu0 0.0
        %437 = vmatpush1.msra.mxu0 0.0
        %438 = vmatprep.subr.mxu0 0.0
        %439 = vmatpush1.msra.mxu0 0.0
        %440 = vmatprep.subr.mxu0 0.0
        %441 = vmatpush1.msra.mxu0 0.0
        %442 = vmatprep.subr.mxu0 0.0
        %443 = vmatpush1.msra.mxu0 0.0
        %444 = vmatprep.subr.mxu0 0.0
        %445 = vmatpush1.msra.mxu0 0.0
        %446 = vmatprep.subr.mxu0 0.0
        %v447 = vand.u32 %v408, 4294901760
        %448 = vmatpush1.msra.mxu0 %v447
        %449 = vmatprep.subr.mxu0 0.0
        %v450 = vand.u32 %v407, 4294901760
        %451 = vmatpush1.msra.mxu0 %v450
        %452 = vmatprep.subr.mxu0 0.0
        %v453 = vand.u32 %v406, 4294901760
        %454 = vmatpush1.msra.mxu0 %v453
        %455 = vmatprep.subr.mxu0 0.0
        %v456 = vand.u32 %v405, 4294901760
        %457 = vmatpush1.msra.mxu0 %v456
        %458 = vmatprep.subr.mxu0 0.0
        %459 = vmatpush2.msra.mxu0 0.0
        %460 = vmatprep.subr.mxu0 0.0
        %461 = vmatpush2.msra.mxu0 0.0
        %462 = vmatprep.subr.mxu0 0.0
        %463 = vmatpush2.msra.mxu0 0.0
        %464 = vmatprep.subr.mxu0 0.0
        %465 = vmatpush2.msra.mxu0 0.0
        %466 = vmatprep.subr.mxu0 0.0
        %467 = vmatpush2.msra.mxu0 0.0
        %468 = vmatprep.subr.mxu0 0.0
        %469 = vmatpush2.msra.mxu0 0.0
        %470 = vmatprep.subr.mxu0 0.0
        %471 = vmatpush2.msra.mxu0 0.0
        %472 = vmatprep.subr.mxu0 0.0
        %473 = vmatpush2.msra.mxu0 0.0
        %474 = vmatprep.subr.mxu0 0.0
        %475 = vmatpush2.msra.mxu0 0.0
        %476 = vmatprep.subr.mxu0 0.0
        %477 = vmatpush2.msra.mxu0 0.0
        %478 = vmatprep.subr.mxu0 0.0
        %479 = vmatpush2.msra.mxu0 0.0
        %480 = vmatprep.subr.mxu0 0.0
        %481 = vmatpush2.msra.mxu0 0.0
        %482 = vmatprep.subr.mxu0 0.0
        %483 = vmatpush2.msra.mxu0 0.0
        %484 = vmatprep.subr.mxu0 0.0
        %485 = vmatpush2.msra.mxu0 0.0
        %486 = vmatprep.subr.mxu0 0.0
        %487 = vmatpush2.msra.mxu0 0.0
        %488 = vmatprep.subr.mxu0 0.0
        %489 = vmatpush2.msra.mxu0 0.0
        %490 = vmatprep.mubr.f32.mxu0 0.0
        %v491 = vand.u32 %v420, 4294901760
        %v492 = vsub.f32 %v420, %v491
        %v493 = vand.u32 %v492, 4294901760
        %v494 = vsub.f32 %v492, %v493
        %v495 = vand.u32 %v494, 4294901760
        %496 = vmatmul.mubr.f32.gmra.mxu0 %v495
        %v497 = vpop.f32.mrf.mxu0
        %v498 = vadd.f32 %v416, %v497
        %v499 = vpop.f32.mrf.mxu0
        %500 = vdwg.mxu0
        %501 = vmatprep.subr.mxu0 0.0
        %502 = vmatpush1.msra.mxu0 0.0
        %503 = vmatprep.subr.mxu0 0.0
        %504 = vmatpush1.msra.mxu0 0.0
        %505 = vmatprep.subr.mxu0 0.0
        %506 = vmatpush1.msra.mxu0 0.0
        %507 = vmatprep.subr.mxu0 0.0
        %508 = vmatpush1.msra.mxu0 0.0
        %509 = vmatprep.subr.mxu0 0.0
        %510 = vmatpush1.msra.mxu0 0.0
        %511 = vmatprep.subr.mxu0 0.0
        %512 = vmatpush1.msra.mxu0 0.0
        %513 = vmatprep.subr.mxu0 0.0
        %514 = vmatpush1.msra.mxu0 0.0
        %515 = vmatprep.subr.mxu0 0.0
        %516 = vmatpush1.msra.mxu0 0.0
        %517 = vmatprep.subr.mxu0 0.0
        %518 = vmatpush1.msra.mxu0 0.0
        %519 = vmatprep.subr.mxu0 0.0
        %520 = vmatpush1.msra.mxu0 0.0
        %521 = vmatprep.subr.mxu0 0.0
        %522 = vmatpush1.msra.mxu0 0.0
        %523 = vmatprep.subr.mxu0 0.0
        %524 = vmatpush1.msra.mxu0 0.0
        %525 = vmatprep.subr.mxu0 0.0
        %v526 = vand.u32 %v408, 4294901760
        %v527 = vsub.f32 %v408, %v526
        %v528 = vand.u32 %v527, 4294901760
        %v529 = vsub.f32 %v527, %v528
        %v530 = vand.u32 %v529, 4294901760
        %531 = vmatpush1.msra.mxu0 %v530
        %532 = vmatprep.subr.mxu0 0.0
        %v533 = vand.u32 %v407, 4294901760
        %v534 = vsub.f32 %v407, %v533
        %v535 = vand.u32 %v534, 4294901760
        %v536 = vsub.f32 %v534, %v535
        %v537 = vand.u32 %v536, 4294901760
        %538 = vmatpush1.msra.mxu0 %v537
        %539 = vmatprep.subr.mxu0 0.0
        %v540 = vand.u32 %v406, 4294901760
        %v541 = vsub.f32 %v406, %v540
        %v542 = vand.u32 %v541, 4294901760
        %v543 = vsub.f32 %v541, %v542
        %v544 = vand.u32 %v543, 4294901760
        %545 = vmatpush1.msra.mxu0 %v544
        %546 = vmatprep.subr.mxu0 0.0
        %v547 = vand.u32 %v405, 4294901760
        %v548 = vsub.f32 %v405, %v547
        %v549 = vand.u32 %v548, 4294901760
        %v550 = vsub.f32 %v548, %v549
        %v551 = vand.u32 %v550, 4294901760
        %552 = vmatpush1.msra.mxu0 %v551
        %553 = vmatprep.subr.mxu0 0.0
        %554 = vmatpush2.msra.mxu0 0.0
        %555 = vmatprep.subr.mxu0 0.0
        %556 = vmatpush2.msra.mxu0 0.0
        %557 = vmatprep.subr.mxu0 0.0
        %558 = vmatpush2.msra.mxu0 0.0
        %559 = vmatprep.subr.mxu0 0.0
        %560 = vmatpush2.msra.mxu0 0.0
        %561 = vmatprep.subr.mxu0 0.0
        %562 = vmatpush2.msra.mxu0 0.0
        %563 = vmatprep.subr.mxu0 0.0
        %564 = vmatpush2.msra.mxu0 0.0
        %565 = vmatprep.subr.mxu0 0.0
        %566 = vmatpush2.msra.mxu0 0.0
        %567 = vmatprep.subr.mxu0 0.0
        %568 = vmatpush2.msra.mxu0 0.0
        %569 = vmatprep.subr.mxu0 0.0
        %570 = vmatpush2.msra.mxu0 0.0
        %571 = vmatprep.subr.mxu0 0.0
        %572 = vmatpush2.msra.mxu0 0.0
        %573 = vmatprep.subr.mxu0 0.0
        %574 = vmatpush2.msra.mxu0 0.0
        %575 = vmatprep.subr.mxu0 0.0
        %576 = vmatpush2.msra.mxu0 0.0
        %577 = vmatprep.subr.mxu0 0.0
        %578 = vmatpush2.msra.mxu0 0.0
        %579 = vmatprep.subr.mxu0 0.0
        %580 = vmatpush2.msra.mxu0 0.0
        %581 = vmatprep.subr.mxu0 0.0
        %582 = vmatpush2.msra.mxu0 0.0
        %583 = vmatprep.subr.mxu0 0.0
        %584 = vmatpush2.msra.mxu0 0.0
        %585 = vmatprep.mubr.f32.mxu0 0.0
        %v586 = vand.u32 %v420, 4294901760
        %587 = vmatmul.mubr.f32.gmra.mxu0 %v586
        %v588 = vpop.f32.mrf.mxu0
        %v589 = vadd.f32 %v498, %v588
        %v590 = vpop.f32.mrf.mxu0
        %591 = vdwg.mxu0
        %592 = vmatprep.subr.mxu0 0.0
        %593 = vmatpush1.msra.mxu0 0.0
        %594 = vmatprep.subr.mxu0 0.0
        %595 = vmatpush1.msra.mxu0 0.0
        %596 = vmatprep.subr.mxu0 0.0
        %597 = vmatpush1.msra.mxu0 0.0
        %598 = vmatprep.subr.mxu0 0.0
        %599 = vmatpush1.msra.mxu0 0.0
        %600 = vmatprep.subr.mxu0 0.0
        %601 = vmatpush1.msra.mxu0 0.0
        %602 = vmatprep.subr.mxu0 0.0
        %603 = vmatpush1.msra.mxu0 0.0
        %604 = vmatprep.subr.mxu0 0.0
        %605 = vmatpush1.msra.mxu0 0.0
        %606 = vmatprep.subr.mxu0 0.0
        %607 = vmatpush1.msra.mxu0 0.0
        %608 = vmatprep.subr.mxu0 0.0
        %609 = vmatpush1.msra.mxu0 0.0
        %610 = vmatprep.subr.mxu0 0.0
        %611 = vmatpush1.msra.mxu0 0.0
        %612 = vmatprep.subr.mxu0 0.0
        %613 = vmatpush1.msra.mxu0 0.0
        %614 = vmatprep.subr.mxu0 0.0
        %615 = vmatpush1.msra.mxu0 0.0
        %616 = vmatprep.subr.mxu0 0.0
        %v617 = vand.u32 %v408, 4294901760
        %v618 = vsub.f32 %v408, %v617
        %619 = vmatpush1.msra.mxu0 %v618
        %620 = vmatprep.subr.mxu0 0.0
        %v621 = vand.u32 %v407, 4294901760
        %v622 = vsub.f32 %v407, %v621
        %623 = vmatpush1.msra.mxu0 %v622
        %624 = vmatprep.subr.mxu0 0.0
        %v625 = vand.u32 %v406, 4294901760
        %v626 = vsub.f32 %v406, %v625
        %627 = vmatpush1.msra.mxu0 %v626
        %628 = vmatprep.subr.mxu0 0.0
        %v629 = vand.u32 %v405, 4294901760
        %v630 = vsub.f32 %v405, %v629
        %631 = vmatpush1.msra.mxu0 %v630
        %632 = vmatprep.subr.mxu0 0.0
        %633 = vmatpush2.msra.mxu0 0.0
        %634 = vmatprep.subr.mxu0 0.0
        %635 = vmatpush2.msra.mxu0 0.0
        %636 = vmatprep.subr.mxu0 0.0
        %637 = vmatpush2.msra.mxu0 0.0
        %638 = vmatprep.subr.mxu0 0.0
        %639 = vmatpush2.msra.mxu0 0.0
        %640 = vmatprep.subr.mxu0 0.0
        %641 = vmatpush2.msra.mxu0 0.0
        %642 = vmatprep.subr.mxu0 0.0
        %643 = vmatpush2.msra.mxu0 0.0
        %644 = vmatprep.subr.mxu0 0.0
        %645 = vmatpush2.msra.mxu0 0.0
        %646 = vmatprep.subr.mxu0 0.0
        %647 = vmatpush2.msra.mxu0 0.0
        %648 = vmatprep.subr.mxu0 0.0
        %649 = vmatpush2.msra.mxu0 0.0
        %650 = vmatprep.subr.mxu0 0.0
        %651 = vmatpush2.msra.mxu0 0.0
        %652 = vmatprep.subr.mxu0 0.0
        %653 = vmatpush2.msra.mxu0 0.0
        %654 = vmatprep.subr.mxu0 0.0
        %655 = vmatpush2.msra.mxu0 0.0
        %656 = vmatprep.subr.mxu0 0.0
        %657 = vmatpush2.msra.mxu0 0.0
        %658 = vmatprep.subr.mxu0 0.0
        %659 = vmatpush2.msra.mxu0 0.0
        %660 = vmatprep.subr.mxu0 0.0
        %661 = vmatpush2.msra.mxu0 0.0
        %662 = vmatprep.subr.mxu0 0.0
        %663 = vmatpush2.msra.mxu0 0.0
        %664 = vmatprep.mubr.f32.mxu0 0.0
        %v665 = vand.u32 %v420, 4294901760
        %v666 = vsub.f32 %v420, %v665
        %667 = vmatmul.mubr.f32.gmra.mxu0 %v666
        %v668 = vpop.f32.mrf.mxu0
        %v669 = vadd.f32 %v589, %v668
        %v670 = vpop.f32.mrf.mxu0
        %671 = vdwg.mxu0
        %672 = vmatprep.subr.mxu0 0.0
        %673 = vmatpush1.msra.mxu0 0.0
        %674 = vmatprep.subr.mxu0 0.0
        %675 = vmatpush1.msra.mxu0 0.0
        %676 = vmatprep.subr.mxu0 0.0
        %677 = vmatpush1.msra.mxu0 0.0
        %678 = vmatprep.subr.mxu0 0.0
        %679 = vmatpush1.msra.mxu0 0.0
        %680 = vmatprep.subr.mxu0 0.0
        %681 = vmatpush1.msra.mxu0 0.0
        %682 = vmatprep.subr.mxu0 0.0
        %683 = vmatpush1.msra.mxu0 0.0
        %684 = vmatprep.subr.mxu0 0.0
        %685 = vmatpush1.msra.mxu0 0.0
        %686 = vmatprep.subr.mxu0 0.0
        %687 = vmatpush1.msra.mxu0 0.0
        %688 = vmatprep.subr.mxu0 0.0
        %689 = vmatpush1.msra.mxu0 0.0
        %690 = vmatprep.subr.mxu0 0.0
        %691 = vmatpush1.msra.mxu0 0.0
        %692 = vmatprep.subr.mxu0 0.0
        %693 = vmatpush1.msra.mxu0 0.0
        %694 = vmatprep.subr.mxu0 0.0
        %695 = vmatpush1.msra.mxu0 0.0
        %696 = vmatprep.subr.mxu0 0.0
        %v697 = vand.u32 %v408, 4294901760
        %698 = vmatpush1.msra.mxu0 %v697
        %699 = vmatprep.subr.mxu0 0.0
        %v700 = vand.u32 %v407, 4294901760
        %701 = vmatpush1.msra.mxu0 %v700
        %702 = vmatprep.subr.mxu0 0.0
        %v703 = vand.u32 %v406, 4294901760
        %704 = vmatpush1.msra.mxu0 %v703
        %705 = vmatprep.subr.mxu0 0.0
        %v706 = vand.u32 %v405, 4294901760
        %707 = vmatpush1.msra.mxu0 %v706
        %708 = vmatprep.subr.mxu0 0.0
        %709 = vmatpush2.msra.mxu0 0.0
        %710 = vmatprep.subr.mxu0 0.0
        %711 = vmatpush2.msra.mxu0 0.0
        %712 = vmatprep.subr.mxu0 0.0
        %713 = vmatpush2.msra.mxu0 0.0
        %714 = vmatprep.subr.mxu0 0.0
        %715 = vmatpush2.msra.mxu0 0.0
        %716 = vmatprep.subr.mxu0 0.0
        %717 = vmatpush2.msra.mxu0 0.0
        %718 = vmatprep.subr.mxu0 0.0
        %719 = vmatpush2.msra.mxu0 0.0
        %720 = vmatprep.subr.mxu0 0.0
        %721 = vmatpush2.msra.mxu0 0.0
        %722 = vmatprep.subr.mxu0 0.0
        %723 = vmatpush2.msra.mxu0 0.0
        %724 = vmatprep.subr.mxu0 0.0
        %725 = vmatpush2.msra.mxu0 0.0
        %726 = vmatprep.subr.mxu0 0.0
        %727 = vmatpush2.msra.mxu0 0.0
        %728 = vmatprep.subr.mxu0 0.0
        %729 = vmatpush2.msra.mxu0 0.0
        %730 = vmatprep.subr.mxu0 0.0
        %731 = vmatpush2.msra.mxu0 0.0
        %732 = vmatprep.subr.mxu0 0.0
        %733 = vmatpush2.msra.mxu0 0.0
        %734 = vmatprep.subr.mxu0 0.0
        %735 = vmatpush2.msra.mxu0 0.0
        %736 = vmatprep.subr.mxu0 0.0
        %737 = vmatpush2.msra.mxu0 0.0
        %738 = vmatprep.subr.mxu0 0.0
        %739 = vmatpush2.msra.mxu0 0.0
        %740 = vmatprep.mubr.f32.mxu0 0.0
        %v741 = vand.u32 %v420, 4294901760
        %v742 = vsub.f32 %v420, %v741
        %v743 = vand.u32 %v742, 4294901760
        %744 = vmatmul.mubr.f32.gmra.mxu0 %v743
        %v745 = vpop.f32.mrf.mxu0
        %v746 = vadd.f32 %v669, %v745
        %v747 = vpop.f32.mrf.mxu0
        %748 = vdwg.mxu0
        %749 = vmatprep.subr.mxu0 0.0
        %750 = vmatpush1.msra.mxu0 0.0
        %751 = vmatprep.subr.mxu0 0.0
        %752 = vmatpush1.msra.mxu0 0.0
        %753 = vmatprep.subr.mxu0 0.0
        %754 = vmatpush1.msra.mxu0 0.0
        %755 = vmatprep.subr.mxu0 0.0
        %756 = vmatpush1.msra.mxu0 0.0
        %757 = vmatprep.subr.mxu0 0.0
        %758 = vmatpush1.msra.mxu0 0.0
        %759 = vmatprep.subr.mxu0 0.0
        %760 = vmatpush1.msra.mxu0 0.0
        %761 = vmatprep.subr.mxu0 0.0
        %762 = vmatpush1.msra.mxu0 0.0
        %763 = vmatprep.subr.mxu0 0.0
        %764 = vmatpush1.msra.mxu0 0.0
        %765 = vmatprep.subr.mxu0 0.0
        %766 = vmatpush1.msra.mxu0 0.0
        %767 = vmatprep.subr.mxu0 0.0
        %768 = vmatpush1.msra.mxu0 0.0
        %769 = vmatprep.subr.mxu0 0.0
        %770 = vmatpush1.msra.mxu0 0.0
        %771 = vmatprep.subr.mxu0 0.0
        %772 = vmatpush1.msra.mxu0 0.0
        %773 = vmatprep.subr.mxu0 0.0
        %v774 = vand.u32 %v408, 4294901760
        %v775 = vsub.f32 %v408, %v774
        %v776 = vand.u32 %v775, 4294901760
        %777 = vmatpush1.msra.mxu0 %v776
        %778 = vmatprep.subr.mxu0 0.0
        %v779 = vand.u32 %v407, 4294901760
        %v780 = vsub.f32 %v407, %v779
        %v781 = vand.u32 %v780, 4294901760
        %782 = vmatpush1.msra.mxu0 %v781
        %783 = vmatprep.subr.mxu0 0.0
        %v784 = vand.u32 %v406, 4294901760
        %v785 = vsub.f32 %v406, %v784
        %v786 = vand.u32 %v785, 4294901760
        %787 = vmatpush1.msra.mxu0 %v786
        %788 = vmatprep.subr.mxu0 0.0
        %v789 = vand.u32 %v405, 4294901760
        %v790 = vsub.f32 %v405, %v789
        %v791 = vand.u32 %v790, 4294901760
        %792 = vmatpush1.msra.mxu0 %v791
        %793 = vmatprep.subr.mxu0 0.0
        %794 = vmatpush2.msra.mxu0 0.0
        %795 = vmatprep.subr.mxu0 0.0
        %796 = vmatpush2.msra.mxu0 0.0
        %797 = vmatprep.subr.mxu0 0.0
        %798 = vmatpush2.msra.mxu0 0.0
        %799 = vmatprep.subr.mxu0 0.0
        %800 = vmatpush2.msra.mxu0 0.0
        %801 = vmatprep.subr.mxu0 0.0
        %802 = vmatpush2.msra.mxu0 0.0
        %803 = vmatprep.subr.mxu0 0.0
        %804 = vmatpush2.msra.mxu0 0.0
        %805 = vmatprep.subr.mxu0 0.0
        %806 = vmatpush2.msra.mxu0 0.0
        %807 = vmatprep.subr.mxu0 0.0
        %808 = vmatpush2.msra.mxu0 0.0
        %809 = vmatprep.subr.mxu0 0.0
        %810 = vmatpush2.msra.mxu0 0.0
        %811 = vmatprep.subr.mxu0 0.0
        %812 = vmatpush2.msra.mxu0 0.0
        %813 = vmatprep.subr.mxu0 0.0
        %814 = vmatpush2.msra.mxu0 0.0
        %815 = vmatprep.subr.mxu0 0.0
        %816 = vmatpush2.msra.mxu0 0.0
        %817 = vmatprep.subr.mxu0 0.0
        %818 = vmatpush2.msra.mxu0 0.0
        %819 = vmatprep.subr.mxu0 0.0
        %820 = vmatpush2.msra.mxu0 0.0
        %821 = vmatprep.subr.mxu0 0.0
        %822 = vmatpush2.msra.mxu0 0.0
        %823 = vmatprep.subr.mxu0 0.0
        %824 = vmatpush2.msra.mxu0 0.0
        %825 = vmatprep.mubr.f32.mxu0 0.0
        %v826 = vand.u32 %v420, 4294901760
        %827 = vmatmul.mubr.f32.gmra.mxu0 %v826
        %v828 = vpop.f32.mrf.mxu0
        %v829 = vadd.f32 %v746, %v828
        %v830 = vpop.f32.mrf.mxu0
        %831 = vdwg.mxu0
        %832 = vmatprep.subr.mxu0 0.0
        %833 = vmatpush1.msra.mxu0 0.0
        %834 = vmatprep.subr.mxu0 0.0
        %835 = vmatpush1.msra.mxu0 0.0
        %836 = vmatprep.subr.mxu0 0.0
        %837 = vmatpush1.msra.mxu0 0.0
        %838 = vmatprep.subr.mxu0 0.0
        %839 = vmatpush1.msra.mxu0 0.0
        %840 = vmatprep.subr.mxu0 0.0
        %841 = vmatpush1.msra.mxu0 0.0
        %842 = vmatprep.subr.mxu0 0.0
        %843 = vmatpush1.msra.mxu0 0.0
        %844 = vmatprep.subr.mxu0 0.0
        %845 = vmatpush1.msra.mxu0 0.0
        %846 = vmatprep.subr.mxu0 0.0
        %847 = vmatpush1.msra.mxu0 0.0
        %848 = vmatprep.subr.mxu0 0.0
        %849 = vmatpush1.msra.mxu0 0.0
        %850 = vmatprep.subr.mxu0 0.0
        %851 = vmatpush1.msra.mxu0 0.0
        %852 = vmatprep.subr.mxu0 0.0
        %853 = vmatpush1.msra.mxu0 0.0
        %854 = vmatprep.subr.mxu0 0.0
        %855 = vmatpush1.msra.mxu0 0.0
        %856 = vmatprep.subr.mxu0 0.0
        %v857 = vand.u32 %v408, 4294901760
        %858 = vmatpush1.msra.mxu0 %v857
        %859 = vmatprep.subr.mxu0 0.0
        %v860 = vand.u32 %v407, 4294901760
        %861 = vmatpush1.msra.mxu0 %v860
        %862 = vmatprep.subr.mxu0 0.0
        %v863 = vand.u32 %v406, 4294901760
        %864 = vmatpush1.msra.mxu0 %v863
        %865 = vmatprep.subr.mxu0 0.0
        %v866 = vand.u32 %v405, 4294901760
        %867 = vmatpush1.msra.mxu0 %v866
        %868 = vmatprep.subr.mxu0 0.0
        %869 = vmatpush2.msra.mxu0 0.0
        %870 = vmatprep.subr.mxu0 0.0
        %871 = vmatpush2.msra.mxu0 0.0
        %872 = vmatprep.subr.mxu0 0.0
        %873 = vmatpush2.msra.mxu0 0.0
        %874 = vmatprep.subr.mxu0 0.0
        %875 = vmatpush2.msra.mxu0 0.0
        %876 = vmatprep.subr.mxu0 0.0
        %877 = vmatpush2.msra.mxu0 0.0
        %878 = vmatprep.subr.mxu0 0.0
        %879 = vmatpush2.msra.mxu0 0.0
        %880 = vmatprep.subr.mxu0 0.0
        %881 = vmatpush2.msra.mxu0 0.0
        %882 = vmatprep.subr.mxu0 0.0
        %883 = vmatpush2.msra.mxu0 0.0
        %884 = vmatprep.subr.mxu0 0.0
        %885 = vmatpush2.msra.mxu0 0.0
        %886 = vmatprep.subr.mxu0 0.0
        %887 = vmatpush2.msra.mxu0 0.0
        %888 = vmatprep.subr.mxu0 0.0
        %889 = vmatpush2.msra.mxu0 0.0
        %890 = vmatprep.subr.mxu0 0.0
        %891 = vmatpush2.msra.mxu0 0.0
        %892 = vmatprep.subr.mxu0 0.0
        %893 = vmatpush2.msra.mxu0 0.0
        %894 = vmatprep.subr.mxu0 0.0
        %895 = vmatpush2.msra.mxu0 0.0
        %896 = vmatprep.subr.mxu0 0.0
        %897 = vmatpush2.msra.mxu0 0.0
        %898 = vmatprep.subr.mxu0 0.0
        %899 = vmatpush2.msra.mxu0 0.0
        %900 = vmatprep.mubr.f32.mxu0 0.0
        %v901 = vand.u32 %v420, 4294901760
        %902 = vmatmul.mubr.f32.gmra.mxu0 %v901
        %v903 = vpop.f32.mrf.mxu0
        %v904 = vadd.f32 %v829, %v903
        %v905 = vpop.f32.mrf.mxu0
        %906 = vdwg.mxu0
        %v907 = vmax.f32 %v904, 0.0
        %v909 = vlaneseq
        %v910 = vshrl.u32 %v909, 7
        %v911 = vsub.s32 0, %v910
        %v912 = vrot.slane %v411, %v911
        %vm914 = vcmask 15360
        %v916 = vsel %vm914, %v907, 0
        %vm918 = vcmask 1041408
        %v920 = vsel %vm918, %v410, 0
        %922 = vmatprep.subr.mxu0 0.0
        %923 = vmatpush1.msra.mxu0 0.0
        %924 = vmatprep.subr.mxu0 0.0
        %925 = vmatpush1.msra.mxu0 0.0
        %926 = vmatprep.subr.mxu0 0.0
        %927 = vmatpush1.msra.mxu0 0.0
        %928 = vmatprep.subr.mxu0 0.0
        %929 = vmatpush1.msra.mxu0 0.0
        %930 = vmatprep.subr.mxu0 0.0
        %931 = vmatpush1.msra.mxu0 0.0
        %932 = vmatprep.subr.mxu0 0.0
        %933 = vmatpush1.msra.mxu0 0.0
        %934 = vmatprep.subr.mxu0 0.0
        %935 = vmatpush1.msra.mxu0 0.0
        %936 = vmatprep.subr.mxu0 0.0
        %937 = vmatpush1.msra.mxu0 0.0
        %938 = vmatprep.subr.mxu0 0.0
        %939 = vmatpush1.msra.mxu0 0.0
        %940 = vmatprep.subr.mxu0 0.0
        %941 = vmatpush1.msra.mxu0 0.0
        %942 = vmatprep.subr.mxu0 0.0
        %943 = vmatpush1.msra.mxu0 0.0
        %944 = vmatprep.subr.mxu0 0.0
        %945 = vmatpush1.msra.mxu0 0.0
        %946 = vmatprep.subr.mxu0 0.0
        %947 = vmatpush1.msra.mxu0 0.0
        %948 = vmatprep.subr.mxu0 0.0
        %949 = vmatpush1.msra.mxu0 0.0
        %950 = vmatprep.subr.mxu0 0.0
        %951 = vmatpush1.msra.mxu0 0.0
        %952 = vmatprep.subr.mxu0 0.0
        %v953 = vand.u32 %v920, 4294901760
        %954 = vmatpush1.msra.mxu0 %v953
        %955 = vmatprep.subr.mxu0 0.0
        %956 = vmatpush2.msra.mxu0 0.0
        %957 = vmatprep.subr.mxu0 0.0
        %958 = vmatpush2.msra.mxu0 0.0
        %959 = vmatprep.subr.mxu0 0.0
        %960 = vmatpush2.msra.mxu0 0.0
        %961 = vmatprep.subr.mxu0 0.0
        %962 = vmatpush2.msra.mxu0 0.0
        %963 = vmatprep.subr.mxu0 0.0
        %964 = vmatpush2.msra.mxu0 0.0
        %965 = vmatprep.subr.mxu0 0.0
        %966 = vmatpush2.msra.mxu0 0.0
        %967 = vmatprep.subr.mxu0 0.0
        %968 = vmatpush2.msra.mxu0 0.0
        %969 = vmatprep.subr.mxu0 0.0
        %970 = vmatpush2.msra.mxu0 0.0
        %971 = vmatprep.subr.mxu0 0.0
        %972 = vmatpush2.msra.mxu0 0.0
        %973 = vmatprep.subr.mxu0 0.0
        %974 = vmatpush2.msra.mxu0 0.0
        %975 = vmatprep.subr.mxu0 0.0
        %976 = vmatpush2.msra.mxu0 0.0
        %977 = vmatprep.subr.mxu0 0.0
        %978 = vmatpush2.msra.mxu0 0.0
        %979 = vmatprep.subr.mxu0 0.0
        %980 = vmatpush2.msra.mxu0 0.0
        %981 = vmatprep.subr.mxu0 0.0
        %982 = vmatpush2.msra.mxu0 0.0
        %983 = vmatprep.subr.mxu0 0.0
        %984 = vmatpush2.msra.mxu0 0.0
        %985 = vmatprep.subr.mxu0 0.0
        %986 = vmatpush2.msra.mxu0 0.0
        %987 = vmatprep.mubr.f32.mxu0 0.0
        %v988 = vand.u32 %v916, 4294901760
        %v989 = vsub.f32 %v916, %v988
        %v990 = vand.u32 %v989, 4294901760
        %v991 = vsub.f32 %v989, %v990
        %v992 = vand.u32 %v991, 4294901760
        %993 = vmatmul.mubr.f32.gmra.mxu0 %v992
        %v994 = vpop.f32.mrf.mxu0
        %v995 = vadd.f32 %v912, %v994
        %v996 = vpop.f32.mrf.mxu0
        %997 = vdwg.mxu0
        %998 = vmatprep.subr.mxu0 0.0
        %999 = vmatpush1.msra.mxu0 0.0
        %1000 = vmatprep.subr.mxu0 0.0
        %1001 = vmatpush1.msra.mxu0 0.0
        %1002 = vmatprep.subr.mxu0 0.0
        %1003 = vmatpush1.msra.mxu0 0.0
        %1004 = vmatprep.subr.mxu0 0.0
        %1005 = vmatpush1.msra.mxu0 0.0
        %1006 = vmatprep.subr.mxu0 0.0
        %1007 = vmatpush1.msra.mxu0 0.0
        %1008 = vmatprep.subr.mxu0 0.0
        %1009 = vmatpush1.msra.mxu0 0.0
        %1010 = vmatprep.subr.mxu0 0.0
        %1011 = vmatpush1.msra.mxu0 0.0
        %1012 = vmatprep.subr.mxu0 0.0
        %1013 = vmatpush1.msra.mxu0 0.0
        %1014 = vmatprep.subr.mxu0 0.0
        %1015 = vmatpush1.msra.mxu0 0.0
        %1016 = vmatprep.subr.mxu0 0.0
        %1017 = vmatpush1.msra.mxu0 0.0
        %1018 = vmatprep.subr.mxu0 0.0
        %1019 = vmatpush1.msra.mxu0 0.0
        %1020 = vmatprep.subr.mxu0 0.0
        %1021 = vmatpush1.msra.mxu0 0.0
        %1022 = vmatprep.subr.mxu0 0.0
        %1023 = vmatpush1.msra.mxu0 0.0
        %1024 = vmatprep.subr.mxu0 0.0
        %1025 = vmatpush1.msra.mxu0 0.0
        %1026 = vmatprep.subr.mxu0 0.0
        %1027 = vmatpush1.msra.mxu0 0.0
        %1028 = vmatprep.subr.mxu0 0.0
        %v1029 = vand.u32 %v920, 4294901760
        %v1030 = vsub.f32 %v920, %v1029
        %v1031 = vand.u32 %v1030, 4294901760
        %v1032 = vsub.f32 %v1030, %v1031
        %v1033 = vand.u32 %v1032, 4294901760
        %1034 = vmatpush1.msra.mxu0 %v1033
        %1035 = vmatprep.subr.mxu0 0.0
        %1036 = vmatpush2.msra.mxu0 0.0
        %1037 = vmatprep.subr.mxu0 0.0
        %1038 = vmatpush2.msra.mxu0 0.0
        %1039 = vmatprep.subr.mxu0 0.0
        %1040 = vmatpush2.msra.mxu0 0.0
        %1041 = vmatprep.subr.mxu0 0.0
        %1042 = vmatpush2.msra.mxu0 0.0
        %1043 = vmatprep.subr.mxu0 0.0
        %1044 = vmatpush2.msra.mxu0 0.0
        %1045 = vmatprep.subr.mxu0 0.0
        %1046 = vmatpush2.msra.mxu0 0.0
        %1047 = vmatprep.subr.mxu0 0.0
        %1048 = vmatpush2.msra.mxu0 0.0
        %1049 = vmatprep.subr.mxu0 0.0
        %1050 = vmatpush2.msra.mxu0 0.0
        %1051 = vmatprep.subr.mxu0 0.0
        %1052 = vmatpush2.msra.mxu0 0.0
        %1053 = vmatprep.subr.mxu0 0.0
        %1054 = vmatpush2.msra.mxu0 0.0
        %1055 = vmatprep.subr.mxu0 0.0
        %1056 = vmatpush2.msra.mxu0 0.0
        %1057 = vmatprep.subr.mxu0 0.0
        %1058 = vmatpush2.msra.mxu0 0.0
        %1059 = vmatprep.subr.mxu0 0.0
        %1060 = vmatpush2.msra.mxu0 0.0
        %1061 = vmatprep.subr.mxu0 0.0
        %1062 = vmatpush2.msra.mxu0 0.0
        %1063 = vmatprep.subr.mxu0 0.0
        %1064 = vmatpush2.msra.mxu0 0.0
        %1065 = vmatprep.subr.mxu0 0.0
        %1066 = vmatpush2.msra.mxu0 0.0
        %1067 = vmatprep.mubr.f32.mxu0 0.0
        %v1068 = vand.u32 %v916, 4294901760
        %1069 = vmatmul.mubr.f32.gmra.mxu0 %v1068
        %v1070 = vpop.f32.mrf.mxu0
        %v1071 = vadd.f32 %v995, %v1070
        %v1072 = vpop.f32.mrf.mxu0
        %1073 = vdwg.mxu0
        %1074 = vmatprep.subr.mxu0 0.0
        %1075 = vmatpush1.msra.mxu0 0.0
        %1076 = vmatprep.subr.mxu0 0.0
        %1077 = vmatpush1.msra.mxu0 0.0
        %1078 = vmatprep.subr.mxu0 0.0
        %1079 = vmatpush1.msra.mxu0 0.0
        %1080 = vmatprep.subr.mxu0 0.0
        %1081 = vmatpush1.msra.mxu0 0.0
        %1082 = vmatprep.subr.mxu0 0.0
        %1083 = vmatpush1.msra.mxu0 0.0
        %1084 = vmatprep.subr.mxu0 0.0
        %1085 = vmatpush1.msra.mxu0 0.0
        %1086 = vmatprep.subr.mxu0 0.0
        %1087 = vmatpush1.msra.mxu0 0.0
        %1088 = vmatprep.subr.mxu0 0.0
        %1089 = vmatpush1.msra.mxu0 0.0
        %1090 = vmatprep.subr.mxu0 0.0
        %1091 = vmatpush1.msra.mxu0 0.0
        %1092 = vmatprep.subr.mxu0 0.0
        %1093 = vmatpush1.msra.mxu0 0.0
        %1094 = vmatprep.subr.mxu0 0.0
        %1095 = vmatpush1.msra.mxu0 0.0
        %1096 = vmatprep.subr.mxu0 0.0
        %1097 = vmatpush1.msra.mxu0 0.0
        %1098 = vmatprep.subr.mxu0 0.0
        %1099 = vmatpush1.msra.mxu0 0.0
        %1100 = vmatprep.subr.mxu0 0.0
        %1101 = vmatpush1.msra.mxu0 0.0
        %1102 = vmatprep.subr.mxu0 0.0
        %1103 = vmatpush1.msra.mxu0 0.0
        %1104 = vmatprep.subr.mxu0 0.0
        %v1105 = vand.u32 %v920, 4294901760
        %v1106 = vsub.f32 %v920, %v1105
        %1107 = vmatpush1.msra.mxu0 %v1106
        %1108 = vmatprep.subr.mxu0 0.0
        %1109 = vmatpush2.msra.mxu0 0.0
        %1110 = vmatprep.subr.mxu0 0.0
        %1111 = vmatpush2.msra.mxu0 0.0
        %1112 = vmatprep.subr.mxu0 0.0
        %1113 = vmatpush2.msra.mxu0 0.0
        %1114 = vmatprep.subr.mxu0 0.0
        %1115 = vmatpush2.msra.mxu0 0.0
        %1116 = vmatprep.subr.mxu0 0.0
        %1117 = vmatpush2.msra.mxu0 0.0
        %1118 = vmatprep.subr.mxu0 0.0
        %1119 = vmatpush2.msra.mxu0 0.0
        %1120 = vmatprep.subr.mxu0 0.0
        %1121 = vmatpush2.msra.mxu0 0.0
        %1122 = vmatprep.subr.mxu0 0.0
        %1123 = vmatpush2.msra.mxu0 0.0
        %1124 = vmatprep.subr.mxu0 0.0
        %1125 = vmatpush2.msra.mxu0 0.0
        %1126 = vmatprep.subr.mxu0 0.0
        %1127 = vmatpush2.msra.mxu0 0.0
        %1128 = vmatprep.subr.mxu0 0.0
        %1129 = vmatpush2.msra.mxu0 0.0
        %1130 = vmatprep.subr.mxu0 0.0
        %1131 = vmatpush2.msra.mxu0 0.0
        %1132 = vmatprep.subr.mxu0 0.0
        %1133 = vmatpush2.msra.mxu0 0.0
        %1134 = vmatprep.subr.mxu0 0.0
        %1135 = vmatpush2.msra.mxu0 0.0
        %1136 = vmatprep.subr.mxu0 0.0
        %1137 = vmatpush2.msra.mxu0 0.0
        %1138 = vmatprep.subr.mxu0 0.0
        %1139 = vmatpush2.msra.mxu0 0.0
        %1140 = vmatprep.mubr.f32.mxu0 0.0
        %v1141 = vand.u32 %v916, 4294901760
        %v1142 = vsub.f32 %v916, %v1141
        %1143 = vmatmul.mubr.f32.gmra.mxu0 %v1142
        %v1144 = vpop.f32.mrf.mxu0
        %v1145 = vadd.f32 %v1071, %v1144
        %v1146 = vpop.f32.mrf.mxu0
        %1147 = vdwg.mxu0
        %1148 = vmatprep.subr.mxu0 0.0
        %1149 = vmatpush1.msra.mxu0 0.0
        %1150 = vmatprep.subr.mxu0 0.0
        %1151 = vmatpush1.msra.mxu0 0.0
        %1152 = vmatprep.subr.mxu0 0.0
        %1153 = vmatpush1.msra.mxu0 0.0
        %1154 = vmatprep.subr.mxu0 0.0
        %1155 = vmatpush1.msra.mxu0 0.0
        %1156 = vmatprep.subr.mxu0 0.0
        %1157 = vmatpush1.msra.mxu0 0.0
        %1158 = vmatprep.subr.mxu0 0.0
        %1159 = vmatpush1.msra.mxu0 0.0
        %1160 = vmatprep.subr.mxu0 0.0
        %1161 = vmatpush1.msra.mxu0 0.0
        %1162 = vmatprep.subr.mxu0 0.0
        %1163 = vmatpush1.msra.mxu0 0.0
        %1164 = vmatprep.subr.mxu0 0.0
        %1165 = vmatpush1.msra.mxu0 0.0
        %1166 = vmatprep.subr.mxu0 0.0
        %1167 = vmatpush1.msra.mxu0 0.0
        %1168 = vmatprep.subr.mxu0 0.0
        %1169 = vmatpush1.msra.mxu0 0.0
        %1170 = vmatprep.subr.mxu0 0.0
        %1171 = vmatpush1.msra.mxu0 0.0
        %1172 = vmatprep.subr.mxu0 0.0
        %1173 = vmatpush1.msra.mxu0 0.0
        %1174 = vmatprep.subr.mxu0 0.0
        %1175 = vmatpush1.msra.mxu0 0.0
        %1176 = vmatprep.subr.mxu0 0.0
        %1177 = vmatpush1.msra.mxu0 0.0
        %1178 = vmatprep.subr.mxu0 0.0
        %v1179 = vand.u32 %v920, 4294901760
        %1180 = vmatpush1.msra.mxu0 %v1179
        %1181 = vmatprep.subr.mxu0 0.0
        %1182 = vmatpush2.msra.mxu0 0.0
        %1183 = vmatprep.subr.mxu0 0.0
        %1184 = vmatpush2.msra.mxu0 0.0
        %1185 = vmatprep.subr.mxu0 0.0
        %1186 = vmatpush2.msra.mxu0 0.0
        %1187 = vmatprep.subr.mxu0 0.0
        %1188 = vmatpush2.msra.mxu0 0.0
        %1189 = vmatprep.subr.mxu0 0.0
        %1190 = vmatpush2.msra.mxu0 0.0
        %1191 = vmatprep.subr.mxu0 0.0
        %1192 = vmatpush2.msra.mxu0 0.0
        %1193 = vmatprep.subr.mxu0 0.0
        %1194 = vmatpush2.msra.mxu0 0.0
        %1195 = vmatprep.subr.mxu0 0.0
        %1196 = vmatpush2.msra.mxu0 0.0
        %1197 = vmatprep.subr.mxu0 0.0
        %1198 = vmatpush2.msra.mxu0 0.0
        %1199 = vmatprep.subr.mxu0 0.0
        %1200 = vmatpush2.msra.mxu0 0.0
        %1201 = vmatprep.subr.mxu0 0.0
        %1202 = vmatpush2.msra.mxu0 0.0
        %1203 = vmatprep.subr.mxu0 0.0
        %1204 = vmatpush2.msra.mxu0 0.0
        %1205 = vmatprep.subr.mxu0 0.0
        %1206 = vmatpush2.msra.mxu0 0.0
        %1207 = vmatprep.subr.mxu0 0.0
        %1208 = vmatpush2.msra.mxu0 0.0
        %1209 = vmatprep.subr.mxu0 0.0
        %1210 = vmatpush2.msra.mxu0 0.0
        %1211 = vmatprep.subr.mxu0 0.0
        %1212 = vmatpush2.msra.mxu0 0.0
        %1213 = vmatprep.mubr.f32.mxu0 0.0
        %v1214 = vand.u32 %v916, 4294901760
        %v1215 = vsub.f32 %v916, %v1214
        %v1216 = vand.u32 %v1215, 4294901760
        %1217 = vmatmul.mubr.f32.gmra.mxu0 %v1216
        %v1218 = vpop.f32.mrf.mxu0
        %v1219 = vadd.f32 %v1145, %v1218
        %v1220 = vpop.f32.mrf.mxu0
        %1221 = vdwg.mxu0
        %1222 = vmatprep.subr.mxu0 0.0
        %1223 = vmatpush1.msra.mxu0 0.0
        %1224 = vmatprep.subr.mxu0 0.0
        %1225 = vmatpush1.msra.mxu0 0.0
        %1226 = vmatprep.subr.mxu0 0.0
        %1227 = vmatpush1.msra.mxu0 0.0
        %1228 = vmatprep.subr.mxu0 0.0
        %1229 = vmatpush1.msra.mxu0 0.0
        %1230 = vmatprep.subr.mxu0 0.0
        %1231 = vmatpush1.msra.mxu0 0.0
        %1232 = vmatprep.subr.mxu0 0.0
        %1233 = vmatpush1.msra.mxu0 0.0
        %1234 = vmatprep.subr.mxu0 0.0
        %1235 = vmatpush1.msra.mxu0 0.0
        %1236 = vmatprep.subr.mxu0 0.0
        %1237 = vmatpush1.msra.mxu0 0.0
        %1238 = vmatprep.subr.mxu0 0.0
        %1239 = vmatpush1.msra.mxu0 0.0
        %1240 = vmatprep.subr.mxu0 0.0
        %1241 = vmatpush1.msra.mxu0 0.0
        %1242 = vmatprep.subr.mxu0 0.0
        %1243 = vmatpush1.msra.mxu0 0.0
        %1244 = vmatprep.subr.mxu0 0.0
        %1245 = vmatpush1.msra.mxu0 0.0
        %1246 = vmatprep.subr.mxu0 0.0
        %1247 = vmatpush1.msra.mxu0 0.0
        %1248 = vmatprep.subr.mxu0 0.0
        %1249 = vmatpush1.msra.mxu0 0.0
        %1250 = vmatprep.subr.mxu0 0.0
        %1251 = vmatpush1.msra.mxu0 0.0
        %1252 = vmatprep.subr.mxu0 0.0
        %v1253 = vand.u32 %v920, 4294901760
        %v1254 = vsub.f32 %v920, %v1253
        %v1255 = vand.u32 %v1254, 4294901760
        %1256 = vmatpush1.msra.mxu0 %v1255
        %1257 = vmatprep.subr.mxu0 0.0
        %1258 = vmatpush2.msra.mxu0 0.0
        %1259 = vmatprep.subr.mxu0 0.0
        %1260 = vmatpush2.msra.mxu0 0.0
        %1261 = vmatprep.subr.mxu0 0.0
        %1262 = vmatpush2.msra.mxu0 0.0
        %1263 = vmatprep.subr.mxu0 0.0
        %1264 = vmatpush2.msra.mxu0 0.0
        %1265 = vmatprep.subr.mxu0 0.0
        %1266 = vmatpush2.msra.mxu0 0.0
        %1267 = vmatprep.subr.mxu0 0.0
        %1268 = vmatpush2.msra.mxu0 0.0
        %1269 = vmatprep.subr.mxu0 0.0
        %1270 = vmatpush2.msra.mxu0 0.0
        %1271 = vmatprep.subr.mxu0 0.0
        %1272 = vmatpush2.msra.mxu0 0.0
        %1273 = vmatprep.subr.mxu0 0.0
        %1274 = vmatpush2.msra.mxu0 0.0
        %1275 = vmatprep.subr.mxu0 0.0
        %1276 = vmatpush2.msra.mxu0 0.0
        %1277 = vmatprep.subr.mxu0 0.0
        %1278 = vmatpush2.msra.mxu0 0.0
        %1279 = vmatprep.subr.mxu0 0.0
        %1280 = vmatpush2.msra.mxu0 0.0
        %1281 = vmatprep.subr.mxu0 0.0
        %1282 = vmatpush2.msra.mxu0 0.0
        %1283 = vmatprep.subr.mxu0 0.0
        %1284 = vmatpush2.msra.mxu0 0.0
        %1285 = vmatprep.subr.mxu0 0.0
        %1286 = vmatpush2.msra.mxu0 0.0
        %1287 = vmatprep.subr.mxu0 0.0
        %1288 = vmatpush2.msra.mxu0 0.0
        %1289 = vmatprep.mubr.f32.mxu0 0.0
        %v1290 = vand.u32 %v916, 4294901760
        %1291 = vmatmul.mubr.f32.gmra.mxu0 %v1290
        %v1292 = vpop.f32.mrf.mxu0
        %v1293 = vadd.f32 %v1219, %v1292
        %v1294 = vpop.f32.mrf.mxu0
        %1295 = vdwg.mxu0
        %1296 = vmatprep.subr.mxu0 0.0
        %1297 = vmatpush1.msra.mxu0 0.0
        %1298 = vmatprep.subr.mxu0 0.0
        %1299 = vmatpush1.msra.mxu0 0.0
        %1300 = vmatprep.subr.mxu0 0.0
        %1301 = vmatpush1.msra.mxu0 0.0
        %1302 = vmatprep.subr.mxu0 0.0
        %1303 = vmatpush1.msra.mxu0 0.0
        %1304 = vmatprep.subr.mxu0 0.0
        %1305 = vmatpush1.msra.mxu0 0.0
        %1306 = vmatprep.subr.mxu0 0.0
        %1307 = vmatpush1.msra.mxu0 0.0
        %1308 = vmatprep.subr.mxu0 0.0
        %1309 = vmatpush1.msra.mxu0 0.0
        %1310 = vmatprep.subr.mxu0 0.0
        %1311 = vmatpush1.msra.mxu0 0.0
        %1312 = vmatprep.subr.mxu0 0.0
        %1313 = vmatpush1.msra.mxu0 0.0
        %1314 = vmatprep.subr.mxu0 0.0
        %1315 = vmatpush1.msra.mxu0 0.0
        %1316 = vmatprep.subr.mxu0 0.0
        %1317 = vmatpush1.msra.mxu0 0.0
        %1318 = vmatprep.subr.mxu0 0.0
        %1319 = vmatpush1.msra.mxu0 0.0
        %1320 = vmatprep.subr.mxu0 0.0
        %1321 = vmatpush1.msra.mxu0 0.0
        %1322 = vmatprep.subr.mxu0 0.0
        %1323 = vmatpush1.msra.mxu0 0.0
        %1324 = vmatprep.subr.mxu0 0.0
        %1325 = vmatpush1.msra.mxu0 0.0
        %1326 = vmatprep.subr.mxu0 0.0
        %v1327 = vand.u32 %v920, 4294901760
        %1328 = vmatpush1.msra.mxu0 %v1327
        %1329 = vmatprep.subr.mxu0 0.0
        %1330 = vmatpush2.msra.mxu0 0.0
        %1331 = vmatprep.subr.mxu0 0.0
        %1332 = vmatpush2.msra.mxu0 0.0
        %1333 = vmatprep.subr.mxu0 0.0
        %1334 = vmatpush2.msra.mxu0 0.0
        %1335 = vmatprep.subr.mxu0 0.0
        %1336 = vmatpush2.msra.mxu0 0.0
        %1337 = vmatprep.subr.mxu0 0.0
        %1338 = vmatpush2.msra.mxu0 0.0
        %1339 = vmatprep.subr.mxu0 0.0
        %1340 = vmatpush2.msra.mxu0 0.0
        %1341 = vmatprep.subr.mxu0 0.0
        %1342 = vmatpush2.msra.mxu0 0.0
        %1343 = vmatprep.subr.mxu0 0.0
        %1344 = vmatpush2.msra.mxu0 0.0
        %1345 = vmatprep.subr.mxu0 0.0
        %1346 = vmatpush2.msra.mxu0 0.0
        %1347 = vmatprep.subr.mxu0 0.0
        %1348 = vmatpush2.msra.mxu0 0.0
        %1349 = vmatprep.subr.mxu0 0.0
        %1350 = vmatpush2.msra.mxu0 0.0
        %1351 = vmatprep.subr.mxu0 0.0
        %1352 = vmatpush2.msra.mxu0 0.0
        %1353 = vmatprep.subr.mxu0 0.0
        %1354 = vmatpush2.msra.mxu0 0.0
        %1355 = vmatprep.subr.mxu0 0.0
        %1356 = vmatpush2.msra.mxu0 0.0
        %1357 = vmatprep.subr.mxu0 0.0
        %1358 = vmatpush2.msra.mxu0 0.0
        %1359 = vmatprep.subr.mxu0 0.0
        %1360 = vmatpush2.msra.mxu0 0.0
        %1361 = vmatprep.mubr.f32.mxu0 0.0
        %v1362 = vand.u32 %v916, 4294901760
        %1363 = vmatmul.mubr.f32.gmra.mxu0 %v1362
        %v1364 = vpop.f32.mrf.mxu0
        %v1365 = vadd.f32 %v1293, %v1364
        %v1366 = vpop.f32.mrf.mxu0
        %1367 = vdwg.mxu0
        %v1369 = vrot.slane %v1365, 1
        %v1371 = vadd.f32 %v1365, %v1369
        %v1372 = vxor.u32 %v1371, 2147483648
        %v1373 = vmul.f32 %v1372, 1.442695
        %v1374 = vpow.pop %v1373
        %v1375 = vadd.f32 %v1374, 1.0
        %v1376 = vrcp.pop %v1375
        %v1377 = vmul.f32 1.0, %v1376
        %v1378 = vlaneseq
        %v1379 = vshrl.u32 %v1378, 7
        %v1380 = vsub.s32 0, %v1379
        %v1381 = vrot.slane %v1377, %v1380
        %1383 = vbcast.lane.b32.xlu0 %v1381, 256
        %v1384 = vpop.permute.xlu0 %1383
        %s1386 = sor.u32 256, 8
        %1387 = vbcast.lane.b32.xlu0 %v1381, %s1386
        %v1388 = vpop.permute.xlu0 %1387
        %s1390 = sor.u32 256, 16
        %1391 = vbcast.lane.b32.xlu0 %v1381, %s1390
        %v1392 = vpop.permute.xlu0 %1391
        %s1394 = sor.u32 256, 24
        %1395 = vbcast.lane.b32.xlu0 %v1381, %s1394
        %v1396 = vpop.permute.xlu0 %1395
        %v1397 = vmul.f32 %v311, %v1384
        %v1398 = vmul.f32 %v312, %v1384
        %v1399 = vmul.f32 %v313, %v1388
        %v1400 = vmul.f32 %v314, %v1388
        %v1401 = vmul.f32 %v315, %v1392
        %v1402 = vmul.f32 %v316, %v1392
        %v1403 = vmul.f32 %v317, %v1396
        %v1404 = vmul.f32 %v318, %v1396
        %v1405 = vadd.f32 %v1397, %v1399
        %v1406 = vadd.f32 %v1405, %v1401
        %v1407 = vadd.f32 %v1406, %v1403
        %v1408 = vrot.slane %v1407, 4
        %v1409 = vadd.f32 %v1407, %v1408
        %v1410 = vrot.slane %v1409, 2
        %v1411 = vadd.f32 %v1409, %v1410
        %v1412 = vrot.slane %v1411, 1
        %v1413 = vadd.f32 %v1411, %v1412
        %v1414 = vadd.f32 %v1398, %v1400
        %v1415 = vadd.f32 %v1414, %v1402
        %v1416 = vadd.f32 %v1415, %v1404
        %v1417 = vrot.slane %v1416, 4
        %v1418 = vadd.f32 %v1416, %v1417
        %v1419 = vrot.slane %v1418, 2
        %v1420 = vadd.f32 %v1418, %v1419
        %v1421 = vrot.slane %v1420, 1
        %v1422 = vadd.f32 %v1420, %v1421
        %v1423 = vrcp.pop 32.0
        %v1424 = vmul.f32 %v1413, %v1423
        %v1425 = vmul.f32 %v1422, %v1423
        %v1426 = vmax.f32 %v1397, %v1401
        %v1427 = vmax.f32 %v1399, %v1403
        %v1428 = vmax.f32 %v1426, %v1427
        %v1429 = vrot.slane %v1428, 4
        %v1430 = vmax.f32 %v1428, %v1429
        %v1431 = vrot.slane %v1430, 2
        %v1432 = vmax.f32 %v1430, %v1431
        %v1433 = vrot.slane %v1432, 1
        %v1434 = vmax.f32 %v1432, %v1433
        %v1435 = vmax.f32 %v1398, %v1402
        %v1436 = vmax.f32 %v1400, %v1404
        %v1437 = vmax.f32 %v1435, %v1436
        %v1438 = vrot.slane %v1437, 4
        %v1439 = vmax.f32 %v1437, %v1438
        %v1440 = vrot.slane %v1439, 2
        %v1441 = vmax.f32 %v1439, %v1440
        %v1442 = vrot.slane %v1441, 1
        %v1443 = vmax.f32 %v1441, %v1442
        %1446 = vrot.lane.b32.xlu0 %v1424, 51
        %v1447 = vpop.permute.xlu0 %1446
        %1448 = vrot.lane.b32.xlu0 %v1425, 51
        %v1449 = vpop.permute.xlu0 %1448
        %vm1450 = vcmask 416768
        %v1451 = vsel %vm1450, %v1447, %v1449
        %v1455 = vsel %vm1450, 0.0, %v1447
        %v1456 = vsel %vm1450, %v1449, 0.0
        %1459 = vrot.lane.b32.xlu0 %v1434, 51
        %v1460 = vpop.permute.xlu0 %1459
        %1461 = vrot.lane.b32.xlu0 %v1443, 51
        %v1462 = vpop.permute.xlu0 %1461
        %v1463 = vsel %vm1450, %v1460, %v1462
        %v1467 = vsel %vm1450, 0.0, %v1460
        %v1468 = vsel %vm1450, %v1462, 0.0
        %v1469 = vld [vmem:[%s5] ss:$8 sm:$0x3]
        %s1470 = scalar_lea.vmem %s5, 1
        %v1471 = vld [vmem:[%s1470] ss:$8 sm:$0x3]
        %s1472 = scalar_lea.vmem %s5, 2
        %v1473 = vld [vmem:[%s1472] ss:$8 sm:$0x3]
        %s1474 = scalar_lea.vmem %s5, 4
        %v1475 = vld [vmem:[%s1474] ss:$8 sm:$0x3]
        %s1476 = scalar_lea.vmem %s5, 5
        %v1477 = vld [vmem:[%s1476] ss:$8 sm:$0x3]
        %s1478 = scalar_lea.vmem %s5, 6
        %v1479 = vld [vmem:[%s1478] ss:$8 sm:$0x3]
        %s1480 = sld [smem:[#allocation2]]
        %s1481 = sld [smem:[#allocation2 + $0x31]]
        %v1482 = vstv %s1480
        %v1483 = vmul.f32 %v1482, %v1455
        %v1484 = vmul.f32 %v1482, %v1451
        %v1485 = vstv %s1481
        %v1486 = vmul.f32 %v1485, %v1467
        %v1487 = vmul.f32 %v1485, %v1463
        %v1488 = vadd.f32 %v1483, %v1486
        %v1489 = vadd.f32 %v1484, %v1487
        %v1491 = vlaneseq
        %v1492 = vshrl.u32 %v1491, 7
        %v1493 = vsub.s32 0, %v1492
        %v1494 = vrot.slane %v1469, %v1493
        %v1495 = vlaneseq
        %v1496 = vshrl.u32 %v1495, 7
        %v1497 = vsub.s32 1, %v1496
        %v1498 = vrot.slane %v1469, %v1497
        %v1501 = vmul.f32 %v1488, %v1494
        %v1502 = vmul.f32 %v1489, %v1498
        %v1503 = vadd.f32 %v1501, 0.0
        %v1504 = vadd.f32 %v1502, 0.0
        %s1505 = sld [smem:[#allocation2 + $0x1]]
        %s1506 = sld [smem:[#allocation2 + $0x32]]
        %v1507 = vstv %s1505
        %v1508 = vmul.f32 %v1507, %v1455
        %v1509 = vmul.f32 %v1507, %v1451
        %v1510 = vmul.f32 %v1507, %v1456
        %v1511 = vstv %s1506
        %v1512 = vmul.f32 %v1511, %v1467
        %v1513 = vmul.f32 %v1511, %v1463
        %v1514 = vmul.f32 %v1511, %v1468
        %v1515 = vadd.f32 %v1508, %v1512
        %v1516 = vadd.f32 %v1509, %v1513
        %v1517 = vadd.f32 %v1510, %v1514
        %v1519 = vlaneseq
        %v1520 = vshrl.u32 %v1519, 7
        %v1521 = vsub.s32 0, %v1520
        %v1522 = vrot.slane %v1471, %v1521
        %v1523 = vlaneseq
        %v1524 = vshrl.u32 %v1523, 7
        %v1525 = vsub.s32 1, %v1524
        %v1526 = vrot.slane %v1471, %v1525
        %1527 = vrot.lane.b32.xlu0 %v1522, 1
        %v1528 = vpop.permute.xlu0 %1527
        %1529 = vrot.lane.b32.xlu0 %v1526, 1
        %v1530 = vpop.permute.xlu0 %1529
        %vm1531 = vcmask 7168
        %v1532 = vsel %vm1531, %v1528, %v1530
        %v1536 = vmul.f32 %v1515, %v1528
        %v1537 = vmul.f32 %v1516, %v1532
        %v1538 = vmul.f32 %v1517, %v1530
        %1542 = vrot.lane.b32.xlu0 %v1536, 127
        %v1543 = vpop.permute.xlu0 %1542
        %1544 = vrot.lane.b32.xlu0 %v1537, 127
        %v1545 = vpop.permute.xlu0 %1544
        %1546 = vrot.lane.b32.xlu0 %v1538, 127
        %v1547 = vpop.permute.xlu0 %1546
        %vm1548 = vcmask 1039360
        %v1549 = vsel %vm1548, %v1543, %v1545
        %v1550 = vsel %vm1548, %v1545, %v1547
        %v1553 = vadd.f32 %v1503, %v1549
        %v1554 = vadd.f32 %v1504, %v1550
        %s1555 = sld [smem:[#allocation2 + $0x2]]
        %s1556 = sld [smem:[#allocation2 + $0x33]]
        %v1557 = vstv %s1555
        %v1558 = vmul.f32 %v1557, %v1455
        %v1559 = vmul.f32 %v1557, %v1451
        %v1560 = vmul.f32 %v1557, %v1456
        %v1561 = vstv %s1556
        %v1562 = vmul.f32 %v1561, %v1467
        %v1563 = vmul.f32 %v1561, %v1463
        %v1564 = vmul.f32 %v1561, %v1468
        %v1565 = vadd.f32 %v1558, %v1562
        %v1566 = vadd.f32 %v1559, %v1563
        %v1567 = vadd.f32 %v1560, %v1564
        %v1569 = vlaneseq
        %v1570 = vshrl.u32 %v1569, 7
        %v1571 = vsub.s32 0, %v1570
        %v1572 = vrot.slane %v1473, %v1571
        %v1573 = vlaneseq
        %v1574 = vshrl.u32 %v1573, 7
        %v1575 = vsub.s32 1, %v1574
        %v1576 = vrot.slane %v1473, %v1575
        %1577 = vrot.lane.b32.xlu0 %v1572, 2
        %v1578 = vpop.permute.xlu0 %1577
        %1579 = vrot.lane.b32.xlu0 %v1576, 2
        %v1580 = vpop.permute.xlu0 %1579
        %v1581 = vsel %vm914, %v1578, %v1580
        %v1585 = vmul.f32 %v1565, %v1578
        %v1586 = vmul.f32 %v1566, %v1581
        %v1587 = vmul.f32 %v1567, %v1580
        %1591 = vrot.lane.b32.xlu0 %v1585, 126
        %v1592 = vpop.permute.xlu0 %1591
        %1593 = vrot.lane.b32.xlu0 %v1586, 126
        %v1594 = vpop.permute.xlu0 %1593
        %1595 = vrot.lane.b32.xlu0 %v1587, 126
        %v1596 = vpop.permute.xlu0 %1595
        %vm1597 = vcmask 1031168
        %v1598 = vsel %vm1597, %v1592, %v1594
        %v1599 = vsel %vm1597, %v1594, %v1596
        %v1602 = vadd.f32 %v1553, %v1598
        %v1603 = vadd.f32 %v1554, %v1599
        %s1604 = sld [smem:[#allocation2 + $0x3]]
        %s1605 = sld [smem:[#allocation2 + $0x34]]
        %v1606 = vstv %s1604
        %v1607 = vmul.f32 %v1606, %v1455
        %v1608 = vmul.f32 %v1606, %v1451
        %v1609 = vmul.f32 %v1606, %v1456
        %v1610 = vstv %s1605
        %v1611 = vmul.f32 %v1610, %v1467
        %v1612 = vmul.f32 %v1610, %v1463
        %v1613 = vmul.f32 %v1610, %v1468
        %v1614 = vadd.f32 %v1607, %v1611
        %v1615 = vadd.f32 %v1608, %v1612
        %v1616 = vadd.f32 %v1609, %v1613
        %1620 = vrot.lane.b32.xlu0 %v1614, 125
        %v1621 = vpop.permute.xlu0 %1620
        %1622 = vrot.lane.b32.xlu0 %v1615, 125
        %v1623 = vpop.permute.xlu0 %1622
        %1624 = vrot.lane.b32.xlu0 %v1616, 125
        %v1625 = vpop.permute.xlu0 %1624
        %vm1626 = vcmask 1022976
        %v1627 = vsel %vm1626, %v1621, %v1623
        %v1628 = vsel %vm1626, %v1623, %v1625
        %v1631 = vadd.f32 %v1602, %v1627
        %v1632 = vadd.f32 %v1603, %v1628
        %s1633 = sld [smem:[#allocation2 + $0x4]]
        %s1634 = sld [smem:[#allocation2 + $0x35]]
        %v1635 = vstv %s1633
        %v1636 = vmul.f32 %v1635, %v1455
        %v1637 = vmul.f32 %v1635, %v1451
        %v1638 = vmul.f32 %v1635, %v1456
        %v1639 = vstv %s1634
        %v1640 = vmul.f32 %v1639, %v1467
        %v1641 = vmul.f32 %v1639, %v1463
        %v1642 = vmul.f32 %v1639, %v1468
        %v1643 = vadd.f32 %v1636, %v1640
        %v1644 = vadd.f32 %v1637, %v1641
        %v1645 = vadd.f32 %v1638, %v1642
        %v1647 = vlaneseq
        %v1648 = vshrl.u32 %v1647, 7
        %v1649 = vsub.s32 0, %v1648
        %v1650 = vrot.slane %v1475, %v1649
        %v1651 = vlaneseq
        %v1652 = vshrl.u32 %v1651, 7
        %v1653 = vsub.s32 1, %v1652
        %v1654 = vrot.slane %v1475, %v1653
        %1655 = vrot.lane.b32.xlu0 %v1650, 4
        %v1656 = vpop.permute.xlu0 %1655
        %1657 = vrot.lane.b32.xlu0 %v1654, 4
        %v1658 = vpop.permute.xlu0 %1657
        %vm1659 = vcmask 31744
        %v1660 = vsel %vm1659, %v1656, %v1658
        %v1664 = vmul.f32 %v1643, %v1656
        %v1665 = vmul.f32 %v1644, %v1660
        %v1666 = vmul.f32 %v1645, %v1658
        %1670 = vrot.lane.b32.xlu0 %v1664, 124
        %v1671 = vpop.permute.xlu0 %1670
        %1672 = vrot.lane.b32.xlu0 %v1665, 124
        %v1673 = vpop.permute.xlu0 %1672
        %1674 = vrot.lane.b32.xlu0 %v1666, 124
        %v1675 = vpop.permute.xlu0 %1674
        %vm1676 = vcmask 1014784
        %v1677 = vsel %vm1676, %v1671, %v1673
        %v1678 = vsel %vm1676, %v1673, %v1675
        %v1681 = vadd.f32 %v1631, %v1677
        %v1682 = vadd.f32 %v1632, %v1678
        %s1683 = sld [smem:[#allocation2 + $0x5]]
        %s1684 = sld [smem:[#allocation2 + $0x36]]
        %v1685 = vstv %s1683
        %v1686 = vmul.f32 %v1685, %v1455
        %v1687 = vmul.f32 %v1685, %v1451
        %v1688 = vmul.f32 %v1685, %v1456
        %v1689 = vstv %s1684
        %v1690 = vmul.f32 %v1689, %v1467
        %v1691 = vmul.f32 %v1689, %v1463
        %v1692 = vmul.f32 %v1689, %v1468
        %v1693 = vadd.f32 %v1686, %v1690
        %v1694 = vadd.f32 %v1687, %v1691
        %v1695 = vadd.f32 %v1688, %v1692
        %v1697 = vlaneseq
        %v1698 = vshrl.u32 %v1697, 7
        %v1699 = vsub.s32 0, %v1698
        %v1700 = vrot.slane %v1477, %v1699
        %v1701 = vlaneseq
        %v1702 = vshrl.u32 %v1701, 7
        %v1703 = vsub.s32 1, %v1702
        %v1704 = vrot.slane %v1477, %v1703
        %1705 = vrot.lane.b32.xlu0 %v1700, 5
        %v1706 = vpop.permute.xlu0 %1705
        %1707 = vrot.lane.b32.xlu0 %v1704, 5
        %v1708 = vpop.permute.xlu0 %1707
        %vm1709 = vcmask 39936
        %v1710 = vsel %vm1709, %v1706, %v1708
        %v1714 = vmul.f32 %v1693, %v1706
        %v1715 = vmul.f32 %v1694, %v1710
        %v1716 = vmul.f32 %v1695, %v1708
        %1720 = vrot.lane.b32.xlu0 %v1714, 123
        %v1721 = vpop.permute.xlu0 %1720
        %1722 = vrot.lane.b32.xlu0 %v1715, 123
        %v1723 = vpop.permute.xlu0 %1722
        %1724 = vrot.lane.b32.xlu0 %v1716, 123
        %v1725 = vpop.permute.xlu0 %1724
        %vm1726 = vcmask 1006592
        %v1727 = vsel %vm1726, %v1721, %v1723
        %v1728 = vsel %vm1726, %v1723, %v1725
        %v1731 = vadd.f32 %v1681, %v1727
        %v1732 = vadd.f32 %v1682, %v1728
        %s1733 = sld [smem:[#allocation2 + $0x6]]
        %s1734 = sld [smem:[#allocation2 + $0x37]]
        %v1735 = vstv %s1733
        %v1736 = vmul.f32 %v1735, %v1455
        %v1737 = vmul.f32 %v1735, %v1451
        %v1738 = vmul.f32 %v1735, %v1456
        %v1739 = vstv %s1734
        %v1740 = vmul.f32 %v1739, %v1467
        %v1741 = vmul.f32 %v1739, %v1463
        %v1742 = vmul.f32 %v1739, %v1468
        %v1743 = vadd.f32 %v1736, %v1740
        %v1744 = vadd.f32 %v1737, %v1741
        %v1745 = vadd.f32 %v1738, %v1742
        %v1747 = vlaneseq
        %v1748 = vshrl.u32 %v1747, 7
        %v1749 = vsub.s32 0, %v1748
        %v1750 = vrot.slane %v1479, %v1749
        %v1751 = vlaneseq
        %v1752 = vshrl.u32 %v1751, 7
        %v1753 = vsub.s32 1, %v1752
        %v1754 = vrot.slane %v1479, %v1753
        %1755 = vrot.lane.b32.xlu0 %v1750, 6
        %v1756 = vpop.permute.xlu0 %1755
        %1757 = vrot.lane.b32.xlu0 %v1754, 6
        %v1758 = vpop.permute.xlu0 %1757
        %vm1759 = vcmask 48128
        %v1760 = vsel %vm1759, %v1756, %v1758
        %v1764 = vmul.f32 %v1743, %v1756
        %v1765 = vmul.f32 %v1744, %v1760
        %v1766 = vmul.f32 %v1745, %v1758
        %1770 = vrot.lane.b32.xlu0 %v1764, 122
        %v1771 = vpop.permute.xlu0 %1770
        %1772 = vrot.lane.b32.xlu0 %v1765, 122
        %v1773 = vpop.permute.xlu0 %1772
        %1774 = vrot.lane.b32.xlu0 %v1766, 122
        %v1775 = vpop.permute.xlu0 %1774
        %vm1776 = vcmask 998400
        %v1777 = vsel %vm1776, %v1771, %v1773
        %v1778 = vsel %vm1776, %v1773, %v1775
        %v1781 = vadd.f32 %v1731, %v1777
        %v1782 = vadd.f32 %v1732, %v1778
        %s1783 = sld [smem:[#allocation2 + $0x7]]
        %s1784 = sld [smem:[#allocation2 + $0x38]]
        %v1785 = vstv %s1783
        %v1786 = vmul.f32 %v1785, %v1455
        %v1787 = vmul.f32 %v1785, %v1451
        %v1788 = vmul.f32 %v1785, %v1456
        %v1789 = vstv %s1784
        %v1790 = vmul.f32 %v1789, %v1467
        %v1791 = vmul.f32 %v1789, %v1463
        %v1792 = vmul.f32 %v1789, %v1468
        %v1793 = vadd.f32 %v1786, %v1790
        %v1794 = vadd.f32 %v1787, %v1791
        %v1795 = vadd.f32 %v1788, %v1792
        %1796 = vrot.lane.b32.xlu0 %v1494, 16
        %v1797 = vpop.permute.xlu0 %1796
        %1798 = vrot.lane.b32.xlu0 %v1498, 16
        %v1799 = vpop.permute.xlu0 %1798
        %vm1800 = vcmask 130048
        %v1801 = vsel %vm1800, %v1797, %v1799
        %v1805 = vmul.f32 %v1793, %v1797
        %v1806 = vmul.f32 %v1794, %v1801
        %v1807 = vmul.f32 %v1795, %v1799
        %v1808 = vadd.f32 %v1805, 0.0
        %v1809 = vadd.f32 %v1806, 0.0
        %v1810 = vadd.f32 %v1807, 0.0
        %s1811 = sld [smem:[#allocation2 + $0x8]]
        %s1812 = sld [smem:[#allocation2 + $0x39]]
        %v1813 = vstv %s1811
        %v1814 = vmul.f32 %v1813, %v1455
        %v1815 = vmul.f32 %v1813, %v1451
        %v1816 = vmul.f32 %v1813, %v1456
        %v1817 = vstv %s1812
        %v1818 = vmul.f32 %v1817, %v1467
        %v1819 = vmul.f32 %v1817, %v1463
        %v1820 = vmul.f32 %v1817, %v1468
        %v1821 = vadd.f32 %v1814, %v1818
        %v1822 = vadd.f32 %v1815, %v1819
        %v1823 = vadd.f32 %v1816, %v1820
        %1824 = vrot.lane.b32.xlu0 %v1522, 17
        %v1825 = vpop.permute.xlu0 %1824
        %1826 = vrot.lane.b32.xlu0 %v1526, 17
        %v1827 = vpop.permute.xlu0 %1826
        %vm1828 = vcmask 138240
        %v1829 = vsel %vm1828, %v1825, %v1827
        %v1833 = vmul.f32 %v1821, %v1825
        %v1834 = vmul.f32 %v1822, %v1829
        %v1835 = vmul.f32 %v1823, %v1827
        %1839 = vrot.lane.b32.xlu0 %v1833, 127
        %v1840 = vpop.permute.xlu0 %1839
        %1841 = vrot.lane.b32.xlu0 %v1834, 127
        %v1842 = vpop.permute.xlu0 %1841
        %1843 = vrot.lane.b32.xlu0 %v1835, 127
        %v1844 = vpop.permute.xlu0 %1843
        %v1845 = vsel %vm1548, %v1840, %v1842
        %v1846 = vsel %vm1548, %v1842, %v1844
        %v1850 = vadd.f32 %v1808, %v1845
        %v1851 = vadd.f32 %v1809, %v1846
        %v1852 = vadd.f32 %v1810, %v1844
        %s1853 = sld [smem:[#allocation2 + $0x9]]
        %s1854 = sld [smem:[#allocation2 + $0x3a]]
        %v1855 = vstv %s1853
        %v1856 = vmul.f32 %v1855, %v1455
        %v1857 = vmul.f32 %v1855, %v1451
        %v1858 = vmul.f32 %v1855, %v1456
        %v1859 = vstv %s1854
        %v1860 = vmul.f32 %v1859, %v1467
        %v1861 = vmul.f32 %v1859, %v1463
        %v1862 = vmul.f32 %v1859, %v1468
        %v1863 = vadd.f32 %v1856, %v1860
        %v1864 = vadd.f32 %v1857, %v1861
        %v1865 = vadd.f32 %v1858, %v1862
        %1866 = vrot.lane.b32.xlu0 %v1572, 18
        %v1867 = vpop.permute.xlu0 %1866
        %1868 = vrot.lane.b32.xlu0 %v1576, 18
        %v1869 = vpop.permute.xlu0 %1868
        %vm1870 = vcmask 146432
        %v1871 = vsel %vm1870, %v1867, %v1869
        %v1875 = vmul.f32 %v1863, %v1867
        %v1876 = vmul.f32 %v1864, %v1871
        %v1877 = vmul.f32 %v1865, %v1869
        %1881 = vrot.lane.b32.xlu0 %v1875, 126
        %v1882 = vpop.permute.xlu0 %1881
        %1883 = vrot.lane.b32.xlu0 %v1876, 126
        %v1884 = vpop.permute.xlu0 %1883
        %1885 = vrot.lane.b32.xlu0 %v1877, 126
        %v1886 = vpop.permute.xlu0 %1885
        %v1887 = vsel %vm1597, %v1882, %v1884
        %v1888 = vsel %vm1597, %v1884, %v1886
        %v1892 = vadd.f32 %v1850, %v1887
        %v1893 = vadd.f32 %v1851, %v1888
        %v1894 = vadd.f32 %v1852, %v1886
        %s1895 = sld [smem:[#allocation2 + $0xa]]
        %s1896 = sld [smem:[#allocation2 + $0x3b]]
        %v1897 = vstv %s1895
        %v1898 = vmul.f32 %v1897, %v1455
        %v1899 = vmul.f32 %v1897, %v1451
        %v1900 = vmul.f32 %v1897, %v1456
        %v1901 = vstv %s1896
        %v1902 = vmul.f32 %v1901, %v1467
        %v1903 = vmul.f32 %v1901, %v1463
        %v1904 = vmul.f32 %v1901, %v1468
        %v1905 = vadd.f32 %v1898, %v1902
        %v1906 = vadd.f32 %v1899, %v1903
        %v1907 = vadd.f32 %v1900, %v1904
        %1911 = vrot.lane.b32.xlu0 %v1905, 125
        %v1912 = vpop.permute.xlu0 %1911
        %1913 = vrot.lane.b32.xlu0 %v1906, 125
        %v1914 = vpop.permute.xlu0 %1913
        %1915 = vrot.lane.b32.xlu0 %v1907, 125
        %v1916 = vpop.permute.xlu0 %1915
        %v1917 = vsel %vm1626, %v1912, %v1914
        %v1918 = vsel %vm1626, %v1914, %v1916
        %v1922 = vadd.f32 %v1892, %v1917
        %v1923 = vadd.f32 %v1893, %v1918
        %v1924 = vadd.f32 %v1894, %v1916
        %s1925 = sld [smem:[#allocation2 + $0xb]]
        %s1926 = sld [smem:[#allocation2 + $0x3c]]
        %v1927 = vstv %s1925
        %v1928 = vmul.f32 %v1927, %v1455
        %v1929 = vmul.f32 %v1927, %v1451
        %v1930 = vmul.f32 %v1927, %v1456
        %v1931 = vstv %s1926
        %v1932 = vmul.f32 %v1931, %v1467
        %v1933 = vmul.f32 %v1931, %v1463
        %v1934 = vmul.f32 %v1931, %v1468
        %v1935 = vadd.f32 %v1928, %v1932
        %v1936 = vadd.f32 %v1929, %v1933
        %v1937 = vadd.f32 %v1930, %v1934
        %1938 = vrot.lane.b32.xlu0 %v1650, 20
        %v1939 = vpop.permute.xlu0 %1938
        %1940 = vrot.lane.b32.xlu0 %v1654, 20
        %v1941 = vpop.permute.xlu0 %1940
        %vm1942 = vcmask 162816
        %v1943 = vsel %vm1942, %v1939, %v1941
        %v1947 = vmul.f32 %v1935, %v1939
        %v1948 = vmul.f32 %v1936, %v1943
        %v1949 = vmul.f32 %v1937, %v1941
        %1953 = vrot.lane.b32.xlu0 %v1947, 124
        %v1954 = vpop.permute.xlu0 %1953
        %1955 = vrot.lane.b32.xlu0 %v1948, 124
        %v1956 = vpop.permute.xlu0 %1955
        %1957 = vrot.lane.b32.xlu0 %v1949, 124
        %v1958 = vpop.permute.xlu0 %1957
        %v1959 = vsel %vm1676, %v1954, %v1956
        %v1960 = vsel %vm1676, %v1956, %v1958
        %v1964 = vadd.f32 %v1922, %v1959
        %v1965 = vadd.f32 %v1923, %v1960
        %v1966 = vadd.f32 %v1924, %v1958
        %s1967 = sld [smem:[#allocation2 + $0xc]]
        %s1968 = sld [smem:[#allocation2 + $0x3d]]
        %v1969 = vstv %s1967
        %v1970 = vmul.f32 %v1969, %v1455
        %v1971 = vmul.f32 %v1969, %v1451
        %v1972 = vmul.f32 %v1969, %v1456
        %v1973 = vstv %s1968
        %v1974 = vmul.f32 %v1973, %v1467
        %v1975 = vmul.f32 %v1973, %v1463
        %v1976 = vmul.f32 %v1973, %v1468
        %v1977 = vadd.f32 %v1970, %v1974
        %v1978 = vadd.f32 %v1971, %v1975
        %v1979 = vadd.f32 %v1972, %v1976
        %1980 = vrot.lane.b32.xlu0 %v1700, 21
        %v1981 = vpop.permute.xlu0 %1980
        %1982 = vrot.lane.b32.xlu0 %v1704, 21
        %v1983 = vpop.permute.xlu0 %1982
        %vm1984 = vcmask 171008
        %v1985 = vsel %vm1984, %v1981, %v1983
        %v1989 = vmul.f32 %v1977, %v1981
        %v1990 = vmul.f32 %v1978, %v1985
        %v1991 = vmul.f32 %v1979, %v1983
        %1995 = vrot.lane.b32.xlu0 %v1989, 123
        %v1996 = vpop.permute.xlu0 %1995
        %1997 = vrot.lane.b32.xlu0 %v1990, 123
        %v1998 = vpop.permute.xlu0 %1997
        %1999 = vrot.lane.b32.xlu0 %v1991, 123
        %v2000 = vpop.permute.xlu0 %1999
        %v2001 = vsel %vm1726, %v1996, %v1998
        %v2002 = vsel %vm1726, %v1998, %v2000
        %v2006 = vadd.f32 %v1964, %v2001
        %v2007 = vadd.f32 %v1965, %v2002
        %v2008 = vadd.f32 %v1966, %v2000
        %s2009 = sld [smem:[#allocation2 + $0xd]]
        %s2010 = sld [smem:[#allocation2 + $0x3e]]
        %v2011 = vstv %s2009
        %v2012 = vmul.f32 %v2011, %v1455
        %v2013 = vmul.f32 %v2011, %v1451
        %v2014 = vmul.f32 %v2011, %v1456
        %v2015 = vstv %s2010
        %v2016 = vmul.f32 %v2015, %v1467
        %v2017 = vmul.f32 %v2015, %v1463
        %v2018 = vmul.f32 %v2015, %v1468
        %v2019 = vadd.f32 %v2012, %v2016
        %v2020 = vadd.f32 %v2013, %v2017
        %v2021 = vadd.f32 %v2014, %v2018
        %2022 = vrot.lane.b32.xlu0 %v1750, 22
        %v2023 = vpop.permute.xlu0 %2022
        %2024 = vrot.lane.b32.xlu0 %v1754, 22
        %v2025 = vpop.permute.xlu0 %2024
        %vm2026 = vcmask 179200
        %v2027 = vsel %vm2026, %v2023, %v2025
        %v2031 = vmul.f32 %v2019, %v2023
        %v2032 = vmul.f32 %v2020, %v2027
        %v2033 = vmul.f32 %v2021, %v2025
        %2037 = vrot.lane.b32.xlu0 %v2031, 122
        %v2038 = vpop.permute.xlu0 %2037
        %2039 = vrot.lane.b32.xlu0 %v2032, 122
        %v2040 = vpop.permute.xlu0 %2039
        %2041 = vrot.lane.b32.xlu0 %v2033, 122
        %v2042 = vpop.permute.xlu0 %2041
        %v2043 = vsel %vm1776, %v2038, %v2040
        %v2044 = vsel %vm1776, %v2040, %v2042
        %v2048 = vadd.f32 %v2006, %v2043
        %v2049 = vadd.f32 %v2007, %v2044
        %v2050 = vadd.f32 %v2008, %v2042
        %s2051 = sld [smem:[#allocation2 + $0xe]]
        %s2052 = sld [smem:[#allocation2 + $0x3f]]
        %v2053 = vstv %s2051
        %v2054 = vmul.f32 %v2053, %v1455
        %v2055 = vmul.f32 %v2053, %v1451
        %v2056 = vmul.f32 %v2053, %v1456
        %v2057 = vstv %s2052
        %v2058 = vmul.f32 %v2057, %v1467
        %v2059 = vmul.f32 %v2057, %v1463
        %v2060 = vmul.f32 %v2057, %v1468
        %v2061 = vadd.f32 %v2054, %v2058
        %v2062 = vadd.f32 %v2055, %v2059
        %v2063 = vadd.f32 %v2056, %v2060
        %2064 = vrot.lane.b32.xlu0 %v1494, 32
        %v2065 = vpop.permute.xlu0 %2064
        %2066 = vrot.lane.b32.xlu0 %v1498, 32
        %v2067 = vpop.permute.xlu0 %2066
        %v2068 = vsel %vm418, %v2065, %v2067
        %v2072 = vmul.f32 %v2061, %v2065
        %v2073 = vmul.f32 %v2062, %v2068
        %v2074 = vmul.f32 %v2063, %v2067
        %v2075 = vadd.f32 %v2072, 0.0
        %v2076 = vadd.f32 %v2073, 0.0
        %v2077 = vadd.f32 %v2074, 0.0
        %s2078 = sld [smem:[#allocation2 + $0xf]]
        %s2079 = sld [smem:[#allocation2 + $0x40]]
        %v2080 = vstv %s2078
        %v2081 = vmul.f32 %v2080, %v1455
        %v2082 = vmul.f32 %v2080, %v1451
        %v2083 = vmul.f32 %v2080, %v1456
        %v2084 = vstv %s2079
        %v2085 = vmul.f32 %v2084, %v1467
        %v2086 = vmul.f32 %v2084, %v1463
        %v2087 = vmul.f32 %v2084, %v1468
        %v2088 = vadd.f32 %v2081, %v2085
        %v2089 = vadd.f32 %v2082, %v2086
        %v2090 = vadd.f32 %v2083, %v2087
        %2091 = vrot.lane.b32.xlu0 %v1522, 33
        %v2092 = vpop.permute.xlu0 %2091
        %2093 = vrot.lane.b32.xlu0 %v1526, 33
        %v2094 = vpop.permute.xlu0 %2093
        %vm2095 = vcmask 269312
        %v2096 = vsel %vm2095, %v2092, %v2094
        %v2100 = vmul.f32 %v2088, %v2092
        %v2101 = vmul.f32 %v2089, %v2096
        %v2102 = vmul.f32 %v2090, %v2094
        %2106 = vrot.lane.b32.xlu0 %v2100, 127
        %v2107 = vpop.permute.xlu0 %2106
        %2108 = vrot.lane.b32.xlu0 %v2101, 127
        %v2109 = vpop.permute.xlu0 %2108
        %2110 = vrot.lane.b32.xlu0 %v2102, 127
        %v2111 = vpop.permute.xlu0 %2110
        %v2112 = vsel %vm1548, %v2107, %v2109
        %v2113 = vsel %vm1548, %v2109, %v2111
        %v2117 = vadd.f32 %v2075, %v2112
        %v2118 = vadd.f32 %v2076, %v2113
        %v2119 = vadd.f32 %v2077, %v2111
        %s2120 = sld [smem:[#allocation2 + $0x10]]
        %s2121 = sld [smem:[#allocation2 + $0x41]]
        %v2122 = vstv %s2120
        %v2123 = vmul.f32 %v2122, %v1455
        %v2124 = vmul.f32 %v2122, %v1451
        %v2125 = vmul.f32 %v2122, %v1456
        %v2126 = vstv %s2121
        %v2127 = vmul.f32 %v2126, %v1467
        %v2128 = vmul.f32 %v2126, %v1463
        %v2129 = vmul.f32 %v2126, %v1468
        %v2130 = vadd.f32 %v2123, %v2127
        %v2131 = vadd.f32 %v2124, %v2128
        %v2132 = vadd.f32 %v2125, %v2129
        %2133 = vrot.lane.b32.xlu0 %v1572, 34
        %v2134 = vpop.permute.xlu0 %2133
        %2135 = vrot.lane.b32.xlu0 %v1576, 34
        %v2136 = vpop.permute.xlu0 %2135
        %vm2137 = vcmask 277504
        %v2138 = vsel %vm2137, %v2134, %v2136
        %v2142 = vmul.f32 %v2130, %v2134
        %v2143 = vmul.f32 %v2131, %v2138
        %v2144 = vmul.f32 %v2132, %v2136
        %2148 = vrot.lane.b32.xlu0 %v2142, 126
        %v2149 = vpop.permute.xlu0 %2148
        %2150 = vrot.lane.b32.xlu0 %v2143, 126
        %v2151 = vpop.permute.xlu0 %2150
        %2152 = vrot.lane.b32.xlu0 %v2144, 126
        %v2153 = vpop.permute.xlu0 %2152
        %v2154 = vsel %vm1597, %v2149, %v2151
        %v2155 = vsel %vm1597, %v2151, %v2153
        %v2159 = vadd.f32 %v2117, %v2154
        %v2160 = vadd.f32 %v2118, %v2155
        %v2161 = vadd.f32 %v2119, %v2153
        %s2162 = sld [smem:[#allocation2 + $0x11]]
        %s2163 = sld [smem:[#allocation2 + $0x42]]
        %v2164 = vstv %s2162
        %v2165 = vmul.f32 %v2164, %v1455
        %v2166 = vmul.f32 %v2164, %v1451
        %v2167 = vmul.f32 %v2164, %v1456
        %v2168 = vstv %s2163
        %v2169 = vmul.f32 %v2168, %v1467
        %v2170 = vmul.f32 %v2168, %v1463
        %v2171 = vmul.f32 %v2168, %v1468
        %v2172 = vadd.f32 %v2165, %v2169
        %v2173 = vadd.f32 %v2166, %v2170
        %v2174 = vadd.f32 %v2167, %v2171
        %2178 = vrot.lane.b32.xlu0 %v2172, 125
        %v2179 = vpop.permute.xlu0 %2178
        %2180 = vrot.lane.b32.xlu0 %v2173, 125
        %v2181 = vpop.permute.xlu0 %2180
        %2182 = vrot.lane.b32.xlu0 %v2174, 125
        %v2183 = vpop.permute.xlu0 %2182
        %v2184 = vsel %vm1626, %v2179, %v2181
        %v2185 = vsel %vm1626, %v2181, %v2183
        %v2189 = vadd.f32 %v2159, %v2184
        %v2190 = vadd.f32 %v2160, %v2185
        %v2191 = vadd.f32 %v2161, %v2183
        %s2192 = sld [smem:[#allocation2 + $0x12]]
        %s2193 = sld [smem:[#allocation2 + $0x43]]
        %v2194 = vstv %s2192
        %v2195 = vmul.f32 %v2194, %v1455
        %v2196 = vmul.f32 %v2194, %v1451
        %v2197 = vmul.f32 %v2194, %v1456
        %v2198 = vstv %s2193
        %v2199 = vmul.f32 %v2198, %v1467
        %v2200 = vmul.f32 %v2198, %v1463
        %v2201 = vmul.f32 %v2198, %v1468
        %v2202 = vadd.f32 %v2195, %v2199
        %v2203 = vadd.f32 %v2196, %v2200
        %v2204 = vadd.f32 %v2197, %v2201
        %2205 = vrot.lane.b32.xlu0 %v1650, 36
        %v2206 = vpop.permute.xlu0 %2205
        %2207 = vrot.lane.b32.xlu0 %v1654, 36
        %v2208 = vpop.permute.xlu0 %2207
        %vm2209 = vcmask 293888
        %v2210 = vsel %vm2209, %v2206, %v2208
        %v2214 = vmul.f32 %v2202, %v2206
        %v2215 = vmul.f32 %v2203, %v2210
        %v2216 = vmul.f32 %v2204, %v2208
        %2220 = vrot.lane.b32.xlu0 %v2214, 124
        %v2221 = vpop.permute.xlu0 %2220
        %2222 = vrot.lane.b32.xlu0 %v2215, 124
        %v2223 = vpop.permute.xlu0 %2222
        %2224 = vrot.lane.b32.xlu0 %v2216, 124
        %v2225 = vpop.permute.xlu0 %2224
        %v2226 = vsel %vm1676, %v2221, %v2223
        %v2227 = vsel %vm1676, %v2223, %v2225
        %v2231 = vadd.f32 %v2189, %v2226
        %v2232 = vadd.f32 %v2190, %v2227
        %v2233 = vadd.f32 %v2191, %v2225
        %s2234 = sld [smem:[#allocation2 + $0x13]]
        %s2235 = sld [smem:[#allocation2 + $0x44]]
        %v2236 = vstv %s2234
        %v2237 = vmul.f32 %v2236, %v1455
        %v2238 = vmul.f32 %v2236, %v1451
        %v2239 = vmul.f32 %v2236, %v1456
        %v2240 = vstv %s2235
        %v2241 = vmul.f32 %v2240, %v1467
        %v2242 = vmul.f32 %v2240, %v1463
        %v2243 = vmul.f32 %v2240, %v1468
        %v2244 = vadd.f32 %v2237, %v2241
        %v2245 = vadd.f32 %v2238, %v2242
        %v2246 = vadd.f32 %v2239, %v2243
        %2247 = vrot.lane.b32.xlu0 %v1700, 37
        %v2248 = vpop.permute.xlu0 %2247
        %2249 = vrot.lane.b32.xlu0 %v1704, 37
        %v2250 = vpop.permute.xlu0 %2249
        %vm2251 = vcmask 302080
        %v2252 = vsel %vm2251, %v2248, %v2250
        %v2256 = vmul.f32 %v2244, %v2248
        %v2257 = vmul.f32 %v2245, %v2252
        %v2258 = vmul.f32 %v2246, %v2250
        %2262 = vrot.lane.b32.xlu0 %v2256, 123
        %v2263 = vpop.permute.xlu0 %2262
        %2264 = vrot.lane.b32.xlu0 %v2257, 123
        %v2265 = vpop.permute.xlu0 %2264
        %2266 = vrot.lane.b32.xlu0 %v2258, 123
        %v2267 = vpop.permute.xlu0 %2266
        %v2268 = vsel %vm1726, %v2263, %v2265
        %v2269 = vsel %vm1726, %v2265, %v2267
        %v2273 = vadd.f32 %v2231, %v2268
        %v2274 = vadd.f32 %v2232, %v2269
        %v2275 = vadd.f32 %v2233, %v2267
        %s2276 = sld [smem:[#allocation2 + $0x14]]
        %s2277 = sld [smem:[#allocation2 + $0x45]]
        %v2278 = vstv %s2276
        %v2279 = vmul.f32 %v2278, %v1455
        %v2280 = vmul.f32 %v2278, %v1451
        %v2281 = vmul.f32 %v2278, %v1456
        %v2282 = vstv %s2277
        %v2283 = vmul.f32 %v2282, %v1467
        %v2284 = vmul.f32 %v2282, %v1463
        %v2285 = vmul.f32 %v2282, %v1468
        %v2286 = vadd.f32 %v2279, %v2283
        %v2287 = vadd.f32 %v2280, %v2284
        %v2288 = vadd.f32 %v2281, %v2285
        %2289 = vrot.lane.b32.xlu0 %v1750, 38
        %v2290 = vpop.permute.xlu0 %2289
        %2291 = vrot.lane.b32.xlu0 %v1754, 38
        %v2292 = vpop.permute.xlu0 %2291
        %vm2293 = vcmask 310272
        %v2294 = vsel %vm2293, %v2290, %v2292
        %v2298 = vmul.f32 %v2286, %v2290
        %v2299 = vmul.f32 %v2287, %v2294
        %v2300 = vmul.f32 %v2288, %v2292
        %2304 = vrot.lane.b32.xlu0 %v2298, 122
        %v2305 = vpop.permute.xlu0 %2304
        %2306 = vrot.lane.b32.xlu0 %v2299, 122
        %v2307 = vpop.permute.xlu0 %2306
        %2308 = vrot.lane.b32.xlu0 %v2300, 122
        %v2309 = vpop.permute.xlu0 %2308
        %v2310 = vsel %vm1776, %v2305, %v2307
        %v2311 = vsel %vm1776, %v2307, %v2309
        %v2315 = vadd.f32 %v2273, %v2310
        %v2316 = vadd.f32 %v2274, %v2311
        %v2317 = vadd.f32 %v2275, %v2309
        %s2318 = sld [smem:[#allocation2 + $0x15]]
        %s2319 = sld [smem:[#allocation2 + $0x46]]
        %v2320 = vstv %s2318
        %v2321 = vmul.f32 %v2320, %v1455
        %v2322 = vmul.f32 %v2320, %v1451
        %v2323 = vmul.f32 %v2320, %v1456
        %v2324 = vstv %s2319
        %v2325 = vmul.f32 %v2324, %v1467
        %v2326 = vmul.f32 %v2324, %v1463
        %v2327 = vmul.f32 %v2324, %v1468
        %v2328 = vadd.f32 %v2321, %v2325
        %v2329 = vadd.f32 %v2322, %v2326
        %v2330 = vadd.f32 %v2323, %v2327
        %2331 = vrot.lane.b32.xlu0 %v1494, 48
        %v2332 = vpop.permute.xlu0 %2331
        %2333 = vrot.lane.b32.xlu0 %v1498, 48
        %v2334 = vpop.permute.xlu0 %2333
        %vm2335 = vcmask 392192
        %v2336 = vsel %vm2335, %v2332, %v2334
        %v2340 = vmul.f32 %v2328, %v2332
        %v2341 = vmul.f32 %v2329, %v2336
        %v2342 = vmul.f32 %v2330, %v2334
        %v2343 = vadd.f32 %v2340, 0.0
        %v2344 = vadd.f32 %v2341, 0.0
        %v2345 = vadd.f32 %v2342, 0.0
        %s2346 = sld [smem:[#allocation2 + $0x16]]
        %s2347 = sld [smem:[#allocation2 + $0x47]]
        %v2348 = vstv %s2346
        %v2349 = vmul.f32 %v2348, %v1455
        %v2350 = vmul.f32 %v2348, %v1451
        %v2351 = vmul.f32 %v2348, %v1456
        %v2352 = vstv %s2347
        %v2353 = vmul.f32 %v2352, %v1467
        %v2354 = vmul.f32 %v2352, %v1463
        %v2355 = vmul.f32 %v2352, %v1468
        %v2356 = vadd.f32 %v2349, %v2353
        %v2357 = vadd.f32 %v2350, %v2354
        %v2358 = vadd.f32 %v2351, %v2355
        %2359 = vrot.lane.b32.xlu0 %v1522, 49
        %v2360 = vpop.permute.xlu0 %2359
        %2361 = vrot.lane.b32.xlu0 %v1526, 49
        %v2362 = vpop.permute.xlu0 %2361
        %vm2363 = vcmask 400384
        %v2364 = vsel %vm2363, %v2360, %v2362
        %v2368 = vmul.f32 %v2356, %v2360
        %v2369 = vmul.f32 %v2357, %v2364
        %v2370 = vmul.f32 %v2358, %v2362
        %2374 = vrot.lane.b32.xlu0 %v2368, 127
        %v2375 = vpop.permute.xlu0 %2374
        %2376 = vrot.lane.b32.xlu0 %v2369, 127
        %v2377 = vpop.permute.xlu0 %2376
        %2378 = vrot.lane.b32.xlu0 %v2370, 127
        %v2379 = vpop.permute.xlu0 %2378
        %v2380 = vsel %vm1548, %v2375, %v2377
        %v2381 = vsel %vm1548, %v2377, %v2379
        %v2385 = vadd.f32 %v2343, %v2380
        %v2386 = vadd.f32 %v2344, %v2381
        %v2387 = vadd.f32 %v2345, %v2379
        %s2388 = sld [smem:[#allocation2 + $0x17]]
        %s2389 = sld [smem:[#allocation2 + $0x48]]
        %v2390 = vstv %s2388
        %v2391 = vmul.f32 %v2390, %v1455
        %v2392 = vmul.f32 %v2390, %v1451
        %v2393 = vmul.f32 %v2390, %v1456
        %v2394 = vstv %s2389
        %v2395 = vmul.f32 %v2394, %v1467
        %v2396 = vmul.f32 %v2394, %v1463
        %v2397 = vmul.f32 %v2394, %v1468
        %v2398 = vadd.f32 %v2391, %v2395
        %v2399 = vadd.f32 %v2392, %v2396
        %v2400 = vadd.f32 %v2393, %v2397
        %2401 = vrot.lane.b32.xlu0 %v1572, 50
        %v2402 = vpop.permute.xlu0 %2401
        %2403 = vrot.lane.b32.xlu0 %v1576, 50
        %v2404 = vpop.permute.xlu0 %2403
        %vm2405 = vcmask 408576
        %v2406 = vsel %vm2405, %v2402, %v2404
        %v2410 = vmul.f32 %v2398, %v2402
        %v2411 = vmul.f32 %v2399, %v2406
        %v2412 = vmul.f32 %v2400, %v2404
        %2416 = vrot.lane.b32.xlu0 %v2410, 126
        %v2417 = vpop.permute.xlu0 %2416
        %2418 = vrot.lane.b32.xlu0 %v2411, 126
        %v2419 = vpop.permute.xlu0 %2418
        %2420 = vrot.lane.b32.xlu0 %v2412, 126
        %v2421 = vpop.permute.xlu0 %2420
        %v2422 = vsel %vm1597, %v2417, %v2419
        %v2423 = vsel %vm1597, %v2419, %v2421
        %v2427 = vadd.f32 %v2385, %v2422
        %v2428 = vadd.f32 %v2386, %v2423
        %v2429 = vadd.f32 %v2387, %v2421
        %s2430 = sld [smem:[#allocation2 + $0x18]]
        %s2431 = sld [smem:[#allocation2 + $0x49]]
        %v2432 = vstv %s2430
        %v2433 = vmul.f32 %v2432, %v1455
        %v2434 = vmul.f32 %v2432, %v1451
        %v2435 = vmul.f32 %v2432, %v1456
        %v2436 = vstv %s2431
        %v2437 = vmul.f32 %v2436, %v1467
        %v2438 = vmul.f32 %v2436, %v1463
        %v2439 = vmul.f32 %v2436, %v1468
        %v2440 = vadd.f32 %v2433, %v2437
        %v2441 = vadd.f32 %v2434, %v2438
        %v2442 = vadd.f32 %v2435, %v2439
        %2446 = vrot.lane.b32.xlu0 %v2440, 125
        %v2447 = vpop.permute.xlu0 %2446
        %2448 = vrot.lane.b32.xlu0 %v2441, 125
        %v2449 = vpop.permute.xlu0 %2448
        %2450 = vrot.lane.b32.xlu0 %v2442, 125
        %v2451 = vpop.permute.xlu0 %2450
        %v2452 = vsel %vm1626, %v2447, %v2449
        %v2453 = vsel %vm1626, %v2449, %v2451
        %v2457 = vadd.f32 %v2427, %v2452
        %v2458 = vadd.f32 %v2428, %v2453
        %v2459 = vadd.f32 %v2429, %v2451
        %s2460 = sld [smem:[#allocation2 + $0x19]]
        %s2461 = sld [smem:[#allocation2 + $0x4a]]
        %v2462 = vstv %s2460
        %v2463 = vmul.f32 %v2462, %v1455
        %v2464 = vmul.f32 %v2462, %v1451
        %v2465 = vmul.f32 %v2462, %v1456
        %v2466 = vstv %s2461
        %v2467 = vmul.f32 %v2466, %v1467
        %v2468 = vmul.f32 %v2466, %v1463
        %v2469 = vmul.f32 %v2466, %v1468
        %v2470 = vadd.f32 %v2463, %v2467
        %v2471 = vadd.f32 %v2464, %v2468
        %v2472 = vadd.f32 %v2465, %v2469
        %2473 = vrot.lane.b32.xlu0 %v1650, 52
        %v2474 = vpop.permute.xlu0 %2473
        %2475 = vrot.lane.b32.xlu0 %v1654, 52
        %v2476 = vpop.permute.xlu0 %2475
        %vm2477 = vcmask 424960
        %v2478 = vsel %vm2477, %v2474, %v2476
        %v2482 = vmul.f32 %v2470, %v2474
        %v2483 = vmul.f32 %v2471, %v2478
        %v2484 = vmul.f32 %v2472, %v2476
        %2488 = vrot.lane.b32.xlu0 %v2482, 124
        %v2489 = vpop.permute.xlu0 %2488
        %2490 = vrot.lane.b32.xlu0 %v2483, 124
        %v2491 = vpop.permute.xlu0 %2490
        %2492 = vrot.lane.b32.xlu0 %v2484, 124
        %v2493 = vpop.permute.xlu0 %2492
        %v2494 = vsel %vm1676, %v2489, %v2491
        %v2495 = vsel %vm1676, %v2491, %v2493
        %v2499 = vadd.f32 %v2457, %v2494
        %v2500 = vadd.f32 %v2458, %v2495
        %v2501 = vadd.f32 %v2459, %v2493
        %s2502 = sld [smem:[#allocation2 + $0x1a]]
        %s2503 = sld [smem:[#allocation2 + $0x4b]]
        %v2504 = vstv %s2502
        %v2505 = vmul.f32 %v2504, %v1455
        %v2506 = vmul.f32 %v2504, %v1451
        %v2507 = vmul.f32 %v2504, %v1456
        %v2508 = vstv %s2503
        %v2509 = vmul.f32 %v2508, %v1467
        %v2510 = vmul.f32 %v2508, %v1463
        %v2511 = vmul.f32 %v2508, %v1468
        %v2512 = vadd.f32 %v2505, %v2509
        %v2513 = vadd.f32 %v2506, %v2510
        %v2514 = vadd.f32 %v2507, %v2511
        %2515 = vrot.lane.b32.xlu0 %v1700, 53
        %v2516 = vpop.permute.xlu0 %2515
        %2517 = vrot.lane.b32.xlu0 %v1704, 53
        %v2518 = vpop.permute.xlu0 %2517
        %vm2519 = vcmask 433152
        %v2520 = vsel %vm2519, %v2516, %v2518
        %v2524 = vmul.f32 %v2512, %v2516
        %v2525 = vmul.f32 %v2513, %v2520
        %v2526 = vmul.f32 %v2514, %v2518
        %2530 = vrot.lane.b32.xlu0 %v2524, 123
        %v2531 = vpop.permute.xlu0 %2530
        %2532 = vrot.lane.b32.xlu0 %v2525, 123
        %v2533 = vpop.permute.xlu0 %2532
        %2534 = vrot.lane.b32.xlu0 %v2526, 123
        %v2535 = vpop.permute.xlu0 %2534
        %v2536 = vsel %vm1726, %v2531, %v2533
        %v2537 = vsel %vm1726, %v2533, %v2535
        %v2541 = vadd.f32 %v2499, %v2536
        %v2542 = vadd.f32 %v2500, %v2537
        %v2543 = vadd.f32 %v2501, %v2535
        %s2544 = sld [smem:[#allocation2 + $0x1b]]
        %s2545 = sld [smem:[#allocation2 + $0x4c]]
        %v2546 = vstv %s2544
        %v2547 = vmul.f32 %v2546, %v1455
        %v2548 = vmul.f32 %v2546, %v1451
        %v2549 = vmul.f32 %v2546, %v1456
        %v2550 = vstv %s2545
        %v2551 = vmul.f32 %v2550, %v1467
        %v2552 = vmul.f32 %v2550, %v1463
        %v2553 = vmul.f32 %v2550, %v1468
        %v2554 = vadd.f32 %v2547, %v2551
        %v2555 = vadd.f32 %v2548, %v2552
        %v2556 = vadd.f32 %v2549, %v2553
        %2557 = vrot.lane.b32.xlu0 %v1750, 54
        %v2558 = vpop.permute.xlu0 %2557
        %2559 = vrot.lane.b32.xlu0 %v1754, 54
        %v2560 = vpop.permute.xlu0 %2559
        %vm2561 = vcmask 441344
        %v2562 = vsel %vm2561, %v2558, %v2560
        %v2566 = vmul.f32 %v2554, %v2558
        %v2567 = vmul.f32 %v2555, %v2562
        %v2568 = vmul.f32 %v2556, %v2560
        %2572 = vrot.lane.b32.xlu0 %v2566, 122
        %v2573 = vpop.permute.xlu0 %2572
        %2574 = vrot.lane.b32.xlu0 %v2567, 122
        %v2575 = vpop.permute.xlu0 %2574
        %2576 = vrot.lane.b32.xlu0 %v2568, 122
        %v2577 = vpop.permute.xlu0 %2576
        %v2578 = vsel %vm1776, %v2573, %v2575
        %v2579 = vsel %vm1776, %v2575, %v2577
        %v2583 = vadd.f32 %v2541, %v2578
        %v2584 = vadd.f32 %v2542, %v2579
        %v2585 = vadd.f32 %v2543, %v2577
        %s2586 = sld [smem:[#allocation2 + $0x1c]]
        %s2587 = sld [smem:[#allocation2 + $0x4d]]
        %v2588 = vstv %s2586
        %v2589 = vmul.f32 %v2588, %v1455
        %v2590 = vmul.f32 %v2588, %v1451
        %v2591 = vmul.f32 %v2588, %v1456
        %v2592 = vstv %s2587
        %v2593 = vmul.f32 %v2592, %v1467
        %v2594 = vmul.f32 %v2592, %v1463
        %v2595 = vmul.f32 %v2592, %v1468
        %v2596 = vadd.f32 %v2589, %v2593
        %v2597 = vadd.f32 %v2590, %v2594
        %v2598 = vadd.f32 %v2591, %v2595
        %2599 = vrot.lane.b32.xlu0 %v1494, 64
        %v2600 = vpop.permute.xlu0 %2599
        %2601 = vrot.lane.b32.xlu0 %v1498, 64
        %v2602 = vpop.permute.xlu0 %2601
        %vm2603 = vcmask 523264
        %v2604 = vsel %vm2603, %v2600, %v2602
        %v2608 = vmul.f32 %v2596, %v2600
        %v2609 = vmul.f32 %v2597, %v2604
        %v2610 = vmul.f32 %v2598, %v2602
        %v2611 = vadd.f32 %v2608, 0.0
        %v2612 = vadd.f32 %v2609, 0.0
        %v2613 = vadd.f32 %v2610, 0.0
        %s2614 = sld [smem:[#allocation2 + $0x1d]]
        %s2615 = sld [smem:[#allocation2 + $0x4e]]
        %v2616 = vstv %s2614
        %v2617 = vmul.f32 %v2616, %v1455
        %v2618 = vmul.f32 %v2616, %v1451
        %v2619 = vmul.f32 %v2616, %v1456
        %v2620 = vstv %s2615
        %v2621 = vmul.f32 %v2620, %v1467
        %v2622 = vmul.f32 %v2620, %v1463
        %v2623 = vmul.f32 %v2620, %v1468
        %v2624 = vadd.f32 %v2617, %v2621
        %v2625 = vadd.f32 %v2618, %v2622
        %v2626 = vadd.f32 %v2619, %v2623
        %2627 = vrot.lane.b32.xlu0 %v1522, 65
        %v2628 = vpop.permute.xlu0 %2627
        %2629 = vrot.lane.b32.xlu0 %v1526, 65
        %v2630 = vpop.permute.xlu0 %2629
        %vm2631 = vcmask 531456
        %v2632 = vsel %vm2631, %v2628, %v2630
        %v2636 = vmul.f32 %v2624, %v2628
        %v2637 = vmul.f32 %v2625, %v2632
        %v2638 = vmul.f32 %v2626, %v2630
        %2642 = vrot.lane.b32.xlu0 %v2636, 127
        %v2643 = vpop.permute.xlu0 %2642
        %2644 = vrot.lane.b32.xlu0 %v2637, 127
        %v2645 = vpop.permute.xlu0 %2644
        %2646 = vrot.lane.b32.xlu0 %v2638, 127
        %v2647 = vpop.permute.xlu0 %2646
        %v2648 = vsel %vm1548, %v2643, %v2645
        %v2649 = vsel %vm1548, %v2645, %v2647
        %v2653 = vadd.f32 %v2611, %v2648
        %v2654 = vadd.f32 %v2612, %v2649
        %v2655 = vadd.f32 %v2613, %v2647
        %s2656 = sld [smem:[#allocation2 + $0x1e]]
        %s2657 = sld [smem:[#allocation2 + $0x4f]]
        %v2658 = vstv %s2656
        %v2659 = vmul.f32 %v2658, %v1455
        %v2660 = vmul.f32 %v2658, %v1451
        %v2661 = vmul.f32 %v2658, %v1456
        %v2662 = vstv %s2657
        %v2663 = vmul.f32 %v2662, %v1467
        %v2664 = vmul.f32 %v2662, %v1463
        %v2665 = vmul.f32 %v2662, %v1468
        %v2666 = vadd.f32 %v2659, %v2663
        %v2667 = vadd.f32 %v2660, %v2664
        %v2668 = vadd.f32 %v2661, %v2665
        %2669 = vrot.lane.b32.xlu0 %v1572, 66
        %v2670 = vpop.permute.xlu0 %2669
        %2671 = vrot.lane.b32.xlu0 %v1576, 66
        %v2672 = vpop.permute.xlu0 %2671
        %vm2673 = vcmask 539648
        %v2674 = vsel %vm2673, %v2670, %v2672
        %v2678 = vmul.f32 %v2666, %v2670
        %v2679 = vmul.f32 %v2667, %v2674
        %v2680 = vmul.f32 %v2668, %v2672
        %2684 = vrot.lane.b32.xlu0 %v2678, 126
        %v2685 = vpop.permute.xlu0 %2684
        %2686 = vrot.lane.b32.xlu0 %v2679, 126
        %v2687 = vpop.permute.xlu0 %2686
        %2688 = vrot.lane.b32.xlu0 %v2680, 126
        %v2689 = vpop.permute.xlu0 %2688
        %v2690 = vsel %vm1597, %v2685, %v2687
        %v2691 = vsel %vm1597, %v2687, %v2689
        %v2695 = vadd.f32 %v2653, %v2690
        %v2696 = vadd.f32 %v2654, %v2691
        %v2697 = vadd.f32 %v2655, %v2689
        %s2698 = sld [smem:[#allocation2 + $0x1f]]
        %s2699 = sld [smem:[#allocation2 + $0x50]]
        %v2700 = vstv %s2698
        %v2701 = vmul.f32 %v2700, %v1455
        %v2702 = vmul.f32 %v2700, %v1451
        %v2703 = vmul.f32 %v2700, %v1456
        %v2704 = vstv %s2699
        %v2705 = vmul.f32 %v2704, %v1467
        %v2706 = vmul.f32 %v2704, %v1463
        %v2707 = vmul.f32 %v2704, %v1468
        %v2708 = vadd.f32 %v2701, %v2705
        %v2709 = vadd.f32 %v2702, %v2706
        %v2710 = vadd.f32 %v2703, %v2707
        %2714 = vrot.lane.b32.xlu0 %v2708, 125
        %v2715 = vpop.permute.xlu0 %2714
        %2716 = vrot.lane.b32.xlu0 %v2709, 125
        %v2717 = vpop.permute.xlu0 %2716
        %2718 = vrot.lane.b32.xlu0 %v2710, 125
        %v2719 = vpop.permute.xlu0 %2718
        %v2720 = vsel %vm1626, %v2715, %v2717
        %v2721 = vsel %vm1626, %v2717, %v2719
        %v2725 = vadd.f32 %v2695, %v2720
        %v2726 = vadd.f32 %v2696, %v2721
        %v2727 = vadd.f32 %v2697, %v2719
        %s2728 = sld [smem:[#allocation2 + $0x20]]
        %s2729 = sld [smem:[#allocation2 + $0x51]]
        %v2730 = vstv %s2728
        %v2731 = vmul.f32 %v2730, %v1455
        %v2732 = vmul.f32 %v2730, %v1451
        %v2733 = vmul.f32 %v2730, %v1456
        %v2734 = vstv %s2729
        %v2735 = vmul.f32 %v2734, %v1467
        %v2736 = vmul.f32 %v2734, %v1463
        %v2737 = vmul.f32 %v2734, %v1468
        %v2738 = vadd.f32 %v2731, %v2735
        %v2739 = vadd.f32 %v2732, %v2736
        %v2740 = vadd.f32 %v2733, %v2737
        %2741 = vrot.lane.b32.xlu0 %v1650, 68
        %v2742 = vpop.permute.xlu0 %2741
        %2743 = vrot.lane.b32.xlu0 %v1654, 68
        %v2744 = vpop.permute.xlu0 %2743
        %vm2745 = vcmask 556032
        %v2746 = vsel %vm2745, %v2742, %v2744
        %v2750 = vmul.f32 %v2738, %v2742
        %v2751 = vmul.f32 %v2739, %v2746
        %v2752 = vmul.f32 %v2740, %v2744
        %2756 = vrot.lane.b32.xlu0 %v2750, 124
        %v2757 = vpop.permute.xlu0 %2756
        %2758 = vrot.lane.b32.xlu0 %v2751, 124
        %v2759 = vpop.permute.xlu0 %2758
        %2760 = vrot.lane.b32.xlu0 %v2752, 124
        %v2761 = vpop.permute.xlu0 %2760
        %v2762 = vsel %vm1676, %v2757, %v2759
        %v2763 = vsel %vm1676, %v2759, %v2761
        %v2767 = vadd.f32 %v2725, %v2762
        %v2768 = vadd.f32 %v2726, %v2763
        %v2769 = vadd.f32 %v2727, %v2761
        %s2770 = sld [smem:[#allocation2 + $0x21]]
        %s2771 = sld [smem:[#allocation2 + $0x52]]
        %v2772 = vstv %s2770
        %v2773 = vmul.f32 %v2772, %v1455
        %v2774 = vmul.f32 %v2772, %v1451
        %v2775 = vmul.f32 %v2772, %v1456
        %v2776 = vstv %s2771
        %v2777 = vmul.f32 %v2776, %v1467
        %v2778 = vmul.f32 %v2776, %v1463
        %v2779 = vmul.f32 %v2776, %v1468
        %v2780 = vadd.f32 %v2773, %v2777
        %v2781 = vadd.f32 %v2774, %v2778
        %v2782 = vadd.f32 %v2775, %v2779
        %2783 = vrot.lane.b32.xlu0 %v1700, 69
        %v2784 = vpop.permute.xlu0 %2783
        %2785 = vrot.lane.b32.xlu0 %v1704, 69
        %v2786 = vpop.permute.xlu0 %2785
        %vm2787 = vcmask 564224
        %v2788 = vsel %vm2787, %v2784, %v2786
        %v2792 = vmul.f32 %v2780, %v2784
        %v2793 = vmul.f32 %v2781, %v2788
        %v2794 = vmul.f32 %v2782, %v2786
        %2798 = vrot.lane.b32.xlu0 %v2792, 123
        %v2799 = vpop.permute.xlu0 %2798
        %2800 = vrot.lane.b32.xlu0 %v2793, 123
        %v2801 = vpop.permute.xlu0 %2800
        %2802 = vrot.lane.b32.xlu0 %v2794, 123
        %v2803 = vpop.permute.xlu0 %2802
        %v2804 = vsel %vm1726, %v2799, %v2801
        %v2805 = vsel %vm1726, %v2801, %v2803
        %v2809 = vadd.f32 %v2767, %v2804
        %v2810 = vadd.f32 %v2768, %v2805
        %v2811 = vadd.f32 %v2769, %v2803
        %s2812 = sld [smem:[#allocation2 + $0x22]]
        %s2813 = sld [smem:[#allocation2 + $0x53]]
        %v2814 = vstv %s2812
        %v2815 = vmul.f32 %v2814, %v1455
        %v2816 = vmul.f32 %v2814, %v1451
        %v2817 = vmul.f32 %v2814, %v1456
        %v2818 = vstv %s2813
        %v2819 = vmul.f32 %v2818, %v1467
        %v2820 = vmul.f32 %v2818, %v1463
        %v2821 = vmul.f32 %v2818, %v1468
        %v2822 = vadd.f32 %v2815, %v2819
        %v2823 = vadd.f32 %v2816, %v2820
        %v2824 = vadd.f32 %v2817, %v2821
        %2825 = vrot.lane.b32.xlu0 %v1750, 70
        %v2826 = vpop.permute.xlu0 %2825
        %2827 = vrot.lane.b32.xlu0 %v1754, 70
        %v2828 = vpop.permute.xlu0 %2827
        %vm2829 = vcmask 572416
        %v2830 = vsel %vm2829, %v2826, %v2828
        %v2834 = vmul.f32 %v2822, %v2826
        %v2835 = vmul.f32 %v2823, %v2830
        %v2836 = vmul.f32 %v2824, %v2828
        %2840 = vrot.lane.b32.xlu0 %v2834, 122
        %v2841 = vpop.permute.xlu0 %2840
        %2842 = vrot.lane.b32.xlu0 %v2835, 122
        %v2843 = vpop.permute.xlu0 %2842
        %2844 = vrot.lane.b32.xlu0 %v2836, 122
        %v2845 = vpop.permute.xlu0 %2844
        %v2846 = vsel %vm1776, %v2841, %v2843
        %v2847 = vsel %vm1776, %v2843, %v2845
        %v2851 = vadd.f32 %v2809, %v2846
        %v2852 = vadd.f32 %v2810, %v2847
        %v2853 = vadd.f32 %v2811, %v2845
        %s2854 = sld [smem:[#allocation2 + $0x23]]
        %s2855 = sld [smem:[#allocation2 + $0x54]]
        %v2856 = vstv %s2854
        %v2857 = vmul.f32 %v2856, %v1455
        %v2858 = vmul.f32 %v2856, %v1451
        %v2859 = vmul.f32 %v2856, %v1456
        %v2860 = vstv %s2855
        %v2861 = vmul.f32 %v2860, %v1467
        %v2862 = vmul.f32 %v2860, %v1463
        %v2863 = vmul.f32 %v2860, %v1468
        %v2864 = vadd.f32 %v2857, %v2861
        %v2865 = vadd.f32 %v2858, %v2862
        %v2866 = vadd.f32 %v2859, %v2863
        %2867 = vrot.lane.b32.xlu0 %v1494, 80
        %v2868 = vpop.permute.xlu0 %2867
        %2869 = vrot.lane.b32.xlu0 %v1498, 80
        %v2870 = vpop.permute.xlu0 %2869
        %vm2871 = vcmask 654336
        %v2872 = vsel %vm2871, %v2868, %v2870
        %v2876 = vmul.f32 %v2864, %v2868
        %v2877 = vmul.f32 %v2865, %v2872
        %v2878 = vmul.f32 %v2866, %v2870
        %v2879 = vadd.f32 %v2876, 0.0
        %v2880 = vadd.f32 %v2877, 0.0
        %v2881 = vadd.f32 %v2878, 0.0
        %s2882 = sld [smem:[#allocation2 + $0x24]]
        %s2883 = sld [smem:[#allocation2 + $0x55]]
        %v2884 = vstv %s2882
        %v2885 = vmul.f32 %v2884, %v1455
        %v2886 = vmul.f32 %v2884, %v1451
        %v2887 = vmul.f32 %v2884, %v1456
        %v2888 = vstv %s2883
        %v2889 = vmul.f32 %v2888, %v1467
        %v2890 = vmul.f32 %v2888, %v1463
        %v2891 = vmul.f32 %v2888, %v1468
        %v2892 = vadd.f32 %v2885, %v2889
        %v2893 = vadd.f32 %v2886, %v2890
        %v2894 = vadd.f32 %v2887, %v2891
        %2895 = vrot.lane.b32.xlu0 %v1522, 81
        %v2896 = vpop.permute.xlu0 %2895
        %2897 = vrot.lane.b32.xlu0 %v1526, 81
        %v2898 = vpop.permute.xlu0 %2897
        %vm2899 = vcmask 662528
        %v2900 = vsel %vm2899, %v2896, %v2898
        %v2904 = vmul.f32 %v2892, %v2896
        %v2905 = vmul.f32 %v2893, %v2900
        %v2906 = vmul.f32 %v2894, %v2898
        %2910 = vrot.lane.b32.xlu0 %v2904, 127
        %v2911 = vpop.permute.xlu0 %2910
        %2912 = vrot.lane.b32.xlu0 %v2905, 127
        %v2913 = vpop.permute.xlu0 %2912
        %2914 = vrot.lane.b32.xlu0 %v2906, 127
        %v2915 = vpop.permute.xlu0 %2914
        %v2916 = vsel %vm1548, %v2911, %v2913
        %v2917 = vsel %vm1548, %v2913, %v2915
        %v2921 = vadd.f32 %v2879, %v2916
        %v2922 = vadd.f32 %v2880, %v2917
        %v2923 = vadd.f32 %v2881, %v2915
        %s2924 = sld [smem:[#allocation2 + $0x25]]
        %s2925 = sld [smem:[#allocation2 + $0x56]]
        %v2926 = vstv %s2924
        %v2927 = vmul.f32 %v2926, %v1455
        %v2928 = vmul.f32 %v2926, %v1451
        %v2929 = vmul.f32 %v2926, %v1456
        %v2930 = vstv %s2925
        %v2931 = vmul.f32 %v2930, %v1467
        %v2932 = vmul.f32 %v2930, %v1463
        %v2933 = vmul.f32 %v2930, %v1468
        %v2934 = vadd.f32 %v2927, %v2931
        %v2935 = vadd.f32 %v2928, %v2932
        %v2936 = vadd.f32 %v2929, %v2933
        %2937 = vrot.lane.b32.xlu0 %v1572, 82
        %v2938 = vpop.permute.xlu0 %2937
        %2939 = vrot.lane.b32.xlu0 %v1576, 82
        %v2940 = vpop.permute.xlu0 %2939
        %vm2941 = vcmask 670720
        %v2942 = vsel %vm2941, %v2938, %v2940
        %v2946 = vmul.f32 %v2934, %v2938
        %v2947 = vmul.f32 %v2935, %v2942
        %v2948 = vmul.f32 %v2936, %v2940
        %2952 = vrot.lane.b32.xlu0 %v2946, 126
        %v2953 = vpop.permute.xlu0 %2952
        %2954 = vrot.lane.b32.xlu0 %v2947, 126
        %v2955 = vpop.permute.xlu0 %2954
        %2956 = vrot.lane.b32.xlu0 %v2948, 126
        %v2957 = vpop.permute.xlu0 %2956
        %v2958 = vsel %vm1597, %v2953, %v2955
        %v2959 = vsel %vm1597, %v2955, %v2957
        %v2963 = vadd.f32 %v2921, %v2958
        %v2964 = vadd.f32 %v2922, %v2959
        %v2965 = vadd.f32 %v2923, %v2957
        %s2966 = sld [smem:[#allocation2 + $0x26]]
        %s2967 = sld [smem:[#allocation2 + $0x57]]
        %v2968 = vstv %s2966
        %v2969 = vmul.f32 %v2968, %v1455
        %v2970 = vmul.f32 %v2968, %v1451
        %v2971 = vmul.f32 %v2968, %v1456
        %v2972 = vstv %s2967
        %v2973 = vmul.f32 %v2972, %v1467
        %v2974 = vmul.f32 %v2972, %v1463
        %v2975 = vmul.f32 %v2972, %v1468
        %v2976 = vadd.f32 %v2969, %v2973
        %v2977 = vadd.f32 %v2970, %v2974
        %v2978 = vadd.f32 %v2971, %v2975
        %2982 = vrot.lane.b32.xlu0 %v2976, 125
        %v2983 = vpop.permute.xlu0 %2982
        %2984 = vrot.lane.b32.xlu0 %v2977, 125
        %v2985 = vpop.permute.xlu0 %2984
        %2986 = vrot.lane.b32.xlu0 %v2978, 125
        %v2987 = vpop.permute.xlu0 %2986
        %v2988 = vsel %vm1626, %v2983, %v2985
        %v2989 = vsel %vm1626, %v2985, %v2987
        %v2993 = vadd.f32 %v2963, %v2988
        %v2994 = vadd.f32 %v2964, %v2989
        %v2995 = vadd.f32 %v2965, %v2987
        %s2996 = sld [smem:[#allocation2 + $0x27]]
        %s2997 = sld [smem:[#allocation2 + $0x58]]
        %v2998 = vstv %s2996
        %v2999 = vmul.f32 %v2998, %v1455
        %v3000 = vmul.f32 %v2998, %v1451
        %v3001 = vmul.f32 %v2998, %v1456
        %v3002 = vstv %s2997
        %v3003 = vmul.f32 %v3002, %v1467
        %v3004 = vmul.f32 %v3002, %v1463
        %v3005 = vmul.f32 %v3002, %v1468
        %v3006 = vadd.f32 %v2999, %v3003
        %v3007 = vadd.f32 %v3000, %v3004
        %v3008 = vadd.f32 %v3001, %v3005
        %3009 = vrot.lane.b32.xlu0 %v1650, 84
        %v3010 = vpop.permute.xlu0 %3009
        %3011 = vrot.lane.b32.xlu0 %v1654, 84
        %v3012 = vpop.permute.xlu0 %3011
        %vm3013 = vcmask 687104
        %v3014 = vsel %vm3013, %v3010, %v3012
        %v3018 = vmul.f32 %v3006, %v3010
        %v3019 = vmul.f32 %v3007, %v3014
        %v3020 = vmul.f32 %v3008, %v3012
        %3024 = vrot.lane.b32.xlu0 %v3018, 124
        %v3025 = vpop.permute.xlu0 %3024
        %3026 = vrot.lane.b32.xlu0 %v3019, 124
        %v3027 = vpop.permute.xlu0 %3026
        %3028 = vrot.lane.b32.xlu0 %v3020, 124
        %v3029 = vpop.permute.xlu0 %3028
        %v3030 = vsel %vm1676, %v3025, %v3027
        %v3031 = vsel %vm1676, %v3027, %v3029
        %v3035 = vadd.f32 %v2993, %v3030
        %v3036 = vadd.f32 %v2994, %v3031
        %v3037 = vadd.f32 %v2995, %v3029
        %s3038 = sld [smem:[#allocation2 + $0x28]]
        %s3039 = sld [smem:[#allocation2 + $0x59]]
        %v3040 = vstv %s3038
        %v3041 = vmul.f32 %v3040, %v1455
        %v3042 = vmul.f32 %v3040, %v1451
        %v3043 = vmul.f32 %v3040, %v1456
        %v3044 = vstv %s3039
        %v3045 = vmul.f32 %v3044, %v1467
        %v3046 = vmul.f32 %v3044, %v1463
        %v3047 = vmul.f32 %v3044, %v1468
        %v3048 = vadd.f32 %v3041, %v3045
        %v3049 = vadd.f32 %v3042, %v3046
        %v3050 = vadd.f32 %v3043, %v3047
        %3051 = vrot.lane.b32.xlu0 %v1700, 85
        %v3052 = vpop.permute.xlu0 %3051
        %3053 = vrot.lane.b32.xlu0 %v1704, 85
        %v3054 = vpop.permute.xlu0 %3053
        %vm3055 = vcmask 695296
        %v3056 = vsel %vm3055, %v3052, %v3054
        %v3060 = vmul.f32 %v3048, %v3052
        %v3061 = vmul.f32 %v3049, %v3056
        %v3062 = vmul.f32 %v3050, %v3054
        %3066 = vrot.lane.b32.xlu0 %v3060, 123
        %v3067 = vpop.permute.xlu0 %3066
        %3068 = vrot.lane.b32.xlu0 %v3061, 123
        %v3069 = vpop.permute.xlu0 %3068
        %3070 = vrot.lane.b32.xlu0 %v3062, 123
        %v3071 = vpop.permute.xlu0 %3070
        %v3072 = vsel %vm1726, %v3067, %v3069
        %v3073 = vsel %vm1726, %v3069, %v3071
        %v3077 = vadd.f32 %v3035, %v3072
        %v3078 = vadd.f32 %v3036, %v3073
        %v3079 = vadd.f32 %v3037, %v3071
        %s3080 = sld [smem:[#allocation2 + $0x29]]
        %s3081 = sld [smem:[#allocation2 + $0x5a]]
        %v3082 = vstv %s3080
        %v3083 = vmul.f32 %v3082, %v1455
        %v3084 = vmul.f32 %v3082, %v1451
        %v3085 = vmul.f32 %v3082, %v1456
        %v3086 = vstv %s3081
        %v3087 = vmul.f32 %v3086, %v1467
        %v3088 = vmul.f32 %v3086, %v1463
        %v3089 = vmul.f32 %v3086, %v1468
        %v3090 = vadd.f32 %v3083, %v3087
        %v3091 = vadd.f32 %v3084, %v3088
        %v3092 = vadd.f32 %v3085, %v3089
        %3093 = vrot.lane.b32.xlu0 %v1750, 86
        %v3094 = vpop.permute.xlu0 %3093
        %3095 = vrot.lane.b32.xlu0 %v1754, 86
        %v3096 = vpop.permute.xlu0 %3095
        %vm3097 = vcmask 703488
        %v3098 = vsel %vm3097, %v3094, %v3096
        %v3102 = vmul.f32 %v3090, %v3094
        %v3103 = vmul.f32 %v3091, %v3098
        %v3104 = vmul.f32 %v3092, %v3096
        %3108 = vrot.lane.b32.xlu0 %v3102, 122
        %v3109 = vpop.permute.xlu0 %3108
        %3110 = vrot.lane.b32.xlu0 %v3103, 122
        %v3111 = vpop.permute.xlu0 %3110
        %3112 = vrot.lane.b32.xlu0 %v3104, 122
        %v3113 = vpop.permute.xlu0 %3112
        %v3114 = vsel %vm1776, %v3109, %v3111
        %v3115 = vsel %vm1776, %v3111, %v3113
        %v3119 = vadd.f32 %v3077, %v3114
        %v3120 = vadd.f32 %v3078, %v3115
        %v3121 = vadd.f32 %v3079, %v3113
        %s3122 = sld [smem:[#allocation2 + $0x2a]]
        %s3123 = sld [smem:[#allocation2 + $0x5b]]
        %v3124 = vstv %s3122
        %v3125 = vmul.f32 %v3124, %v1455
        %v3126 = vmul.f32 %v3124, %v1451
        %v3127 = vmul.f32 %v3124, %v1456
        %v3128 = vstv %s3123
        %v3129 = vmul.f32 %v3128, %v1467
        %v3130 = vmul.f32 %v3128, %v1463
        %v3131 = vmul.f32 %v3128, %v1468
        %v3132 = vadd.f32 %v3125, %v3129
        %v3133 = vadd.f32 %v3126, %v3130
        %v3134 = vadd.f32 %v3127, %v3131
        %3135 = vrot.lane.b32.xlu0 %v1494, 96
        %v3136 = vpop.permute.xlu0 %3135
        %3137 = vrot.lane.b32.xlu0 %v1498, 96
        %v3138 = vpop.permute.xlu0 %3137
        %vm3139 = vcmask 785408
        %v3140 = vsel %vm3139, %v3136, %v3138
        %v3144 = vmul.f32 %v3132, %v3136
        %v3145 = vmul.f32 %v3133, %v3140
        %v3146 = vmul.f32 %v3134, %v3138
        %v3147 = vadd.f32 %v3144, 0.0
        %v3148 = vadd.f32 %v3145, 0.0
        %v3149 = vadd.f32 %v3146, 0.0
        %s3150 = sld [smem:[#allocation2 + $0x2b]]
        %s3151 = sld [smem:[#allocation2 + $0x5c]]
        %v3152 = vstv %s3150
        %v3153 = vmul.f32 %v3152, %v1455
        %v3154 = vmul.f32 %v3152, %v1451
        %v3155 = vmul.f32 %v3152, %v1456
        %v3156 = vstv %s3151
        %v3157 = vmul.f32 %v3156, %v1467
        %v3158 = vmul.f32 %v3156, %v1463
        %v3159 = vmul.f32 %v3156, %v1468
        %v3160 = vadd.f32 %v3153, %v3157
        %v3161 = vadd.f32 %v3154, %v3158
        %v3162 = vadd.f32 %v3155, %v3159
        %3163 = vrot.lane.b32.xlu0 %v1522, 97
        %v3164 = vpop.permute.xlu0 %3163
        %3165 = vrot.lane.b32.xlu0 %v1526, 97
        %v3166 = vpop.permute.xlu0 %3165
        %vm3167 = vcmask 793600
        %v3168 = vsel %vm3167, %v3164, %v3166
        %v3172 = vmul.f32 %v3160, %v3164
        %v3173 = vmul.f32 %v3161, %v3168
        %v3174 = vmul.f32 %v3162, %v3166
        %3178 = vrot.lane.b32.xlu0 %v3172, 127
        %v3179 = vpop.permute.xlu0 %3178
        %3180 = vrot.lane.b32.xlu0 %v3173, 127
        %v3181 = vpop.permute.xlu0 %3180
        %3182 = vrot.lane.b32.xlu0 %v3174, 127
        %v3183 = vpop.permute.xlu0 %3182
        %v3184 = vsel %vm1548, %v3179, %v3181
        %v3185 = vsel %vm1548, %v3181, %v3183
        %v3189 = vadd.f32 %v3147, %v3184
        %v3190 = vadd.f32 %v3148, %v3185
        %v3191 = vadd.f32 %v3149, %v3183
        %s3192 = sld [smem:[#allocation2 + $0x2c]]
        %s3193 = sld [smem:[#allocation2 + $0x5d]]
        %v3194 = vstv %s3192
        %v3195 = vmul.f32 %v3194, %v1455
        %v3196 = vmul.f32 %v3194, %v1451
        %v3197 = vmul.f32 %v3194, %v1456
        %v3198 = vstv %s3193
        %v3199 = vmul.f32 %v3198, %v1467
        %v3200 = vmul.f32 %v3198, %v1463
        %v3201 = vmul.f32 %v3198, %v1468
        %v3202 = vadd.f32 %v3195, %v3199
        %v3203 = vadd.f32 %v3196, %v3200
        %v3204 = vadd.f32 %v3197, %v3201
        %3205 = vrot.lane.b32.xlu0 %v1572, 98
        %v3206 = vpop.permute.xlu0 %3205
        %3207 = vrot.lane.b32.xlu0 %v1576, 98
        %v3208 = vpop.permute.xlu0 %3207
        %vm3209 = vcmask 801792
        %v3210 = vsel %vm3209, %v3206, %v3208
        %v3214 = vmul.f32 %v3202, %v3206
        %v3215 = vmul.f32 %v3203, %v3210
        %v3216 = vmul.f32 %v3204, %v3208
        %3220 = vrot.lane.b32.xlu0 %v3214, 126
        %v3221 = vpop.permute.xlu0 %3220
        %3222 = vrot.lane.b32.xlu0 %v3215, 126
        %v3223 = vpop.permute.xlu0 %3222
        %3224 = vrot.lane.b32.xlu0 %v3216, 126
        %v3225 = vpop.permute.xlu0 %3224
        %v3226 = vsel %vm1597, %v3221, %v3223
        %v3227 = vsel %vm1597, %v3223, %v3225
        %v3231 = vadd.f32 %v3189, %v3226
        %v3232 = vadd.f32 %v3190, %v3227
        %v3233 = vadd.f32 %v3191, %v3225
        %s3234 = sld [smem:[#allocation2 + $0x2d]]
        %s3235 = sld [smem:[#allocation2 + $0x5e]]
        %v3236 = vstv %s3234
        %v3237 = vmul.f32 %v3236, %v1455
        %v3238 = vmul.f32 %v3236, %v1451
        %v3239 = vmul.f32 %v3236, %v1456
        %v3240 = vstv %s3235
        %v3241 = vmul.f32 %v3240, %v1467
        %v3242 = vmul.f32 %v3240, %v1463
        %v3243 = vmul.f32 %v3240, %v1468
        %v3244 = vadd.f32 %v3237, %v3241
        %v3245 = vadd.f32 %v3238, %v3242
        %v3246 = vadd.f32 %v3239, %v3243
        %3250 = vrot.lane.b32.xlu0 %v3244, 125
        %v3251 = vpop.permute.xlu0 %3250
        %3252 = vrot.lane.b32.xlu0 %v3245, 125
        %v3253 = vpop.permute.xlu0 %3252
        %3254 = vrot.lane.b32.xlu0 %v3246, 125
        %v3255 = vpop.permute.xlu0 %3254
        %v3256 = vsel %vm1626, %v3251, %v3253
        %v3257 = vsel %vm1626, %v3253, %v3255
        %v3261 = vadd.f32 %v3231, %v3256
        %v3262 = vadd.f32 %v3232, %v3257
        %v3263 = vadd.f32 %v3233, %v3255
        %s3264 = sld [smem:[#allocation2 + $0x2e]]
        %s3265 = sld [smem:[#allocation2 + $0x5f]]
        %v3266 = vstv %s3264
        %v3267 = vmul.f32 %v3266, %v1455
        %v3268 = vmul.f32 %v3266, %v1451
        %v3269 = vmul.f32 %v3266, %v1456
        %v3270 = vstv %s3265
        %v3271 = vmul.f32 %v3270, %v1467
        %v3272 = vmul.f32 %v3270, %v1463
        %v3273 = vmul.f32 %v3270, %v1468
        %v3274 = vadd.f32 %v3267, %v3271
        %v3275 = vadd.f32 %v3268, %v3272
        %v3276 = vadd.f32 %v3269, %v3273
        %3277 = vrot.lane.b32.xlu0 %v1650, 100
        %v3278 = vpop.permute.xlu0 %3277
        %3279 = vrot.lane.b32.xlu0 %v1654, 100
        %v3280 = vpop.permute.xlu0 %3279
        %vm3281 = vcmask 818176
        %v3282 = vsel %vm3281, %v3278, %v3280
        %v3286 = vmul.f32 %v3274, %v3278
        %v3287 = vmul.f32 %v3275, %v3282
        %v3288 = vmul.f32 %v3276, %v3280
        %3292 = vrot.lane.b32.xlu0 %v3286, 124
        %v3293 = vpop.permute.xlu0 %3292
        %3294 = vrot.lane.b32.xlu0 %v3287, 124
        %v3295 = vpop.permute.xlu0 %3294
        %3296 = vrot.lane.b32.xlu0 %v3288, 124
        %v3297 = vpop.permute.xlu0 %3296
        %v3298 = vsel %vm1676, %v3293, %v3295
        %v3299 = vsel %vm1676, %v3295, %v3297
        %v3303 = vadd.f32 %v3261, %v3298
        %v3304 = vadd.f32 %v3262, %v3299
        %v3305 = vadd.f32 %v3263, %v3297
        %s3306 = sld [smem:[#allocation2 + $0x2f]]
        %s3307 = sld [smem:[#allocation2 + $0x60]]
        %v3308 = vstv %s3306
        %v3309 = vmul.f32 %v3308, %v1455
        %v3310 = vmul.f32 %v3308, %v1451
        %v3311 = vmul.f32 %v3308, %v1456
        %v3312 = vstv %s3307
        %v3313 = vmul.f32 %v3312, %v1467
        %v3314 = vmul.f32 %v3312, %v1463
        %v3315 = vmul.f32 %v3312, %v1468
        %v3316 = vadd.f32 %v3309, %v3313
        %v3317 = vadd.f32 %v3310, %v3314
        %v3318 = vadd.f32 %v3311, %v3315
        %3319 = vrot.lane.b32.xlu0 %v1700, 101
        %v3320 = vpop.permute.xlu0 %3319
        %3321 = vrot.lane.b32.xlu0 %v1704, 101
        %v3322 = vpop.permute.xlu0 %3321
        %vm3323 = vcmask 826368
        %v3324 = vsel %vm3323, %v3320, %v3322
        %v3328 = vmul.f32 %v3316, %v3320
        %v3329 = vmul.f32 %v3317, %v3324
        %v3330 = vmul.f32 %v3318, %v3322
        %3334 = vrot.lane.b32.xlu0 %v3328, 123
        %v3335 = vpop.permute.xlu0 %3334
        %3336 = vrot.lane.b32.xlu0 %v3329, 123
        %v3337 = vpop.permute.xlu0 %3336
        %3338 = vrot.lane.b32.xlu0 %v3330, 123
        %v3339 = vpop.permute.xlu0 %3338
        %v3340 = vsel %vm1726, %v3335, %v3337
        %v3341 = vsel %vm1726, %v3337, %v3339
        %v3345 = vadd.f32 %v3303, %v3340
        %v3346 = vadd.f32 %v3304, %v3341
        %v3347 = vadd.f32 %v3305, %v3339
        %s3348 = sld [smem:[#allocation2 + $0x30]]
        %s3349 = sld [smem:[#allocation2 + $0x61]]
        %v3350 = vstv %s3348
        %v3351 = vmul.f32 %v3350, %v1455
        %v3352 = vmul.f32 %v3350, %v1451
        %v3353 = vmul.f32 %v3350, %v1456
        %v3354 = vstv %s3349
        %v3355 = vmul.f32 %v3354, %v1467
        %v3356 = vmul.f32 %v3354, %v1463
        %v3357 = vmul.f32 %v3354, %v1468
        %v3358 = vadd.f32 %v3351, %v3355
        %v3359 = vadd.f32 %v3352, %v3356
        %v3360 = vadd.f32 %v3353, %v3357
        %3361 = vrot.lane.b32.xlu0 %v1750, 102
        %v3362 = vpop.permute.xlu0 %3361
        %3363 = vrot.lane.b32.xlu0 %v1754, 102
        %v3364 = vpop.permute.xlu0 %3363
        %vm3365 = vcmask 834560
        %v3366 = vsel %vm3365, %v3362, %v3364
        %v3370 = vmul.f32 %v3358, %v3362
        %v3371 = vmul.f32 %v3359, %v3366
        %v3372 = vmul.f32 %v3360, %v3364
        %3376 = vrot.lane.b32.xlu0 %v3370, 122
        %v3377 = vpop.permute.xlu0 %3376
        %3378 = vrot.lane.b32.xlu0 %v3371, 122
        %v3379 = vpop.permute.xlu0 %3378
        %3380 = vrot.lane.b32.xlu0 %v3372, 122
        %v3381 = vpop.permute.xlu0 %3380
        %v3382 = vsel %vm1776, %v3377, %v3379
        %v3383 = vsel %vm1776, %v3379, %v3381
        %v3387 = vadd.f32 %v3345, %v3382
        %v3388 = vadd.f32 %v3346, %v3383
        %v3389 = vadd.f32 %v3347, %v3381
        %3393 = vrot.lane.b32.xlu0 %v2048, 112
        %v3394 = vpop.permute.xlu0 %3393
        %3395 = vrot.lane.b32.xlu0 %v2049, 112
        %v3396 = vpop.permute.xlu0 %3395
        %3397 = vrot.lane.b32.xlu0 %v2050, 112
        %v3398 = vpop.permute.xlu0 %3397
        %vm3399 = vcmask 916480
        %v3400 = vsel %vm3399, %v3394, %v3396
        %v3401 = vsel %vm3399, %v3396, %v3398
        %v3404 = vadd.f32 %v1781, %v3400
        %v3405 = vadd.f32 %v1782, %v3401
        %3409 = vrot.lane.b32.xlu0 %v2583, 112
        %v3410 = vpop.permute.xlu0 %3409
        %3411 = vrot.lane.b32.xlu0 %v2584, 112
        %v3412 = vpop.permute.xlu0 %3411
        %3413 = vrot.lane.b32.xlu0 %v2585, 112
        %v3414 = vpop.permute.xlu0 %3413
        %v3415 = vsel %vm3399, %v3410, %v3412
        %v3416 = vsel %vm3399, %v3412, %v3414
        %v3420 = vadd.f32 %v2315, %v3415
        %v3421 = vadd.f32 %v2316, %v3416
        %v3422 = vadd.f32 %v2317, %v3414
        %3426 = vrot.lane.b32.xlu0 %v3119, 112
        %v3427 = vpop.permute.xlu0 %3426
        %3428 = vrot.lane.b32.xlu0 %v3120, 112
        %v3429 = vpop.permute.xlu0 %3428
        %3430 = vrot.lane.b32.xlu0 %v3121, 112
        %v3431 = vpop.permute.xlu0 %3430
        %v3432 = vsel %vm3399, %v3427, %v3429
        %v3433 = vsel %vm3399, %v3429, %v3431
        %v3437 = vadd.f32 %v2851, %v3432
        %v3438 = vadd.f32 %v2852, %v3433
        %v3439 = vadd.f32 %v2853, %v3431
        %3443 = vrot.lane.b32.xlu0 %v3420, 96
        %v3444 = vpop.permute.xlu0 %3443
        %3445 = vrot.lane.b32.xlu0 %v3421, 96
        %v3446 = vpop.permute.xlu0 %3445
        %3447 = vrot.lane.b32.xlu0 %v3422, 96
        %v3448 = vpop.permute.xlu0 %3447
        %v3449 = vsel %vm3139, %v3444, %v3446
        %v3450 = vsel %vm3139, %v3446, %v3448
        %v3453 = vadd.f32 %v3404, %v3449
        %v3454 = vadd.f32 %v3405, %v3450
        %3458 = vrot.lane.b32.xlu0 %v3387, 96
        %v3459 = vpop.permute.xlu0 %3458
        %3460 = vrot.lane.b32.xlu0 %v3388, 96
        %v3461 = vpop.permute.xlu0 %3460
        %3462 = vrot.lane.b32.xlu0 %v3389, 96
        %v3463 = vpop.permute.xlu0 %3462
        %v3464 = vsel %vm3139, %v3459, %v3461
        %v3465 = vsel %vm3139, %v3461, %v3463
        %v3469 = vadd.f32 %v3437, %v3464
        %v3470 = vadd.f32 %v3438, %v3465
        %v3471 = vadd.f32 %v3439, %v3463
        %3475 = vrot.lane.b32.xlu0 %v3469, 64
        %v3476 = vpop.permute.xlu0 %3475
        %3477 = vrot.lane.b32.xlu0 %v3470, 64
        %v3478 = vpop.permute.xlu0 %3477
        %3479 = vrot.lane.b32.xlu0 %v3471, 64
        %v3480 = vpop.permute.xlu0 %3479
        %v3481 = vsel %vm2603, %v3476, %v3478
        %v3482 = vsel %vm2603, %v3478, %v3480
        %v3485 = vadd.f32 %v3453, %v3481
        %v3486 = vadd.f32 %v3454, %v3482
        %v3487 = vxor.u32 %v3485, 2147483648
        %v3488 = vxor.u32 %v3486, 2147483648
        %v3489 = vmul.f32 %v3487, 1.442695
        %v3490 = vpow.pop %v3489
        %v3491 = vmul.f32 %v3488, 1.442695
        %v3492 = vpow.pop %v3491
        %v3493 = vadd.f32 %v3490, 1.0
        %v3494 = vadd.f32 %v3492, 1.0
        %v3495 = vrcp.pop %v3493
        %v3496 = vmul.f32 1.0, %v3495
        %v3497 = vrcp.pop %v3494
        %v3498 = vmul.f32 1.0, %v3497
        %v3499 = vlaneseq
        %v3500 = vshrl.u32 %v3499, 7
        %v3501 = vsub.s32 0, %v3500
        %v3502 = vrot.slane %v3496, %v3501
        %v3503 = vlaneseq
        %v3504 = vshrl.u32 %v3503, 7
        %v3505 = vsub.s32 0, %v3504
        %v3506 = vrot.slane %v3498, %v3505
        %v3507 = vmul.f32 %v1397, %v3502
        %v3508 = vmul.f32 %v1398, %v3506
        %v3509 = vmul.f32 %v1399, %v3502
        %v3510 = vmul.f32 %v1400, %v3506
        %v3511 = vmul.f32 %v1401, %v3502
        %v3512 = vmul.f32 %v1402, %v3506
        %v3513 = vmul.f32 %v1403, %v3502
        %v3514 = vmul.f32 %v1404, %v3506
        %3515 = vst [vmem:[%s310] sm:$0xff] %v3507
        %3516 = vst [vmem:[%s310 + $0x8] sm:$0xff] %v3508
        %3517 = vst [vmem:[%s310 + $0x10] sm:$0xff] %v3509
        %3518 = vst [vmem:[%s310 + $0x18] sm:$0xff] %v3510
        %3519 = vst [vmem:[%s310 + $0x20] sm:$0xff] %v3511
        %3520 = vst [vmem:[%s310 + $0x28] sm:$0xff] %v3512
        %3521 = vst [vmem:[%s310 + $0x30] sm:$0xff] %v3513
        %3522 = vst [vmem:[%s310 + $0x38] sm:$0xff] %v3514
        %s3523 = sand.u32 %s185, 1
        %s3524 = scalar_lea.sflag [#allocation4], %s3523
        %s3525 = sand.u32 %s185, 1
        %s3526 = smul.addr %s3525, 64
        %s3527 = scalar_lea.vmem [#allocation7], %s3526
        // Predicated region
        $region57: #{tpu_custom_call.1} parent=47 // pred_check
          %p3528 = pneg %p195
        $region58: #{tpu_custom_call.1} parent=47 // pred_check_branch
          %3530 = sbr.rel (%p3528) target = $region60
        $region59: #{tpu_custom_call.1} parent=47 // pred_region
          %s3532 = ssub.s32 1024, 1024
          %3533 = vsyncadd %s3524, %s3532
          %s3534 = smul.addr %s25, 8
          %s3535 = smul.addr %s3534, 128
          %s3536 = scalar_lea.hbm %s7, %s3535
          %s3537 = sshll.u32 %s3527, 4
          %s3538 = int_to_ptr.vmem [resolvable:$true] %s3537
          %3543 = dma.vmem_to_hbm [thread:$0]  %s3538, 1024, %s3536, %s3524, 256, 256, 16
        $region60: #{tpu_custom_call.1} parent=47 // pred_fallthru
          _
      $region48: #{tpu_custom_call.1} parent=5 // pred_fallthru
        _
      %p3544 = scmp.le.s32.totalorder 2, %s20
      // Predicated region
      $region61: #{tpu_custom_call.1} parent=5 // pred_check
        %p3545 = pneg %p3544
      $region62: #{tpu_custom_call.1} parent=5 // pred_check_branch
        %3547 = sbr.rel (%p3545) target = $region64
      $region63: #{tpu_custom_call.1} parent=5 // pred_region
        %s3548 = ssub.s32 %s20, 2
        // Predicated region
        $region65: #{tpu_custom_call.1} parent=63 // pred_check
          %p3549 = pneg %p201
        $region66: #{tpu_custom_call.1} parent=63 // pred_check_branch
          %3551 = sbr.rel (%p3549) target = $region68
        $region67: #{tpu_custom_call.1} parent=63 // pred_region
          %s3552 = sand.u32 %s186, 1
          %s3553 = scalar_lea.sflag [#allocation4], %s3552
          %s3554 = sand.u32 %s186, 1
          %s3555 = smul.addr %s3554, 64
          %s3556 = scalar_lea.vmem [#allocation7], %s3555
          %3557 = dma.done %s3553, 1024
        $region68: #{tpu_custom_call.1} parent=63 // pred_fallthru
          _
      $region64: #{tpu_custom_call.1} parent=5 // pred_fallthru
        _
    $region6: #{tpu_custom_call.1} parent=1 // loop_footer
      %s24 = sadd.s32 1, %s20
    $region7: #{tpu_custom_call.1} parent=1 // loop_footer_branch
      %19 = sbr.rel target = $region3
    $region8: #{tpu_custom_call.1} parent=1 // loop_exit
      _
    %3558 = vsyncpa [#allocation3], 1
    %s3559 = scalar_lea.sflag [#allocation3], 1
    %3560 = vsyncpa %s3559, 1
    %3561 = vsyncpa [#allocation4], 1
    %s3562 = scalar_lea.sflag [#allocation4], 1
    %3563 = vsyncpa %s3562, 1
    %3564 = vsyncpa [#allocation5], 1
    %s3565 = scalar_lea.sflag [#allocation5], 1
    %3566 = vsyncpa %s3565, 1

</llo_original>
